<compile_context>
chip_gen: v5e
topology: v5e:2x2
jax: 0.10.0
libtpu: 0.0.40
codegen_flags: <defaults>
</compile_context>

<pallas_src>
import functools

import jax
import jax.numpy as jnp
from jax.experimental import pallas as pl
from jax.experimental.pallas import tpu as pltpu


def _round_up(n, m):
    return ((n + m - 1) // m) * m


def _make_kernel(TB, Lp1, V2, compute_dtype):
    Lp2, Lp3 = Lp1 // 2, Lp1 // 4

    def kernel(h1_ref,
               w2_ref, s2_ref, b2_ref,
               w3_ref, s3_ref, b3_ref,
               wfc_ref, bfc_ref,
               o_ref, sc2_ref, sc3_ref):

        def maxpool2(y, scratch):
            # MaxPool1d(kernel=2, stride=2) along rows via scratch + stride-2 loads.
            m, _ = y.shape
            mh = m // 2
            scratch[...] = y
            return jnp.maximum(scratch[pl.ds(0, mh, 2), :],
                               scratch[pl.ds(1, mh, 2), :])

        def zero_invalid(h, lk, vk):
            # zero rows >= vk inside each per-sample block of lk rows
            if vk >= lk:
                return h
            c = h.shape[1]
            idx = jax.lax.broadcasted_iota(jnp.int32, (TB, lk, 1), 1)
            return jnp.where(idx < vk, h.reshape(TB, lk, c), 0.0).reshape(TB * lk, c)

        def conv_bn_relu(h, w_ref, s_ref, b_ref):
            # y[l] = w[0]·h[l-1] + w[1]·h[l] + w[2]·h[l+1]; BN folded into (s, b); ReLU.
            # Three accumulating dots (no lane-concat temp); f32 rolls, operands cast
            # to compute_dtype, f32 accumulation + epilogue.
            m = h.shape[0]

            def cd(a):
                return a.astype(compute_dtype)

            y = jnp.dot(cd(pltpu.roll(h, 1, axis=0)), w_ref[0],
                        preferred_element_type=jnp.float32)
            y = y + jnp.dot(cd(h), w_ref[1], preferred_element_type=jnp.float32)
            y = y + jnp.dot(cd(pltpu.roll(h, m - 1, axis=0)), w_ref[2],
                            preferred_element_type=jnp.float32)
            return jnp.maximum(y * s_ref[...] + b_ref[...], 0.0)

        # ---- layers 2 / 3 on the MXU (layer 1 was done in the wrapper) ----
        h1 = h1_ref[0].astype(jnp.float32)                                   # (TB*Lp1, 32)
        h2 = zero_invalid(
            maxpool2(conv_bn_relu(h1, w2_ref, s2_ref, b2_ref), sc2_ref), Lp2, V2)
        h3 = maxpool2(conv_bn_relu(h2, w3_ref, s3_ref, b3_ref), sc3_ref)     # (TB*Lp3, 128)

        # TODO(synk): nn.Dropout is the identity in eval mode; omitted.

        # ---- FC + sigmoid (wfc rows >= L//8 are zero, so padding rows drop out) ----
        h3r = h3.reshape(TB, Lp3, 128)
        s = jnp.sum(h3r * wfc_ref[...][None], axis=1)                        # (TB, 128)
        t = jnp.sum(s, axis=1, keepdims=True) + bfc_ref[...]                 # (TB, 1)
        o_ref[0] = 1.0 / (1.0 + jnp.exp(-t))

    return kernel


def cnn_forward(x, params, *, block_b=None, compute_dtype=None, vmem_limit_bytes=None):
    x = jnp.asarray(x, jnp.float32)
    if x.ndim == 3:                       # torch-style (B, 1, L)
        x = x.reshape(x.shape[0], x.shape[-1])
    B, L = x.shape

    if compute_dtype is None:
        # bf16 matmul operands on v6e / v7x (native bf16 2x256^2 MXU); f32 elsewhere.
        try:
            kind = jax.devices()[0].device_kind.lower()
        except Exception:
            kind = ""
        compute_dtype = (jnp.bfloat16
                         if ("v6" in kind or "v7" in kind or "7x" in kind)
                         else jnp.float32)

    V1, V2, V3 = L // 2, L // 4, L // 8
    Lp1 = _round_up(V1 + 1, 32)           # per-sample block length after pool-1
    Lp2, Lp3 = Lp1 // 2, Lp1 // 4
    # >= 1 zero halo row per sample at every stage => sublane rolls can't leak
    # activations across samples; FC zero rows cover the pool-3 padding.
    assert Lp1 % 4 == 0 and Lp1 >= V1 + 1
    assert Lp2 >= V2 + 1
    assert Lp3 >= V3

    if block_b is None:
        # G = ceil(B/TB) >= 2 for B >= 2 so both v7x TensorCores get work; TB <= 64
        # keeps per-step VMEM well inside v7x's 64 MiB.
        block_b = max(1, min(64, -(-B // 2)))
    TB = int(max(1, min(block_b, B)))
    G = -(-B // TB)
    B_pad = G * TB
    M1 = TB * Lp1

    # ---- layer 1 (conv1 + BN1 + ReLU + pool1) in XLA: C_in == 1, so it is a cheap
    #      broadcast / outer product.  Doing it here avoids the 1-lane (M, 1) kernel
    #      input that previously inflated VMEM and DMA. ----
    w1 = params['w1'].astype(jnp.float32)                       # (3, 32)
    s1 = params['s1'].astype(jnp.float32)                       # (1, 32)
    b1 = params['b1'].astype(jnp.float32)
    xp = jnp.pad(x, ((0, 0), (1, 1)))
    y1 = (xp[:, :-2, None] * w1[0]
          + xp[:, 1:-1, None] * w1[1]
          + xp[:, 2:, None] * w1[2])                            # (B, L, 32)
    y1 = jnp.maximum(y1 * s1[None] + b1[None], 0.0)
    h1 = jnp.maximum(y1[:, 0:2 * V1:2], y1[:, 1:2 * V1:2])      # (B, V1, 32)

    # zero-pad batch and sequence; flatten each batch block to (TB*Lp1, 32)
    h1p = jnp.zeros((B_pad, Lp1, 32), compute_dtype).at[:B, :V1].set(
        h1.astype(compute_dtype))
    h1r = h1p.reshape(G, M1, 32)

    # FC weight padded with zero rows for the (invalid) padding positions
    wfc_p = jnp.zeros((Lp3, 128), jnp.float32).at[:V3].set(
        params['wfc'].astype(jnp.float32))

    consts = (params['w2'].astype(compute_dtype),               # (3, 32, 64)
              params['s2'].astype(jnp.float32), params['b2'].astype(jnp.float32),
              params['w3'].astype(compute_dtype),               # (3, 64, 128)
              params['s3'].astype(jnp.float32), params['b3'].astype(jnp.float32),
              wfc_p, params['bfc'].astype(jnp.float32))

    def const_spec(a):
        nd = a.ndim
        return pl.BlockSpec(a.shape, lambda g, nd=nd: (0,) * nd)

    if vmem_limit_bytes is None:
        # Actual per-step usage estimate (lane-padded) + 50% headroom, never the
        # full physical VMEM (v7x has only 64 MiB per TensorCore).
        bpe = jnp.dtype(compute_dtype).itemsize
        est = (2 * M1 * 128 * bpe                                # double-buffered input
               + (M1 + M1 // 2) * 128 * 4                        # pool scratches
               + (M1 * (3 * 32 + 64)
                  + (M1 // 2) * (3 * 64 + 128)
                  + (M1 // 4) * 128) * 4)                        # live temporaries
        vmem_limit_bytes = int(min(100 << 20, max(32 << 20, int(est * 1.5))))

    kernel = _make_kernel(TB, Lp1, V2, compute_dtype)

    out = pl.pallas_call(
        kernel,
        out_shape=jax.ShapeDtypeStruct((G, TB, 1), jnp.float32),
        grid_spec=pltpu.PrefetchScalarGridSpec(
            num_scalar_prefetch=0,
            grid=(G,),
            in_specs=[pl.BlockSpec((1, M1, 32), lambda g: (g, 0, 0))]
                     + [const_spec(a) for a in consts],
            out_specs=pl.BlockSpec((1, TB, 1), lambda g: (g, 0, 0)),
            scratch_shapes=[pltpu.VMEM((M1, 64), jnp.float32),        # pool-2 scratch
                            pltpu.VMEM((M1 // 2, 128), jnp.float32)], # pool-3 scratch
        ),
        compiler_params=pltpu.CompilerParams(
            dimension_semantics=("parallel",),
            vmem_limit_bytes=vmem_limit_bytes,
        ),
    )(h1r, *consts)
    return out.reshape(B_pad, 1)[:B]


def init_params(key, L):
    V3 = L // 8
    ks = jax.random.split(key, 12)

    def bn(k, c):
        kg, kb, km, kv = jax.random.split(k, 4)
        gamma = 1.0 + 0.1 * jax.random.normal(kg, (c,), jnp.float32)
        beta = 0.1 * jax.random.normal(kb, (c,), jnp.float32)
        mean = 0.1 * jax.random.normal(km, (c,), jnp.float32)
        var = jax.random.uniform(kv, (c,), jnp.float32, minval=0.5, maxval=1.5)
        return gamma, beta, mean, var

    def fold(cb, gamma, beta, mean, var, eps=1e-5):
        scale = gamma * jax.lax.rsqrt(var + eps)
        bias = (cb - mean) * scale + beta
        return scale[None, :], bias[None, :]

    params = {}
    cins, couts = (1, 32, 64), (32, 64, 128)
    for i in range(3):
        w = jax.random.normal(ks[3 * i], (3, cins[i], couts[i]),
                              jnp.float32) / jnp.sqrt(3.0 * cins[i])
        cb = 0.05 * jax.random.normal(ks[3 * i + 1], (couts[i],), jnp.float32)
        g, be, m, v = bn(ks[3 * i + 2], couts[i])
        s, b = fold(cb, g, be, m, v)
        if i == 0:
            params['w1'] = w.reshape(3, couts[i])               # C_in == 1
        else:
            params[f'w{i + 1}'] = w                             # (3, C_in, C_out)
        params[f's{i + 1}'] = s
        params[f'b{i + 1}'] = b
    # FC weight laid out as (L//8, 128)  (== torch fc.weight.reshape(128, L//8).T)
    params['wfc'] = jax.random.normal(ks[9], (V3, 128), jnp.float32) / jnp.sqrt(V3 * 128.0)
    params['bfc'] = jnp.full((1, 1), 0.1, jnp.float32)
    return params


def reference_forward(x, p):
    # pure-JAX reference with exact PyTorch semantics (padding=1 convs, floor max-pool)
    hi = jax.lax.Precision.HIGHEST
    h = x.astype(jnp.float32)[:, :, None]
    layers = ((p['w1'].reshape(3, 1, 32), p['s1'], p['b1']),
              (p['w2'], p['s2'], p['b2']),
              (p['w3'], p['s3'], p['b3']))
    for w, s, b in layers:
        hp = jnp.pad(h, ((0, 0), (1, 1), (0, 0)))
        y = (jnp.einsum('blc,co->blo', hp[:, :-2], w[0], precision=hi)
             + jnp.einsum('blc,co->blo', hp[:, 1:-1], w[1], precision=hi)
             + jnp.einsum('blc,co->blo', hp[:, 2:], w[2], precision=hi))
        y = jnp.maximum(y * s[None] + b[None], 0.0)
        n = y.shape[1] // 2
        h = jnp.maximum(y[:, 0:2 * n:2], y[:, 1:2 * n:2])
    t = jnp.sum(h * p['wfc'][None], axis=(1, 2))[:, None] + p['bfc'][0, 0]
    return jax.nn.sigmoid(t)


if __name__ == "__main__":
    key = jax.random.PRNGKey(0)
    kx, kp = jax.random.split(key)
    B, num_features = 6, 315            # module default feature length (odd L exercised)
    x = jax.random.normal(kx, (B, num_features), jnp.float32)
    params = init_params(kp, num_features)

    ref = reference_forward(x, params)

    # f32 compute path (v5e default): tight check against the f32 reference.
    fwd_f32 = jax.jit(functools.partial(cnn_forward, block_b=4,
                                        compute_dtype=jnp.float32))
    out_f32 = jax.block_until_ready(fwd_f32(x, params))   # 2 grid steps, padded batch
    assert out_f32.shape == (B, 1), out_f32.shape
    if not jnp.allclose(out_f32, ref, atol=3e-5, rtol=3e-5):
        raise AssertionError(f"f32 mismatch:\npallas={out_f32}\nref={ref}")

    # bf16 matmul-operand path (v6e / v7x default): loose check, f32 accumulation.
    fwd_bf16 = jax.jit(functools.partial(cnn_forward, block_b=4,
                                         compute_dtype=jnp.bfloat16))
    out_bf16 = jax.block_until_ready(fwd_bf16(x, params))
    assert out_bf16.shape == (B, 1), out_bf16.shape
    assert bool(jnp.all(jnp.isfinite(out_bf16)))
    if not jnp.allclose(out_bf16, ref, atol=5e-2):
        raise AssertionError(f"bf16 mismatch:\npallas={out_bf16}\nref={ref}")

    print("KERNEL_OK")
</pallas_src>

<mosaic_0001>
module attributes {stable_mosaic.version = 11 : i64} {
  func.func @kernel(%arg0: i32, %arg1: memref<1x640x32xf32, #tpu.memory_space<vmem>>, %arg2: memref<3x32x64xf32, #tpu.memory_space<vmem>>, %arg3: memref<1x64xf32, #tpu.memory_space<vmem>>, %arg4: memref<1x64xf32, #tpu.memory_space<vmem>>, %arg5: memref<3x64x128xf32, #tpu.memory_space<vmem>>, %arg6: memref<1x128xf32, #tpu.memory_space<vmem>>, %arg7: memref<1x128xf32, #tpu.memory_space<vmem>>, %arg8: memref<40x128xf32, #tpu.memory_space<vmem>>, %arg9: memref<1x1xf32, #tpu.memory_space<vmem>>, %arg10: memref<1x4x1xf32, #tpu.memory_space<vmem>>, %arg11: memref<640x64xf32, #tpu.memory_space<vmem>>, %arg12: memref<320x128xf32, #tpu.memory_space<vmem>>) attributes {dimension_semantics = [#tpu.dimension_semantics<parallel>], iteration_bounds = array<i64: 2>, scalar_prefetch = 0 : i64, scratch_operands = 2 : i64, tpu.core_type = #tpu.core_type<tc>, window_params = [{transform_indices = @transform_0, window_bounds = array<i64: 1, 640, 32>}, {pipeline_mode = #tpu.pipeline_mode<synchronous>, transform_indices = @transform_1, window_bounds = array<i64: 3, 32, 64>}, {pipeline_mode = #tpu.pipeline_mode<synchronous>, transform_indices = @transform_2, window_bounds = array<i64: 1, 64>}, {pipeline_mode = #tpu.pipeline_mode<synchronous>, transform_indices = @transform_3, window_bounds = array<i64: 1, 64>}, {pipeline_mode = #tpu.pipeline_mode<synchronous>, transform_indices = @transform_4, window_bounds = array<i64: 3, 64, 128>}, {pipeline_mode = #tpu.pipeline_mode<synchronous>, transform_indices = @transform_5, window_bounds = array<i64: 1, 128>}, {pipeline_mode = #tpu.pipeline_mode<synchronous>, transform_indices = @transform_6, window_bounds = array<i64: 1, 128>}, {pipeline_mode = #tpu.pipeline_mode<synchronous>, transform_indices = @transform_7, window_bounds = array<i64: 40, 128>}, {pipeline_mode = #tpu.pipeline_mode<synchronous>, transform_indices = @transform_8, window_bounds = array<i64: 1, 1>}, {transform_indices = @transform_9, window_bounds = array<i64: 1, 4, 1>}]} {
    %c0 = arith.constant 0 : index
    %c0_0 = arith.constant 0 : index
    %c0_1 = arith.constant 0 : index
    %0 = vector.load %arg1[%c0, %c0_0, %c0_1] : memref<1x640x32xf32, #tpu.memory_space<vmem>>, vector<1x640x32xf32>
    %1 = vector.shape_cast %0 : vector<1x640x32xf32> to vector<640x32xf32>
    %c1_i32 = arith.constant 1 : i32
    %2 = tpu.dynamic_rotate %1 by %c1_i32 dim 0 : vector<640x32xf32>, i32 -> vector<640x32xf32>
    %c0_2 = arith.constant 0 : index
    %c0_3 = arith.constant 0 : index
    %c0_4 = arith.constant 0 : index
    %3 = vector.load %arg2[%c0_2, %c0_3, %c0_4] : memref<3x32x64xf32, #tpu.memory_space<vmem>>, vector<1x32x64xf32>
    %4 = vector.shape_cast %3 : vector<1x32x64xf32> to vector<32x64xf32>
    %cst = arith.constant dense<0.000000e+00> : vector<640x64xf32>
    %5 = tpu.matmul %2, %4, %cst {dimension_numbers = #tpu.dot_dimension_numbers<[1], [0], [0], [1], [0, 0, 1, 1], [], []>} : vector<640x32xf32>, vector<32x64xf32>, vector<640x64xf32> -> vector<640x64xf32>
    %c1 = arith.constant 1 : index
    %c0_5 = arith.constant 0 : index
    %c0_6 = arith.constant 0 : index
    %6 = vector.load %arg2[%c1, %c0_5, %c0_6] : memref<3x32x64xf32, #tpu.memory_space<vmem>>, vector<1x32x64xf32>
    %7 = vector.shape_cast %6 : vector<1x32x64xf32> to vector<32x64xf32>
    %cst_7 = arith.constant dense<0.000000e+00> : vector<640x64xf32>
    %8 = tpu.matmul %1, %7, %cst_7 {dimension_numbers = #tpu.dot_dimension_numbers<[1], [0], [0], [1], [0, 0, 1, 1], [], []>} : vector<640x32xf32>, vector<32x64xf32>, vector<640x64xf32> -> vector<640x64xf32>
    %9 = arith.addf %5, %8 : vector<640x64xf32>
    %c639_i32 = arith.constant 639 : i32
    %10 = tpu.dynamic_rotate %1 by %c639_i32 dim 0 : vector<640x32xf32>, i32 -> vector<640x32xf32>
    %c2 = arith.constant 2 : index
    %c0_8 = arith.constant 0 : index
    %c0_9 = arith.constant 0 : index
    %11 = vector.load %arg2[%c2, %c0_8, %c0_9] : memref<3x32x64xf32, #tpu.memory_space<vmem>>, vector<1x32x64xf32>
    %12 = vector.shape_cast %11 : vector<1x32x64xf32> to vector<32x64xf32>
    %cst_10 = arith.constant dense<0.000000e+00> : vector<640x64xf32>
    %13 = tpu.matmul %10, %12, %cst_10 {dimension_numbers = #tpu.dot_dimension_numbers<[1], [0], [0], [1], [0, 0, 1, 1], [], []>} : vector<640x32xf32>, vector<32x64xf32>, vector<640x64xf32> -> vector<640x64xf32>
    %14 = arith.addf %9, %13 : vector<640x64xf32>
    %c0_11 = arith.constant 0 : index
    %c0_12 = arith.constant 0 : index
    %15 = vector.load %arg3[%c0_11, %c0_12] : memref<1x64xf32, #tpu.memory_space<vmem>>, vector<1x64xf32>
    %16 = vector.broadcast %15 : vector<1x64xf32> to vector<640x64xf32>
    %17 = arith.mulf %14, %16 : vector<640x64xf32>
    %c0_13 = arith.constant 0 : index
    %c0_14 = arith.constant 0 : index
    %18 = vector.load %arg4[%c0_13, %c0_14] : memref<1x64xf32, #tpu.memory_space<vmem>>, vector<1x64xf32>
    %19 = vector.broadcast %18 : vector<1x64xf32> to vector<640x64xf32>
    %20 = arith.addf %17, %19 : vector<640x64xf32>
    %cst_15 = arith.constant 0.000000e+00 : f32
    %21 = vector.broadcast %cst_15 : f32 to vector<640x64xf32>
    %22 = arith.maximumf %20, %21 : vector<640x64xf32>
    %c0_16 = arith.constant 0 : index
    %c0_17 = arith.constant 0 : index
    %23 = vector.load %arg11[%c0_16, %c0_17] : memref<640x64xf32, #tpu.memory_space<vmem>>, vector<640x64xf32>
    tpu.vector_store %arg11[%c0_16, %c0_17], %22 {strides = array<i32>} : memref<640x64xf32, #tpu.memory_space<vmem>>, vector<640x64xf32>,
    %c0_18 = arith.constant 0 : index
    %c0_19 = arith.constant 0 : index
    %24 = tpu.strided_load %arg11[%c0_18, %c0_19] {strides = array<i32: 2, 1>} : memref<640x64xf32, #tpu.memory_space<vmem>>, vector<320x64xf32>
    %c1_20 = arith.constant 1 : index
    %c0_21 = arith.constant 0 : index
    %25 = tpu.strided_load %arg11[%c1_20, %c0_21] {strides = array<i32: 2, 1>} : memref<640x64xf32, #tpu.memory_space<vmem>>, vector<320x64xf32>
    %26 = arith.maximumf %24, %25 : vector<320x64xf32>
    %27 = tpu.iota {dimensions = array<i32: 1>} : vector<4x80x1xi32>
    %c78_i32 = arith.constant 78 : i32
    %28 = vector.broadcast %c78_i32 : i32 to vector<4x80x1xi32>
    %29 = arith.cmpi slt, %27, %28 : vector<4x80x1xi32>
    %30 = vector.shape_cast %26 : vector<320x64xf32> to vector<4x80x64xf32>
    %cst_22 = arith.constant 0.000000e+00 : f32
    %31 = vector.shape_cast %29 : vector<4x80x1xi1> to vector<4x80x1xi1>
    %32 = vector.broadcast %31 : vector<4x80x1xi1> to vector<4x80x64xi1>
    %33 = vector.broadcast %cst_22 : f32 to vector<4x80x64xf32>
    %34 = arith.select %32, %30, %33 : vector<4x80x64xi1>, vector<4x80x64xf32>
    %35 = vector.shape_cast %34 : vector<4x80x64xf32> to vector<320x64xf32>
    %c1_i32_23 = arith.constant 1 : i32
    %36 = tpu.dynamic_rotate %35 by %c1_i32_23 dim 0 : vector<320x64xf32>, i32 -> vector<320x64xf32>
    %c0_24 = arith.constant 0 : index
    %c0_25 = arith.constant 0 : index
    %c0_26 = arith.constant 0 : index
    %37 = vector.load %arg5[%c0_24, %c0_25, %c0_26] : memref<3x64x128xf32, #tpu.memory_space<vmem>>, vector<1x64x128xf32>
    %38 = vector.shape_cast %37 : vector<1x64x128xf32> to vector<64x128xf32>
    %cst_27 = arith.constant dense<0.000000e+00> : vector<320x128xf32>
    %39 = tpu.matmul %36, %38, %cst_27 {dimension_numbers = #tpu.dot_dimension_numbers<[1], [0], [0], [1], [0, 0, 1, 1], [], []>} : vector<320x64xf32>, vector<64x128xf32>, vector<320x128xf32> -> vector<320x128xf32>
    %c1_28 = arith.constant 1 : index
    %c0_29 = arith.constant 0 : index
    %c0_30 = arith.constant 0 : index
    %40 = vector.load %arg5[%c1_28, %c0_29, %c0_30] : memref<3x64x128xf32, #tpu.memory_space<vmem>>, vector<1x64x128xf32>
    %41 = vector.shape_cast %40 : vector<1x64x128xf32> to vector<64x128xf32>
    %cst_31 = arith.constant dense<0.000000e+00> : vector<320x128xf32>
    %42 = tpu.matmul %35, %41, %cst_31 {dimension_numbers = #tpu.dot_dimension_numbers<[1], [0], [0], [1], [0, 0, 1, 1], [], []>} : vector<320x64xf32>, vector<64x128xf32>, vector<320x128xf32> -> vector<320x128xf32>
    %43 = arith.addf %39, %42 : vector<320x128xf32>
    %c319_i32 = arith.constant 319 : i32
    %44 = tpu.dynamic_rotate %35 by %c319_i32 dim 0 : vector<320x64xf32>, i32 -> vector<320x64xf32>
    %c2_32 = arith.constant 2 : index
    %c0_33 = arith.constant 0 : index
    %c0_34 = arith.constant 0 : index
    %45 = vector.load %arg5[%c2_32, %c0_33, %c0_34] : memref<3x64x128xf32, #tpu.memory_space<vmem>>, vector<1x64x128xf32>
    %46 = vector.shape_cast %45 : vector<1x64x128xf32> to vector<64x128xf32>
    %cst_35 = arith.constant dense<0.000000e+00> : vector<320x128xf32>
    %47 = tpu.matmul %44, %46, %cst_35 {dimension_numbers = #tpu.dot_dimension_numbers<[1], [0], [0], [1], [0, 0, 1, 1], [], []>} : vector<320x64xf32>, vector<64x128xf32>, vector<320x128xf32> -> vector<320x128xf32>
    %48 = arith.addf %43, %47 : vector<320x128xf32>
    %c0_36 = arith.constant 0 : index
    %c0_37 = arith.constant 0 : index
    %49 = vector.load %arg6[%c0_36, %c0_37] : memref<1x128xf32, #tpu.memory_space<vmem>>, vector<1x128xf32>
    %50 = vector.broadcast %49 : vector<1x128xf32> to vector<320x128xf32>
    %51 = arith.mulf %48, %50 : vector<320x128xf32>
    %c0_38 = arith.constant 0 : index
    %c0_39 = arith.constant 0 : index
    %52 = vector.load %arg7[%c0_38, %c0_39] : memref<1x128xf32, #tpu.memory_space<vmem>>, vector<1x128xf32>
    %53 = vector.broadcast %52 : vector<1x128xf32> to vector<320x128xf32>
    %54 = arith.addf %51, %53 : vector<320x128xf32>
    %cst_40 = arith.constant 0.000000e+00 : f32
    %55 = vector.broadcast %cst_40 : f32 to vector<320x128xf32>
    %56 = arith.maximumf %54, %55 : vector<320x128xf32>
    %c0_41 = arith.constant 0 : index
    %c0_42 = arith.constant 0 : index
    %57 = vector.load %arg12[%c0_41, %c0_42] : memref<320x128xf32, #tpu.memory_space<vmem>>, vector<320x128xf32>
    tpu.vector_store %arg12[%c0_41, %c0_42], %56 {strides = array<i32>} : memref<320x128xf32, #tpu.memory_space<vmem>>, vector<320x128xf32>,
    %c0_43 = arith.constant 0 : index
    %c0_44 = arith.constant 0 : index
    %58 = tpu.strided_load %arg12[%c0_43, %c0_44] {strides = array<i32: 2, 1>} : memref<320x128xf32, #tpu.memory_space<vmem>>, vector<160x128xf32>
    %c1_45 = arith.constant 1 : index
    %c0_46 = arith.constant 0 : index
    %59 = tpu.strided_load %arg12[%c1_45, %c0_46] {strides = array<i32: 2, 1>} : memref<320x128xf32, #tpu.memory_space<vmem>>, vector<160x128xf32>
    %60 = arith.maximumf %58, %59 : vector<160x128xf32>
    %61 = vector.shape_cast %60 : vector<160x128xf32> to vector<4x40x128xf32>
    %c0_47 = arith.constant 0 : index
    %c0_48 = arith.constant 0 : index
    %62 = vector.load %arg8[%c0_47, %c0_48] : memref<40x128xf32, #tpu.memory_space<vmem>>, vector<40x128xf32>
    %63 = vector.shape_cast %62 : vector<40x128xf32> to vector<1x40x128xf32>
    %64 = vector.broadcast %63 : vector<1x40x128xf32> to vector<4x40x128xf32>
    %65 = arith.mulf %61, %64 : vector<4x40x128xf32>
    %cst_49 = arith.constant dense<0.000000e+00> : vector<4x128xf32>
    %66 = vector.multi_reduction <add>, %65, %cst_49 [1] : vector<4x40x128xf32> to vector<4x128xf32>
    %cst_50 = arith.constant dense<0.000000e+00> : vector<4xf32>
    %67 = vector.multi_reduction <add>, %66, %cst_50 [1] : vector<4x128xf32> to vector<4xf32>
    %68 = vector.shape_cast %67 : vector<4xf32> to vector<4x1xf32>
    %c0_51 = arith.constant 0 : index
    %c0_52 = arith.constant 0 : index
    %69 = vector.load %arg9[%c0_51, %c0_52] : memref<1x1xf32, #tpu.memory_space<vmem>>, vector<1x1xf32>
    %70 = vector.broadcast %69 : vector<1x1xf32> to vector<4x1xf32>
    %71 = arith.addf %68, %70 : vector<4x1xf32>
    %cst_53 = arith.constant 0.000000e+00 : f32
    %72 = vector.broadcast %cst_53 : f32 to vector<4x1xf32>
    %73 = arith.subf %72, %71 : vector<4x1xf32>
    %74 = math.exp %73 : vector<4x1xf32>
    %cst_54 = arith.constant 1.000000e+00 : f32
    %75 = vector.broadcast %cst_54 : f32 to vector<4x1xf32>
    %76 = arith.addf %75, %74 : vector<4x1xf32>
    %cst_55 = arith.constant 1.000000e+00 : f32
    %77 = vector.broadcast %cst_55 : f32 to vector<4x1xf32>
    %78 = arith.divf %77, %76 : vector<4x1xf32>
    %c0_56 = arith.constant 0 : index
    %c0_57 = arith.constant 0 : index
    %c0_58 = arith.constant 0 : index
    %79 = vector.load %arg10[%c0_56, %c0_57, %c0_58] : memref<1x4x1xf32, #tpu.memory_space<vmem>>, vector<1x4x1xf32>
    %80 = vector.shape_cast %79 : vector<1x4x1xf32> to vector<4x1xf32>
    %81 = vector.shape_cast %78 : vector<4x1xf32> to vector<1x4x1xf32>
    tpu.vector_store %arg10[%c0_56, %c0_57, %c0_58], %81 {strides = array<i32>} : memref<1x4x1xf32, #tpu.memory_space<vmem>>, vector<1x4x1xf32>,
    return
  }
  func.func @transform_0(%arg0: i32) -> (i32, i32, i32) {
    %c0_i32 = arith.constant 0 : i32
    %c0_i32_0 = arith.constant 0 : i32
    %c0_i32_1 = arith.constant 0 : i32
    return %arg0, %c0_i32, %c0_i32_0 : i32, i32, i32
  }
  func.func @transform_1(%arg0: i32) -> (i32, i32, i32) {
    %c0_i32 = arith.constant 0 : i32
    %c0_i32_0 = arith.constant 0 : i32
    %c0_i32_1 = arith.constant 0 : i32
    %c0_i32_2 = arith.constant 0 : i32
    return %c0_i32, %c0_i32_0, %c0_i32_1 : i32, i32, i32
  }
  func.func @transform_2(%arg0: i32) -> (i32, i32) {
    %c0_i32 = arith.constant 0 : i32
    %c0_i32_0 = arith.constant 0 : i32
    %c0_i32_1 = arith.constant 0 : i32
    return %c0_i32, %c0_i32_0 : i32, i32
  }
  func.func @transform_3(%arg0: i32) -> (i32, i32) {
    %c0_i32 = arith.constant 0 : i32
    %c0_i32_0 = arith.constant 0 : i32
    %c0_i32_1 = arith.constant 0 : i32
    return %c0_i32, %c0_i32_0 : i32, i32
  }
  func.func @transform_4(%arg0: i32) -> (i32, i32, i32) {
    %c0_i32 = arith.constant 0 : i32
    %c0_i32_0 = arith.constant 0 : i32
    %c0_i32_1 = arith.constant 0 : i32
    %c0_i32_2 = arith.constant 0 : i32
    return %c0_i32, %c0_i32_0, %c0_i32_1 : i32, i32, i32
  }
  func.func @transform_5(%arg0: i32) -> (i32, i32) {
    %c0_i32 = arith.constant 0 : i32
    %c0_i32_0 = arith.constant 0 : i32
    %c0_i32_1 = arith.constant 0 : i32
    return %c0_i32, %c0_i32_0 : i32, i32
  }
  func.func @transform_6(%arg0: i32) -> (i32, i32) {
    %c0_i32 = arith.constant 0 : i32
    %c0_i32_0 = arith.constant 0 : i32
    %c0_i32_1 = arith.constant 0 : i32
    return %c0_i32, %c0_i32_0 : i32, i32
  }
  func.func @transform_7(%arg0: i32) -> (i32, i32) {
    %c0_i32 = arith.constant 0 : i32
    %c0_i32_0 = arith.constant 0 : i32
    %c0_i32_1 = arith.constant 0 : i32
    return %c0_i32, %c0_i32_0 : i32, i32
  }
  func.func @transform_8(%arg0: i32) -> (i32, i32) {
    %c0_i32 = arith.constant 0 : i32
    %c0_i32_0 = arith.constant 0 : i32
    %c0_i32_1 = arith.constant 0 : i32
    return %c0_i32, %c0_i32_0 : i32, i32
  }
  func.func @transform_9(%arg0: i32) -> (i32, i32, i32) {
    %c0_i32 = arith.constant 0 : i32
    %c0_i32_0 = arith.constant 0 : i32
    %c0_i32_1 = arith.constant 0 : i32
    return %arg0, %c0_i32, %c0_i32_0 : i32, i32, i32
  }
}

</mosaic_0001>

<llo_original>
// kernel: cnn_forward.1
$region0: #{cnn_forward.1}
  #allocation0 [shape = 'u32[]', space=smem, size = 0x4, offset = 0x4, fixed_abs, tag = 'smem constant byte address 0x4 - core index']
  #allocation1 [shape = 'u32[72,128]{1,0:T(1,128)}', space=vmem, size = 0x9000, scoped, tag = 'internal scratch']
  #allocation2 [shape = 'f32[640,64]{1,0:T(8,128)}', space=vmem, size = 0x50000, scoped, tag = 'scratch operand']
  #allocation3 [shape = 'f32[320,128]{1,0:T(8,128)}', space=vmem, size = 0x28000, scoped, tag = 'scratch operand']
  #allocation4 [shape = 'f32[1,1]{1,0:T(1,128)S(1)}', space=vmem, size = 0x200, scoped, tag = 'scoped memory for cnn_forward.1']
  %s0 = inlined_call_operand.vmem [shape: f32[2,640,32], index: 0, kind: input, shape index: {}]
  %s1 = inlined_call_operand.vmem [shape: f32[3,32,64], index: 1, kind: input, shape index: {}]
  %s2 = inlined_call_operand.vmem [shape: f32[1,64], index: 2, kind: input, shape index: {}]
  %s3 = inlined_call_operand.vmem [shape: f32[1,64], index: 3, kind: input, shape index: {}]
  %s4 = inlined_call_operand.vmem [shape: f32[3,64,128], index: 4, kind: input, shape index: {}]
  %s5 = inlined_call_operand.vmem [shape: f32[1,128], index: 5, kind: input, shape index: {}]
  %s6 = inlined_call_operand.vmem [shape: f32[1,128], index: 6, kind: input, shape index: {}]
  %s7 = inlined_call_operand.vmem [shape: f32[40,128], index: 7, kind: input, shape index: {}]
  %s8 = inlined_call_operand.<no memory space> [shape: f32[1,1], index: 8, kind: input, shape index: {}]
  %s9 = inlined_call_operand.vmem [shape: f32[2,4,1], index: 9, kind: output, shape index: {}]
  %s10 = sld [smem:[#allocation0]]
  $region69: #{cnn_forward.1} parent=0
    _
  %s12 = ssub.s32 1, %s10
  %s13 = scalar_select 0, %s12, %s10
  %v14 = vstv %s8
  %15 = vst [vmem:[#allocation4] sm:$0x1] %v14
  loop: start=0, step=1, limit=4
  $region2: #{cnn_forward.1} parent=0 // loop_pre_header
    _
  $region3: #{cnn_forward.1} parent=0 // loop_header
    %s17 = sphi 0, %s21
    %p18 = scmp.ge.s32.totalorder %s17, 4
    %s27 = sphi 0, %s29
    %s30 = sphi 0, %s27
    %s31 = sphi 0, %s30
    %s47 = sphi 0, %s31
    %s51 = sphi 0, %s51
    %s53 = sphi 0, %s51
    %s54 = sphi 0, %s53
    %s68 = sphi 0, %s54
    %s72 = sphi 0, %s72
    %s74 = sphi 0, %s72
    %s75 = sphi 0, %s74
    %s89 = sphi 0, %s75
    %s93 = sphi 0, %s93
    %s95 = sphi 0, %s93
    %s96 = sphi 0, %s95
    %s110 = sphi 0, %s96
    %s114 = sphi 0, %s114
    %s116 = sphi 0, %s114
    %s117 = sphi 0, %s116
    %s131 = sphi 0, %s117
    %s135 = sphi 0, %s135
    %s137 = sphi 0, %s135
    %s138 = sphi 0, %s137
    %s152 = sphi 0, %s138
    %s156 = sphi 0, %s156
    %s158 = sphi 0, %s156
    %s159 = sphi 0, %s158
    %s173 = sphi 0, %s159
    %s177 = sphi 0, %s177
    %s179 = sphi 0, %s177
    %s180 = sphi 0, %s179
    %s194 = sphi 0, %s180
    %s198 = sphi 0, %s198
    %s200 = sphi 0, %s198
    %s201 = sphi 0, %s200
    %s215 = sphi 0, %s201
    %s221 = sphi 0, %s223
    %s224 = sphi 0, %s221
    %s225 = sphi 0, %s224
    %s241 = sphi 0, %s225
  $region4: #{cnn_forward.1} parent=0 // loop_header_branch
    %20 = sbr.rel (%p18) target = $region8
  $region5: #{cnn_forward.1} parent=0 // loop_body
    %s22 = ssub.s32 %s17, 1
    %s23 = ssub.s32 %s17, 2
    %s24 = sadd.s32 %s17, 1
    %s25 = ssub.s32 %s17, %s24
    %p26 = scmp.eq.s32.totalorder %s25, 0
    %s28 = sadd.s32 %s27, 1
    %s29 = scalar_select %p26, %s27, %s28
    %p32 = pneg %p26
    %p33 = scmp.eq.s32.totalorder %s17, 1
    %p34 = por %p32, %p33
    %p35 = scmp.ne.s32.totalorder %s27, %s30
    %p36 = scmp.eq.s32.totalorder %s17, 0
    %p37 = por %p35, %p36
    %p38 = scmp.ne.s32.totalorder %s27, %s30
    %p39 = scmp.eq.s32.totalorder %s22, 1
    %p40 = por %p38, %p39
    %p41 = scmp.ne.s32.totalorder %s30, %s31
    %p42 = scmp.eq.s32.totalorder %s22, 0
    %p43 = por %p41, %p42
    %p44 = scmp.ne.s32.totalorder %s30, %s31
    %p45 = scmp.eq.s32.totalorder %s23, 1
    %p46 = por %p44, %p45
    %p48 = scmp.ne.s32.totalorder %s31, %s47
    %p49 = scmp.eq.s32.totalorder %s23, 0
    %p50 = por %p48, %p49
    %s52 = sadd.s32 %s51, 1
    %p55 = scmp.eq.s32.totalorder %s17, 1
    %p56 = scmp.ne.s32.totalorder %s51, %s53
    %p57 = scmp.eq.s32.totalorder %s17, 0
    %p58 = por %p56, %p57
    %p59 = scmp.ne.s32.totalorder %s51, %s53
    %p60 = scmp.eq.s32.totalorder %s22, 1
    %p61 = por %p59, %p60
    %p62 = scmp.ne.s32.totalorder %s53, %s54
    %p63 = scmp.eq.s32.totalorder %s22, 0
    %p64 = por %p62, %p63
    %p65 = scmp.ne.s32.totalorder %s53, %s54
    %p66 = scmp.eq.s32.totalorder %s23, 1
    %p67 = por %p65, %p66
    %p69 = scmp.ne.s32.totalorder %s54, %s68
    %p70 = scmp.eq.s32.totalorder %s23, 0
    %p71 = por %p69, %p70
    %s73 = sadd.s32 %s72, 1
    %p76 = scmp.eq.s32.totalorder %s17, 1
    %p77 = scmp.ne.s32.totalorder %s72, %s74
    %p78 = scmp.eq.s32.totalorder %s17, 0
    %p79 = por %p77, %p78
    %p80 = scmp.ne.s32.totalorder %s72, %s74
    %p81 = scmp.eq.s32.totalorder %s22, 1
    %p82 = por %p80, %p81
    %p83 = scmp.ne.s32.totalorder %s74, %s75
    %p84 = scmp.eq.s32.totalorder %s22, 0
    %p85 = por %p83, %p84
    %p86 = scmp.ne.s32.totalorder %s74, %s75
    %p87 = scmp.eq.s32.totalorder %s23, 1
    %p88 = por %p86, %p87
    %p90 = scmp.ne.s32.totalorder %s75, %s89
    %p91 = scmp.eq.s32.totalorder %s23, 0
    %p92 = por %p90, %p91
    %s94 = sadd.s32 %s93, 1
    %p97 = scmp.eq.s32.totalorder %s17, 1
    %p98 = scmp.ne.s32.totalorder %s93, %s95
    %p99 = scmp.eq.s32.totalorder %s17, 0
    %p100 = por %p98, %p99
    %p101 = scmp.ne.s32.totalorder %s93, %s95
    %p102 = scmp.eq.s32.totalorder %s22, 1
    %p103 = por %p101, %p102
    %p104 = scmp.ne.s32.totalorder %s95, %s96
    %p105 = scmp.eq.s32.totalorder %s22, 0
    %p106 = por %p104, %p105
    %p107 = scmp.ne.s32.totalorder %s95, %s96
    %p108 = scmp.eq.s32.totalorder %s23, 1
    %p109 = por %p107, %p108
    %p111 = scmp.ne.s32.totalorder %s96, %s110
    %p112 = scmp.eq.s32.totalorder %s23, 0
    %p113 = por %p111, %p112
    %s115 = sadd.s32 %s114, 1
    %p118 = scmp.eq.s32.totalorder %s17, 1
    %p119 = scmp.ne.s32.totalorder %s114, %s116
    %p120 = scmp.eq.s32.totalorder %s17, 0
    %p121 = por %p119, %p120
    %p122 = scmp.ne.s32.totalorder %s114, %s116
    %p123 = scmp.eq.s32.totalorder %s22, 1
    %p124 = por %p122, %p123
    %p125 = scmp.ne.s32.totalorder %s116, %s117
    %p126 = scmp.eq.s32.totalorder %s22, 0
    %p127 = por %p125, %p126
    %p128 = scmp.ne.s32.totalorder %s116, %s117
    %p129 = scmp.eq.s32.totalorder %s23, 1
    %p130 = por %p128, %p129
    %p132 = scmp.ne.s32.totalorder %s117, %s131
    %p133 = scmp.eq.s32.totalorder %s23, 0
    %p134 = por %p132, %p133
    %s136 = sadd.s32 %s135, 1
    %p139 = scmp.eq.s32.totalorder %s17, 1
    %p140 = scmp.ne.s32.totalorder %s135, %s137
    %p141 = scmp.eq.s32.totalorder %s17, 0
    %p142 = por %p140, %p141
    %p143 = scmp.ne.s32.totalorder %s135, %s137
    %p144 = scmp.eq.s32.totalorder %s22, 1
    %p145 = por %p143, %p144
    %p146 = scmp.ne.s32.totalorder %s137, %s138
    %p147 = scmp.eq.s32.totalorder %s22, 0
    %p148 = por %p146, %p147
    %p149 = scmp.ne.s32.totalorder %s137, %s138
    %p150 = scmp.eq.s32.totalorder %s23, 1
    %p151 = por %p149, %p150
    %p153 = scmp.ne.s32.totalorder %s138, %s152
    %p154 = scmp.eq.s32.totalorder %s23, 0
    %p155 = por %p153, %p154
    %s157 = sadd.s32 %s156, 1
    %p160 = scmp.eq.s32.totalorder %s17, 1
    %p161 = scmp.ne.s32.totalorder %s156, %s158
    %p162 = scmp.eq.s32.totalorder %s17, 0
    %p163 = por %p161, %p162
    %p164 = scmp.ne.s32.totalorder %s156, %s158
    %p165 = scmp.eq.s32.totalorder %s22, 1
    %p166 = por %p164, %p165
    %p167 = scmp.ne.s32.totalorder %s158, %s159
    %p168 = scmp.eq.s32.totalorder %s22, 0
    %p169 = por %p167, %p168
    %p170 = scmp.ne.s32.totalorder %s158, %s159
    %p171 = scmp.eq.s32.totalorder %s23, 1
    %p172 = por %p170, %p171
    %p174 = scmp.ne.s32.totalorder %s159, %s173
    %p175 = scmp.eq.s32.totalorder %s23, 0
    %p176 = por %p174, %p175
    %s178 = sadd.s32 %s177, 1
    %p181 = scmp.eq.s32.totalorder %s17, 1
    %p182 = scmp.ne.s32.totalorder %s177, %s179
    %p183 = scmp.eq.s32.totalorder %s17, 0
    %p184 = por %p182, %p183
    %p185 = scmp.ne.s32.totalorder %s177, %s179
    %p186 = scmp.eq.s32.totalorder %s22, 1
    %p187 = por %p185, %p186
    %p188 = scmp.ne.s32.totalorder %s179, %s180
    %p189 = scmp.eq.s32.totalorder %s22, 0
    %p190 = por %p188, %p189
    %p191 = scmp.ne.s32.totalorder %s179, %s180
    %p192 = scmp.eq.s32.totalorder %s23, 1
    %p193 = por %p191, %p192
    %p195 = scmp.ne.s32.totalorder %s180, %s194
    %p196 = scmp.eq.s32.totalorder %s23, 0
    %p197 = por %p195, %p196
    %s199 = sadd.s32 %s198, 1
    %p202 = scmp.eq.s32.totalorder %s17, 1
    %p203 = scmp.ne.s32.totalorder %s198, %s200
    %p204 = scmp.eq.s32.totalorder %s17, 0
    %p205 = por %p203, %p204
    %p206 = scmp.ne.s32.totalorder %s198, %s200
    %p207 = scmp.eq.s32.totalorder %s22, 1
    %p208 = por %p206, %p207
    %p209 = scmp.ne.s32.totalorder %s200, %s201
    %p210 = scmp.eq.s32.totalorder %s22, 0
    %p211 = por %p209, %p210
    %p212 = scmp.ne.s32.totalorder %s200, %s201
    %p213 = scmp.eq.s32.totalorder %s23, 1
    %p214 = por %p212, %p213
    %p216 = scmp.ne.s32.totalorder %s201, %s215
    %p217 = scmp.eq.s32.totalorder %s23, 0
    %p218 = por %p216, %p217
    %s219 = ssub.s32 %s17, %s24
    %p220 = scmp.eq.s32.totalorder %s219, 0
    %s222 = sadd.s32 %s221, 1
    %s223 = scalar_select %p220, %s221, %s222
    %p226 = pneg %p220
    %p227 = scmp.eq.s32.totalorder %s17, 1
    %p228 = por %p226, %p227
    %p229 = scmp.ne.s32.totalorder %s221, %s224
    %p230 = scmp.eq.s32.totalorder %s17, 0
    %p231 = por %p229, %p230
    %p232 = scmp.ne.s32.totalorder %s221, %s224
    %p233 = scmp.eq.s32.totalorder %s22, 1
    %p234 = por %p232, %p233
    %p235 = scmp.ne.s32.totalorder %s224, %s225
    %p236 = scmp.eq.s32.totalorder %s22, 0
    %p237 = por %p235, %p236
    %p238 = scmp.ne.s32.totalorder %s224, %s225
    %p239 = scmp.eq.s32.totalorder %s23, 1
    %p240 = por %p238, %p239
    %p242 = scmp.ne.s32.totalorder %s225, %s241
    %p243 = scmp.eq.s32.totalorder %s23, 0
    %p244 = por %p242, %p243
    %p245 = scmp.le.s32.totalorder 1, %s17
    %p246 = scmp.lt.s32.totalorder %s17, 3
    %p247 = pnand %p245, %p246
    %p248 = pneg %p247
    // Predicated region
    $region9: #{cnn_forward.1} parent=5 // pred_check
      _
    $region10: #{cnn_forward.1} parent=5 // pred_check_branch
      %250 = sbr.rel (%p247) target = $region12
    $region11: #{cnn_forward.1} parent=5 // pred_region
      %s251 = ssub.s32 %s17, 1
      // Predicated region
      $region13: #{cnn_forward.1} parent=11 // pred_check
        %p252 = pneg %p64
      $region14: #{cnn_forward.1} parent=11 // pred_check_branch
        %254 = sbr.rel (%p252) target = $region16
      $region15: #{cnn_forward.1} parent=11 // pred_region
        _
      $region16: #{cnn_forward.1} parent=11 // pred_fallthru
        _
      // Predicated region
      $region17: #{cnn_forward.1} parent=11 // pred_check
        %p255 = pneg %p85
      $region18: #{cnn_forward.1} parent=11 // pred_check_branch
        %257 = sbr.rel (%p255) target = $region20
      $region19: #{cnn_forward.1} parent=11 // pred_region
        _
      $region20: #{cnn_forward.1} parent=11 // pred_fallthru
        _
      // Predicated region
      $region21: #{cnn_forward.1} parent=11 // pred_check
        %p258 = pneg %p106
      $region22: #{cnn_forward.1} parent=11 // pred_check_branch
        %260 = sbr.rel (%p258) target = $region24
      $region23: #{cnn_forward.1} parent=11 // pred_region
        _
      $region24: #{cnn_forward.1} parent=11 // pred_fallthru
        _
      // Predicated region
      $region25: #{cnn_forward.1} parent=11 // pred_check
        %p261 = pneg %p127
      $region26: #{cnn_forward.1} parent=11 // pred_check_branch
        %263 = sbr.rel (%p261) target = $region28
      $region27: #{cnn_forward.1} parent=11 // pred_region
        _
      $region28: #{cnn_forward.1} parent=11 // pred_fallthru
        _
      // Predicated region
      $region29: #{cnn_forward.1} parent=11 // pred_check
        %p264 = pneg %p148
      $region30: #{cnn_forward.1} parent=11 // pred_check_branch
        %266 = sbr.rel (%p264) target = $region32
      $region31: #{cnn_forward.1} parent=11 // pred_region
        _
      $region32: #{cnn_forward.1} parent=11 // pred_fallthru
        _
      // Predicated region
      $region33: #{cnn_forward.1} parent=11 // pred_check
        %p267 = pneg %p169
      $region34: #{cnn_forward.1} parent=11 // pred_check_branch
        %269 = sbr.rel (%p267) target = $region36
      $region35: #{cnn_forward.1} parent=11 // pred_region
        _
      $region36: #{cnn_forward.1} parent=11 // pred_fallthru
        _
      // Predicated region
      $region37: #{cnn_forward.1} parent=11 // pred_check
        %p270 = pneg %p190
      $region38: #{cnn_forward.1} parent=11 // pred_check_branch
        %272 = sbr.rel (%p270) target = $region40
      $region39: #{cnn_forward.1} parent=11 // pred_region
        _
      $region40: #{cnn_forward.1} parent=11 // pred_fallthru
        _
      // Predicated region
      $region41: #{cnn_forward.1} parent=11 // pred_check
        %p273 = pneg %p211
      $region42: #{cnn_forward.1} parent=11 // pred_check_branch
        %275 = sbr.rel (%p273) target = $region44
      $region43: #{cnn_forward.1} parent=11 // pred_region
        _
      $region44: #{cnn_forward.1} parent=11 // pred_fallthru
        _
    $region12: #{cnn_forward.1} parent=5 // pred_fallthru
      _
    %p276 = scmp.lt.s32.totalorder %s17, 2
    // Predicated region
    $region45: #{cnn_forward.1} parent=5 // pred_check
      %p277 = pneg %p276
    $region46: #{cnn_forward.1} parent=5 // pred_check_branch
      %279 = sbr.rel (%p277) target = $region48
    $region47: #{cnn_forward.1} parent=5 // pred_region
      // Predicated region
      $region49: #{cnn_forward.1} parent=47 // pred_check
        %p280 = pneg %p37
      $region50: #{cnn_forward.1} parent=47 // pred_check_branch
        %282 = sbr.rel (%p280) target = $region52
      $region51: #{cnn_forward.1} parent=47 // pred_region
        %p283 = scmp.lt.s32.totalorder %s17, 1
        %s284 = scalar_select %p283, %s17, 1
        %s285 = smul.addr %s284, 80
        %s286 = smul.addr %s285, 8
        %s287 = scalar_lea.vmem %s0, %s286
      $region52: #{cnn_forward.1} parent=47 // pred_fallthru
        _
    $region48: #{cnn_forward.1} parent=5 // pred_fallthru
      _
    %p288 = scmp.le.s32.totalorder 1, %s17
    %p289 = scmp.lt.s32.totalorder %s17, 3
    %p290 = pnand %p288, %p289
    %p291 = pneg %p290
    // Predicated region
    $region53: #{cnn_forward.1} parent=5 // pred_check
      _
    $region54: #{cnn_forward.1} parent=5 // pred_check_branch
      %293 = sbr.rel (%p290) target = $region56
    $region55: #{cnn_forward.1} parent=5 // pred_region
      %s294 = ssub.s32 %s17, 1
      %p295 = scmp.lt.s32.totalorder %s22, 1
      %s296 = scalar_select %p295, %s22, 1
      %s297 = smul.addr %s296, 80
      %s298 = smul.addr %s297, 8
      %s299 = scalar_lea.vmem %s0, %s298
      %p300 = pneg %p43
      %p301 = pneg %p40
      %p302 = pneg %p64
      %p303 = pneg %p61
      %p304 = pneg %p85
      %p305 = pneg %p82
      %p306 = pneg %p106
      %p307 = pneg %p103
      %p308 = pneg %p127
      %p309 = pneg %p124
      %p310 = pneg %p148
      %p311 = pneg %p145
      %p312 = pneg %p169
      %p313 = pneg %p166
      %p314 = pneg %p190
      %p315 = pneg %p187
      %p316 = pneg %p211
      %p317 = pneg %p208
      %p318 = pneg %p237
      %p319 = pneg %p234
      %p320 = scmp.lt.s32.totalorder %s22, 1
      %s321 = scalar_select %p320, %s22, 1
      %s322 = smul.addr %s321, 4
      %s323 = scalar_lea.vmem %s9, %s322
      %p324 = scmp.lt.s32.totalorder %s22, 1
      %s325 = scalar_select %p324, %s22, 1
      %s326 = smul.addr %s325, 80
      %s327 = smul.addr %s326, 8
      %s328 = scalar_lea.vmem %s0, %s327
      %p329 = scmp.lt.s32.totalorder %s22, 1
      %s330 = scalar_select %p329, %s22, 1
      %s331 = smul.addr %s330, 4
      %s332 = scalar_lea.vmem %s9, %s331
      %v333 = vld [vmem:[%s328] sm:$0xff]
      %v334 = vld [vmem:[%s328 + $0x8] sm:$0xff]
      %v335 = vld [vmem:[%s328 + $0x10] sm:$0xff]
      %v336 = vld [vmem:[%s328 + $0x18] sm:$0xff]
      %v337 = vld [vmem:[%s328 + $0x20] sm:$0xff]
      %v338 = vld [vmem:[%s328 + $0x28] sm:$0xff]
      %v339 = vld [vmem:[%s328 + $0x30] sm:$0xff]
      %v340 = vld [vmem:[%s328 + $0x38] sm:$0xff]
      %v341 = vld [vmem:[%s328 + $0x40] sm:$0xff]
      %v342 = vld [vmem:[%s328 + $0x48] sm:$0xff]
      %v343 = vld [vmem:[%s328 + $0x50] sm:$0xff]
      %v344 = vld [vmem:[%s328 + $0x58] sm:$0xff]
      %v345 = vld [vmem:[%s328 + $0x60] sm:$0xff]
      %v346 = vld [vmem:[%s328 + $0x68] sm:$0xff]
      %v347 = vld [vmem:[%s328 + $0x70] sm:$0xff]
      %v348 = vld [vmem:[%s328 + $0x78] sm:$0xff]
      %v349 = vld [vmem:[%s328 + $0x80] sm:$0xff]
      %v350 = vld [vmem:[%s328 + $0x88] sm:$0xff]
      %v351 = vld [vmem:[%s328 + $0x90] sm:$0xff]
      %v352 = vld [vmem:[%s328 + $0x98] sm:$0xff]
      %v353 = vld [vmem:[%s328 + $0xa0] sm:$0xff]
      %v354 = vld [vmem:[%s328 + $0xa8] sm:$0xff]
      %v355 = vld [vmem:[%s328 + $0xb0] sm:$0xff]
      %v356 = vld [vmem:[%s328 + $0xb8] sm:$0xff]
      %v357 = vld [vmem:[%s328 + $0xc0] sm:$0xff]
      %v358 = vld [vmem:[%s328 + $0xc8] sm:$0xff]
      %v359 = vld [vmem:[%s328 + $0xd0] sm:$0xff]
      %v360 = vld [vmem:[%s328 + $0xd8] sm:$0xff]
      %v361 = vld [vmem:[%s328 + $0xe0] sm:$0xff]
      %v362 = vld [vmem:[%s328 + $0xe8] sm:$0xff]
      %v363 = vld [vmem:[%s328 + $0xf0] sm:$0xff]
      %v364 = vld [vmem:[%s328 + $0xf8] sm:$0xff]
      %v365 = vld [vmem:[%s328 + $0x100] sm:$0xff]
      %v366 = vld [vmem:[%s328 + $0x108] sm:$0xff]
      %v367 = vld [vmem:[%s328 + $0x110] sm:$0xff]
      %v368 = vld [vmem:[%s328 + $0x118] sm:$0xff]
      %v369 = vld [vmem:[%s328 + $0x120] sm:$0xff]
      %v370 = vld [vmem:[%s328 + $0x128] sm:$0xff]
      %v371 = vld [vmem:[%s328 + $0x130] sm:$0xff]
      %v372 = vld [vmem:[%s328 + $0x138] sm:$0xff]
      %v373 = vld [vmem:[%s328 + $0x140] sm:$0xff]
      %v374 = vld [vmem:[%s328 + $0x148] sm:$0xff]
      %v375 = vld [vmem:[%s328 + $0x150] sm:$0xff]
      %v376 = vld [vmem:[%s328 + $0x158] sm:$0xff]
      %v377 = vld [vmem:[%s328 + $0x160] sm:$0xff]
      %v378 = vld [vmem:[%s328 + $0x168] sm:$0xff]
      %v379 = vld [vmem:[%s328 + $0x170] sm:$0xff]
      %v380 = vld [vmem:[%s328 + $0x178] sm:$0xff]
      %v381 = vld [vmem:[%s328 + $0x180] sm:$0xff]
      %v382 = vld [vmem:[%s328 + $0x188] sm:$0xff]
      %v383 = vld [vmem:[%s328 + $0x190] sm:$0xff]
      %v384 = vld [vmem:[%s328 + $0x198] sm:$0xff]
      %v385 = vld [vmem:[%s328 + $0x1a0] sm:$0xff]
      %v386 = vld [vmem:[%s328 + $0x1a8] sm:$0xff]
      %v387 = vld [vmem:[%s328 + $0x1b0] sm:$0xff]
      %v388 = vld [vmem:[%s328 + $0x1b8] sm:$0xff]
      %v389 = vld [vmem:[%s328 + $0x1c0] sm:$0xff]
      %v390 = vld [vmem:[%s328 + $0x1c8] sm:$0xff]
      %v391 = vld [vmem:[%s328 + $0x1d0] sm:$0xff]
      %v392 = vld [vmem:[%s328 + $0x1d8] sm:$0xff]
      %v393 = vld [vmem:[%s328 + $0x1e0] sm:$0xff]
      %v394 = vld [vmem:[%s328 + $0x1e8] sm:$0xff]
      %v395 = vld [vmem:[%s328 + $0x1f0] sm:$0xff]
      %v396 = vld [vmem:[%s328 + $0x1f8] sm:$0xff]
      %v397 = vld [vmem:[%s328 + $0x200] sm:$0xff]
      %v398 = vld [vmem:[%s328 + $0x208] sm:$0xff]
      %v399 = vld [vmem:[%s328 + $0x210] sm:$0xff]
      %v400 = vld [vmem:[%s328 + $0x218] sm:$0xff]
      %v401 = vld [vmem:[%s328 + $0x220] sm:$0xff]
      %v402 = vld [vmem:[%s328 + $0x228] sm:$0xff]
      %v403 = vld [vmem:[%s328 + $0x230] sm:$0xff]
      %v404 = vld [vmem:[%s328 + $0x238] sm:$0xff]
      %v405 = vld [vmem:[%s328 + $0x240] sm:$0xff]
      %v406 = vld [vmem:[%s328 + $0x248] sm:$0xff]
      %v407 = vld [vmem:[%s328 + $0x250] sm:$0xff]
      %v408 = vld [vmem:[%s328 + $0x258] sm:$0xff]
      %v409 = vld [vmem:[%s328 + $0x260] sm:$0xff]
      %v410 = vld [vmem:[%s328 + $0x268] sm:$0xff]
      %v411 = vld [vmem:[%s328 + $0x270] sm:$0xff]
      %v412 = vld [vmem:[%s328 + $0x278] sm:$0xff]
      %v413 = vrot.slane %v333, 7
      %v414 = vrot.slane %v334, 7
      %v415 = vrot.slane %v335, 7
      %v416 = vrot.slane %v336, 7
      %v417 = vrot.slane %v337, 7
      %v418 = vrot.slane %v338, 7
      %v419 = vrot.slane %v339, 7
      %v420 = vrot.slane %v340, 7
      %v421 = vrot.slane %v341, 7
      %v422 = vrot.slane %v342, 7
      %v423 = vrot.slane %v343, 7
      %v424 = vrot.slane %v344, 7
      %v425 = vrot.slane %v345, 7
      %v426 = vrot.slane %v346, 7
      %v427 = vrot.slane %v347, 7
      %v428 = vrot.slane %v348, 7
      %v429 = vrot.slane %v349, 7
      %v430 = vrot.slane %v350, 7
      %v431 = vrot.slane %v351, 7
      %v432 = vrot.slane %v352, 7
      %v433 = vrot.slane %v353, 7
      %v434 = vrot.slane %v354, 7
      %v435 = vrot.slane %v355, 7
      %v436 = vrot.slane %v356, 7
      %v437 = vrot.slane %v357, 7
      %v438 = vrot.slane %v358, 7
      %v439 = vrot.slane %v359, 7
      %v440 = vrot.slane %v360, 7
      %v441 = vrot.slane %v361, 7
      %v442 = vrot.slane %v362, 7
      %v443 = vrot.slane %v363, 7
      %v444 = vrot.slane %v364, 7
      %v445 = vrot.slane %v365, 7
      %v446 = vrot.slane %v366, 7
      %v447 = vrot.slane %v367, 7
      %v448 = vrot.slane %v368, 7
      %v449 = vrot.slane %v369, 7
      %v450 = vrot.slane %v370, 7
      %v451 = vrot.slane %v371, 7
      %v452 = vrot.slane %v372, 7
      %v453 = vrot.slane %v373, 7
      %v454 = vrot.slane %v374, 7
      %v455 = vrot.slane %v375, 7
      %v456 = vrot.slane %v376, 7
      %v457 = vrot.slane %v377, 7
      %v458 = vrot.slane %v378, 7
      %v459 = vrot.slane %v379, 7
      %v460 = vrot.slane %v380, 7
      %v461 = vrot.slane %v381, 7
      %v462 = vrot.slane %v382, 7
      %v463 = vrot.slane %v383, 7
      %v464 = vrot.slane %v384, 7
      %v465 = vrot.slane %v385, 7
      %v466 = vrot.slane %v386, 7
      %v467 = vrot.slane %v387, 7
      %v468 = vrot.slane %v388, 7
      %v469 = vrot.slane %v389, 7
      %v470 = vrot.slane %v390, 7
      %v471 = vrot.slane %v391, 7
      %v472 = vrot.slane %v392, 7
      %v473 = vrot.slane %v393, 7
      %v474 = vrot.slane %v394, 7
      %v475 = vrot.slane %v395, 7
      %v476 = vrot.slane %v396, 7
      %v477 = vrot.slane %v397, 7
      %v478 = vrot.slane %v398, 7
      %v479 = vrot.slane %v399, 7
      %v480 = vrot.slane %v400, 7
      %v481 = vrot.slane %v401, 7
      %v482 = vrot.slane %v402, 7
      %v483 = vrot.slane %v403, 7
      %v484 = vrot.slane %v404, 7
      %v485 = vrot.slane %v405, 7
      %v486 = vrot.slane %v406, 7
      %v487 = vrot.slane %v407, 7
      %v488 = vrot.slane %v408, 7
      %v489 = vrot.slane %v409, 7
      %v490 = vrot.slane %v410, 7
      %v491 = vrot.slane %v411, 7
      %v492 = vrot.slane %v412, 7
      %v493 = vlaneseq
      %v494 = vshrl.u32 %v493, 7
      %vm495 = vcmp.lt.s32.totalorder %v494, 1
      %v496 = vsel %vm495, %v491, %v492
      %v497 = vsel %vm495, %v490, %v491
      %v498 = vsel %vm495, %v489, %v490
      %v499 = vsel %vm495, %v488, %v489
      %v500 = vsel %vm495, %v487, %v488
      %v501 = vsel %vm495, %v486, %v487
      %v502 = vsel %vm495, %v485, %v486
      %v503 = vsel %vm495, %v484, %v485
      %v504 = vsel %vm495, %v483, %v484
      %v505 = vsel %vm495, %v482, %v483
      %v506 = vsel %vm495, %v481, %v482
      %v507 = vsel %vm495, %v480, %v481
      %v508 = vsel %vm495, %v479, %v480
      %v509 = vsel %vm495, %v478, %v479
      %v510 = vsel %vm495, %v477, %v478
      %v511 = vsel %vm495, %v476, %v477
      %v512 = vsel %vm495, %v475, %v476
      %v513 = vsel %vm495, %v474, %v475
      %v514 = vsel %vm495, %v473, %v474
      %v515 = vsel %vm495, %v472, %v473
      %v516 = vsel %vm495, %v471, %v472
      %v517 = vsel %vm495, %v470, %v471
      %v518 = vsel %vm495, %v469, %v470
      %v519 = vsel %vm495, %v468, %v469
      %v520 = vsel %vm495, %v467, %v468
      %v521 = vsel %vm495, %v466, %v467
      %v522 = vsel %vm495, %v465, %v466
      %v523 = vsel %vm495, %v464, %v465
      %v524 = vsel %vm495, %v463, %v464
      %v525 = vsel %vm495, %v462, %v463
      %v526 = vsel %vm495, %v461, %v462
      %v527 = vsel %vm495, %v460, %v461
      %v528 = vsel %vm495, %v459, %v460
      %v529 = vsel %vm495, %v458, %v459
      %v530 = vsel %vm495, %v457, %v458
      %v531 = vsel %vm495, %v456, %v457
      %v532 = vsel %vm495, %v455, %v456
      %v533 = vsel %vm495, %v454, %v455
      %v534 = vsel %vm495, %v453, %v454
      %v535 = vsel %vm495, %v452, %v453
      %v536 = vsel %vm495, %v451, %v452
      %v537 = vsel %vm495, %v450, %v451
      %v538 = vsel %vm495, %v449, %v450
      %v539 = vsel %vm495, %v448, %v449
      %v540 = vsel %vm495, %v447, %v448
      %v541 = vsel %vm495, %v446, %v447
      %v542 = vsel %vm495, %v445, %v446
      %v543 = vsel %vm495, %v444, %v445
      %v544 = vsel %vm495, %v443, %v444
      %v545 = vsel %vm495, %v442, %v443
      %v546 = vsel %vm495, %v441, %v442
      %v547 = vsel %vm495, %v440, %v441
      %v548 = vsel %vm495, %v439, %v440
      %v549 = vsel %vm495, %v438, %v439
      %v550 = vsel %vm495, %v437, %v438
      %v551 = vsel %vm495, %v436, %v437
      %v552 = vsel %vm495, %v435, %v436
      %v553 = vsel %vm495, %v434, %v435
      %v554 = vsel %vm495, %v433, %v434
      %v555 = vsel %vm495, %v432, %v433
      %v556 = vsel %vm495, %v431, %v432
      %v557 = vsel %vm495, %v430, %v431
      %v558 = vsel %vm495, %v429, %v430
      %v559 = vsel %vm495, %v428, %v429
      %v560 = vsel %vm495, %v427, %v428
      %v561 = vsel %vm495, %v426, %v427
      %v562 = vsel %vm495, %v425, %v426
      %v563 = vsel %vm495, %v424, %v425
      %v564 = vsel %vm495, %v423, %v424
      %v565 = vsel %vm495, %v422, %v423
      %v566 = vsel %vm495, %v421, %v422
      %v567 = vsel %vm495, %v420, %v421
      %v568 = vsel %vm495, %v419, %v420
      %v569 = vsel %vm495, %v418, %v419
      %v570 = vsel %vm495, %v417, %v418
      %v571 = vsel %vm495, %v416, %v417
      %v572 = vsel %vm495, %v415, %v416
      %v573 = vsel %vm495, %v414, %v415
      %v574 = vsel %vm495, %v413, %v414
      %v575 = vsel %vm495, %v492, %v413
      %v576 = vld [vmem:[%s1] sm:$0xff]
      %v577 = vld [vmem:[%s1 + $0x8] sm:$0xff]
      %v578 = vld [vmem:[%s1 + $0x10] sm:$0xff]
      %v579 = vld [vmem:[%s1 + $0x18] sm:$0xff]
      %s580 = scalar_lea.vmem %s1, 32
      %v581 = vld [vmem:[%s580] sm:$0xff]
      %v582 = vld [vmem:[%s580 + $0x8] sm:$0xff]
      %v583 = vld [vmem:[%s580 + $0x10] sm:$0xff]
      %v584 = vld [vmem:[%s580 + $0x18] sm:$0xff]
      %vm585 = vcmask 261120
      %v587 = vsel %vm585, %v333, 0
      %v590 = vsel %vm585, %v334, 0
      %v593 = vsel %vm585, %v335, 0
      %v596 = vsel %vm585, %v336, 0
      %v599 = vsel %vm585, %v337, 0
      %v602 = vsel %vm585, %v338, 0
      %v605 = vsel %vm585, %v339, 0
      %v608 = vsel %vm585, %v340, 0
      %v611 = vsel %vm585, %v341, 0
      %v614 = vsel %vm585, %v342, 0
      %v617 = vsel %vm585, %v343, 0
      %v620 = vsel %vm585, %v344, 0
      %v623 = vsel %vm585, %v345, 0
      %v626 = vsel %vm585, %v346, 0
      %v629 = vsel %vm585, %v347, 0
      %v632 = vsel %vm585, %v348, 0
      %v635 = vsel %vm585, %v349, 0
      %v638 = vsel %vm585, %v350, 0
      %v641 = vsel %vm585, %v351, 0
      %v644 = vsel %vm585, %v352, 0
      %v647 = vsel %vm585, %v353, 0
      %v650 = vsel %vm585, %v354, 0
      %v653 = vsel %vm585, %v355, 0
      %v656 = vsel %vm585, %v356, 0
      %v659 = vsel %vm585, %v357, 0
      %v662 = vsel %vm585, %v358, 0
      %v665 = vsel %vm585, %v359, 0
      %v668 = vsel %vm585, %v360, 0
      %v671 = vsel %vm585, %v361, 0
      %v674 = vsel %vm585, %v362, 0
      %v677 = vsel %vm585, %v363, 0
      %v680 = vsel %vm585, %v364, 0
      %v683 = vsel %vm585, %v365, 0
      %v686 = vsel %vm585, %v366, 0
      %v689 = vsel %vm585, %v367, 0
      %v692 = vsel %vm585, %v368, 0
      %v695 = vsel %vm585, %v369, 0
      %v698 = vsel %vm585, %v370, 0
      %v701 = vsel %vm585, %v371, 0
      %v704 = vsel %vm585, %v372, 0
      %v707 = vsel %vm585, %v373, 0
      %v710 = vsel %vm585, %v374, 0
      %v713 = vsel %vm585, %v375, 0
      %v716 = vsel %vm585, %v376, 0
      %v719 = vsel %vm585, %v377, 0
      %v722 = vsel %vm585, %v378, 0
      %v725 = vsel %vm585, %v379, 0
      %v728 = vsel %vm585, %v380, 0
      %v731 = vsel %vm585, %v381, 0
      %v734 = vsel %vm585, %v382, 0
      %v737 = vsel %vm585, %v383, 0
      %v740 = vsel %vm585, %v384, 0
      %v743 = vsel %vm585, %v385, 0
      %v746 = vsel %vm585, %v386, 0
      %v749 = vsel %vm585, %v387, 0
      %v752 = vsel %vm585, %v388, 0
      %v755 = vsel %vm585, %v389, 0
      %v758 = vsel %vm585, %v390, 0
      %v761 = vsel %vm585, %v391, 0
      %v764 = vsel %vm585, %v392, 0
      %v767 = vsel %vm585, %v393, 0
      %v770 = vsel %vm585, %v394, 0
      %v773 = vsel %vm585, %v395, 0
      %v776 = vsel %vm585, %v396, 0
      %v779 = vsel %vm585, %v397, 0
      %v782 = vsel %vm585, %v398, 0
      %v785 = vsel %vm585, %v399, 0
      %v788 = vsel %vm585, %v400, 0
      %v791 = vsel %vm585, %v401, 0
      %v794 = vsel %vm585, %v402, 0
      %v797 = vsel %vm585, %v403, 0
      %v800 = vsel %vm585, %v404, 0
      %v803 = vsel %vm585, %v405, 0
      %v806 = vsel %vm585, %v406, 0
      %v809 = vsel %vm585, %v407, 0
      %v812 = vsel %vm585, %v408, 0
      %v815 = vsel %vm585, %v409, 0
      %v818 = vsel %vm585, %v410, 0
      %v821 = vsel %vm585, %v411, 0
      %v824 = vsel %vm585, %v412, 0
      %826 = vmatpush.msra.mxu0 0.0
      %827 = vmatpush.msra.mxu0 0.0
      %828 = vmatpush.msra.mxu0 0.0
      %829 = vmatpush.msra.mxu0 0.0
      %830 = vmatpush.msra.mxu0 0.0
      %831 = vmatpush.msra.mxu0 0.0
      %832 = vmatpush.msra.mxu0 0.0
      %833 = vmatpush.msra.mxu0 0.0
      %834 = vmatpush.msra.mxu0 0.0
      %835 = vmatpush.msra.mxu0 0.0
      %836 = vmatpush.msra.mxu0 0.0
      %837 = vmatpush.msra.mxu0 0.0
      %838 = vmatpush.msra.mxu0 %v584
      %839 = vmatpush.msra.mxu0 %v583
      %840 = vmatpush.msra.mxu0 %v582
      %841 = vmatpush.msra.mxu0 %v581
      %842 = vmatmul.f32.gmra.mxu0 %v587
      %v843 = vpop.f32.mrf.mxu0
      %v844 = vadd.f32 0.0, %v843
      %845 = vmatmul.f32.gmra.mxu0 %v590
      %v846 = vpop.f32.mrf.mxu0
      %v847 = vadd.f32 0.0, %v846
      %848 = vmatmul.f32.gmra.mxu0 %v593
      %v849 = vpop.f32.mrf.mxu0
      %v850 = vadd.f32 0.0, %v849
      %851 = vmatmul.f32.gmra.mxu0 %v596
      %v852 = vpop.f32.mrf.mxu0
      %v853 = vadd.f32 0.0, %v852
      %854 = vmatmul.f32.gmra.mxu0 %v599
      %v855 = vpop.f32.mrf.mxu0
      %v856 = vadd.f32 0.0, %v855
      %857 = vmatmul.f32.gmra.mxu0 %v602
      %v858 = vpop.f32.mrf.mxu0
      %v859 = vadd.f32 0.0, %v858
      %860 = vmatmul.f32.gmra.mxu0 %v605
      %v861 = vpop.f32.mrf.mxu0
      %v862 = vadd.f32 0.0, %v861
      %863 = vmatmul.f32.gmra.mxu0 %v608
      %v864 = vpop.f32.mrf.mxu0
      %v865 = vadd.f32 0.0, %v864
      %866 = vmatmul.f32.gmra.mxu0 %v611
      %v867 = vpop.f32.mrf.mxu0
      %v868 = vadd.f32 0.0, %v867
      %869 = vmatmul.f32.gmra.mxu0 %v614
      %v870 = vpop.f32.mrf.mxu0
      %v871 = vadd.f32 0.0, %v870
      %872 = vmatmul.f32.gmra.mxu0 %v617
      %v873 = vpop.f32.mrf.mxu0
      %v874 = vadd.f32 0.0, %v873
      %875 = vmatmul.f32.gmra.mxu0 %v620
      %v876 = vpop.f32.mrf.mxu0
      %v877 = vadd.f32 0.0, %v876
      %878 = vmatmul.f32.gmra.mxu0 %v623
      %v879 = vpop.f32.mrf.mxu0
      %v880 = vadd.f32 0.0, %v879
      %881 = vmatmul.f32.gmra.mxu0 %v626
      %v882 = vpop.f32.mrf.mxu0
      %v883 = vadd.f32 0.0, %v882
      %884 = vmatmul.f32.gmra.mxu0 %v629
      %v885 = vpop.f32.mrf.mxu0
      %v886 = vadd.f32 0.0, %v885
      %887 = vmatmul.f32.gmra.mxu0 %v632
      %v888 = vpop.f32.mrf.mxu0
      %v889 = vadd.f32 0.0, %v888
      %890 = vmatmul.f32.gmra.mxu0 %v635
      %v891 = vpop.f32.mrf.mxu0
      %v892 = vadd.f32 0.0, %v891
      %893 = vmatmul.f32.gmra.mxu0 %v638
      %v894 = vpop.f32.mrf.mxu0
      %v895 = vadd.f32 0.0, %v894
      %896 = vmatmul.f32.gmra.mxu0 %v641
      %v897 = vpop.f32.mrf.mxu0
      %v898 = vadd.f32 0.0, %v897
      %899 = vmatmul.f32.gmra.mxu0 %v644
      %v900 = vpop.f32.mrf.mxu0
      %v901 = vadd.f32 0.0, %v900
      %902 = vmatmul.f32.gmra.mxu0 %v647
      %v903 = vpop.f32.mrf.mxu0
      %v904 = vadd.f32 0.0, %v903
      %905 = vmatmul.f32.gmra.mxu0 %v650
      %v906 = vpop.f32.mrf.mxu0
      %v907 = vadd.f32 0.0, %v906
      %908 = vmatmul.f32.gmra.mxu0 %v653
      %v909 = vpop.f32.mrf.mxu0
      %v910 = vadd.f32 0.0, %v909
      %911 = vmatmul.f32.gmra.mxu0 %v656
      %v912 = vpop.f32.mrf.mxu0
      %v913 = vadd.f32 0.0, %v912
      %914 = vmatmul.f32.gmra.mxu0 %v659
      %v915 = vpop.f32.mrf.mxu0
      %v916 = vadd.f32 0.0, %v915
      %917 = vmatmul.f32.gmra.mxu0 %v662
      %v918 = vpop.f32.mrf.mxu0
      %v919 = vadd.f32 0.0, %v918
      %920 = vmatmul.f32.gmra.mxu0 %v665
      %v921 = vpop.f32.mrf.mxu0
      %v922 = vadd.f32 0.0, %v921
      %923 = vmatmul.f32.gmra.mxu0 %v668
      %v924 = vpop.f32.mrf.mxu0
      %v925 = vadd.f32 0.0, %v924
      %926 = vmatmul.f32.gmra.mxu0 %v671
      %v927 = vpop.f32.mrf.mxu0
      %v928 = vadd.f32 0.0, %v927
      %929 = vmatmul.f32.gmra.mxu0 %v674
      %v930 = vpop.f32.mrf.mxu0
      %v931 = vadd.f32 0.0, %v930
      %932 = vmatmul.f32.gmra.mxu0 %v677
      %v933 = vpop.f32.mrf.mxu0
      %v934 = vadd.f32 0.0, %v933
      %935 = vmatmul.f32.gmra.mxu0 %v680
      %v936 = vpop.f32.mrf.mxu0
      %v937 = vadd.f32 0.0, %v936
      %938 = vmatmul.f32.gmra.mxu0 %v683
      %v939 = vpop.f32.mrf.mxu0
      %v940 = vadd.f32 0.0, %v939
      %941 = vmatmul.f32.gmra.mxu0 %v686
      %v942 = vpop.f32.mrf.mxu0
      %v943 = vadd.f32 0.0, %v942
      %944 = vmatmul.f32.gmra.mxu0 %v689
      %v945 = vpop.f32.mrf.mxu0
      %v946 = vadd.f32 0.0, %v945
      %947 = vmatmul.f32.gmra.mxu0 %v692
      %v948 = vpop.f32.mrf.mxu0
      %v949 = vadd.f32 0.0, %v948
      %950 = vmatmul.f32.gmra.mxu0 %v695
      %v951 = vpop.f32.mrf.mxu0
      %v952 = vadd.f32 0.0, %v951
      %953 = vmatmul.f32.gmra.mxu0 %v698
      %v954 = vpop.f32.mrf.mxu0
      %v955 = vadd.f32 0.0, %v954
      %956 = vmatmul.f32.gmra.mxu0 %v701
      %v957 = vpop.f32.mrf.mxu0
      %v958 = vadd.f32 0.0, %v957
      %959 = vmatmul.f32.gmra.mxu0 %v704
      %v960 = vpop.f32.mrf.mxu0
      %v961 = vadd.f32 0.0, %v960
      %962 = vmatmul.f32.gmra.mxu0 %v707
      %v963 = vpop.f32.mrf.mxu0
      %v964 = vadd.f32 0.0, %v963
      %965 = vmatmul.f32.gmra.mxu0 %v710
      %v966 = vpop.f32.mrf.mxu0
      %v967 = vadd.f32 0.0, %v966
      %968 = vmatmul.f32.gmra.mxu0 %v713
      %v969 = vpop.f32.mrf.mxu0
      %v970 = vadd.f32 0.0, %v969
      %971 = vmatmul.f32.gmra.mxu0 %v716
      %v972 = vpop.f32.mrf.mxu0
      %v973 = vadd.f32 0.0, %v972
      %974 = vmatmul.f32.gmra.mxu0 %v719
      %v975 = vpop.f32.mrf.mxu0
      %v976 = vadd.f32 0.0, %v975
      %977 = vmatmul.f32.gmra.mxu0 %v722
      %v978 = vpop.f32.mrf.mxu0
      %v979 = vadd.f32 0.0, %v978
      %980 = vmatmul.f32.gmra.mxu0 %v725
      %v981 = vpop.f32.mrf.mxu0
      %v982 = vadd.f32 0.0, %v981
      %983 = vmatmul.f32.gmra.mxu0 %v728
      %v984 = vpop.f32.mrf.mxu0
      %v985 = vadd.f32 0.0, %v984
      %986 = vmatmul.f32.gmra.mxu0 %v731
      %v987 = vpop.f32.mrf.mxu0
      %v988 = vadd.f32 0.0, %v987
      %989 = vmatmul.f32.gmra.mxu0 %v734
      %v990 = vpop.f32.mrf.mxu0
      %v991 = vadd.f32 0.0, %v990
      %992 = vmatmul.f32.gmra.mxu0 %v737
      %v993 = vpop.f32.mrf.mxu0
      %v994 = vadd.f32 0.0, %v993
      %995 = vmatmul.f32.gmra.mxu0 %v740
      %v996 = vpop.f32.mrf.mxu0
      %v997 = vadd.f32 0.0, %v996
      %998 = vmatmul.f32.gmra.mxu0 %v743
      %v999 = vpop.f32.mrf.mxu0
      %v1000 = vadd.f32 0.0, %v999
      %1001 = vmatmul.f32.gmra.mxu0 %v746
      %v1002 = vpop.f32.mrf.mxu0
      %v1003 = vadd.f32 0.0, %v1002
      %1004 = vmatmul.f32.gmra.mxu0 %v749
      %v1005 = vpop.f32.mrf.mxu0
      %v1006 = vadd.f32 0.0, %v1005
      %1007 = vmatmul.f32.gmra.mxu0 %v752
      %v1008 = vpop.f32.mrf.mxu0
      %v1009 = vadd.f32 0.0, %v1008
      %1010 = vmatmul.f32.gmra.mxu0 %v755
      %v1011 = vpop.f32.mrf.mxu0
      %v1012 = vadd.f32 0.0, %v1011
      %1013 = vmatmul.f32.gmra.mxu0 %v758
      %v1014 = vpop.f32.mrf.mxu0
      %v1015 = vadd.f32 0.0, %v1014
      %1016 = vmatmul.f32.gmra.mxu0 %v761
      %v1017 = vpop.f32.mrf.mxu0
      %v1018 = vadd.f32 0.0, %v1017
      %1019 = vmatmul.f32.gmra.mxu0 %v764
      %v1020 = vpop.f32.mrf.mxu0
      %v1021 = vadd.f32 0.0, %v1020
      %1022 = vmatmul.f32.gmra.mxu0 %v767
      %v1023 = vpop.f32.mrf.mxu0
      %v1024 = vadd.f32 0.0, %v1023
      %1025 = vmatmul.f32.gmra.mxu0 %v770
      %v1026 = vpop.f32.mrf.mxu0
      %v1027 = vadd.f32 0.0, %v1026
      %1028 = vmatmul.f32.gmra.mxu0 %v773
      %v1029 = vpop.f32.mrf.mxu0
      %v1030 = vadd.f32 0.0, %v1029
      %1031 = vmatmul.f32.gmra.mxu0 %v776
      %v1032 = vpop.f32.mrf.mxu0
      %v1033 = vadd.f32 0.0, %v1032
      %1034 = vmatmul.f32.gmra.mxu0 %v779
      %v1035 = vpop.f32.mrf.mxu0
      %v1036 = vadd.f32 0.0, %v1035
      %1037 = vmatmul.f32.gmra.mxu0 %v782
      %v1038 = vpop.f32.mrf.mxu0
      %v1039 = vadd.f32 0.0, %v1038
      %1040 = vmatmul.f32.gmra.mxu0 %v785
      %v1041 = vpop.f32.mrf.mxu0
      %v1042 = vadd.f32 0.0, %v1041
      %1043 = vmatmul.f32.gmra.mxu0 %v788
      %v1044 = vpop.f32.mrf.mxu0
      %v1045 = vadd.f32 0.0, %v1044
      %1046 = vmatmul.f32.gmra.mxu0 %v791
      %v1047 = vpop.f32.mrf.mxu0
      %v1048 = vadd.f32 0.0, %v1047
      %1049 = vmatmul.f32.gmra.mxu0 %v794
      %v1050 = vpop.f32.mrf.mxu0
      %v1051 = vadd.f32 0.0, %v1050
      %1052 = vmatmul.f32.gmra.mxu0 %v797
      %v1053 = vpop.f32.mrf.mxu0
      %v1054 = vadd.f32 0.0, %v1053
      %1055 = vmatmul.f32.gmra.mxu0 %v800
      %v1056 = vpop.f32.mrf.mxu0
      %v1057 = vadd.f32 0.0, %v1056
      %1058 = vmatmul.f32.gmra.mxu0 %v803
      %v1059 = vpop.f32.mrf.mxu0
      %v1060 = vadd.f32 0.0, %v1059
      %1061 = vmatmul.f32.gmra.mxu0 %v806
      %v1062 = vpop.f32.mrf.mxu0
      %v1063 = vadd.f32 0.0, %v1062
      %1064 = vmatmul.f32.gmra.mxu0 %v809
      %v1065 = vpop.f32.mrf.mxu0
      %v1066 = vadd.f32 0.0, %v1065
      %1067 = vmatmul.f32.gmra.mxu0 %v812
      %v1068 = vpop.f32.mrf.mxu0
      %v1069 = vadd.f32 0.0, %v1068
      %1070 = vmatmul.f32.gmra.mxu0 %v815
      %v1071 = vpop.f32.mrf.mxu0
      %v1072 = vadd.f32 0.0, %v1071
      %1073 = vmatmul.f32.gmra.mxu0 %v818
      %v1074 = vpop.f32.mrf.mxu0
      %v1075 = vadd.f32 0.0, %v1074
      %1076 = vmatmul.f32.gmra.mxu0 %v821
      %v1077 = vpop.f32.mrf.mxu0
      %v1078 = vadd.f32 0.0, %v1077
      %1079 = vmatmul.f32.gmra.mxu0 %v824
      %v1080 = vpop.f32.mrf.mxu0
      %v1081 = vadd.f32 0.0, %v1080
      %1082 = vdwg.mxu0
      %v1084 = vsel %vm585, %v575, 0
      %v1087 = vsel %vm585, %v574, 0
      %v1090 = vsel %vm585, %v573, 0
      %v1093 = vsel %vm585, %v572, 0
      %v1096 = vsel %vm585, %v571, 0
      %v1099 = vsel %vm585, %v570, 0
      %v1102 = vsel %vm585, %v569, 0
      %v1105 = vsel %vm585, %v568, 0
      %v1108 = vsel %vm585, %v567, 0
      %v1111 = vsel %vm585, %v566, 0
      %v1114 = vsel %vm585, %v565, 0
      %v1117 = vsel %vm585, %v564, 0
      %v1120 = vsel %vm585, %v563, 0
      %v1123 = vsel %vm585, %v562, 0
      %v1126 = vsel %vm585, %v561, 0
      %v1129 = vsel %vm585, %v560, 0
      %v1132 = vsel %vm585, %v559, 0
      %v1135 = vsel %vm585, %v558, 0
      %v1138 = vsel %vm585, %v557, 0
      %v1141 = vsel %vm585, %v556, 0
      %v1144 = vsel %vm585, %v555, 0
      %v1147 = vsel %vm585, %v554, 0
      %v1150 = vsel %vm585, %v553, 0
      %v1153 = vsel %vm585, %v552, 0
      %v1156 = vsel %vm585, %v551, 0
      %v1159 = vsel %vm585, %v550, 0
      %v1162 = vsel %vm585, %v549, 0
      %v1165 = vsel %vm585, %v548, 0
      %v1168 = vsel %vm585, %v547, 0
      %v1171 = vsel %vm585, %v546, 0
      %v1174 = vsel %vm585, %v545, 0
      %v1177 = vsel %vm585, %v544, 0
      %v1180 = vsel %vm585, %v543, 0
      %v1183 = vsel %vm585, %v542, 0
      %v1186 = vsel %vm585, %v541, 0
      %v1189 = vsel %vm585, %v540, 0
      %v1192 = vsel %vm585, %v539, 0
      %v1195 = vsel %vm585, %v538, 0
      %v1198 = vsel %vm585, %v537, 0
      %v1201 = vsel %vm585, %v536, 0
      %v1204 = vsel %vm585, %v535, 0
      %v1207 = vsel %vm585, %v534, 0
      %v1210 = vsel %vm585, %v533, 0
      %v1213 = vsel %vm585, %v532, 0
      %v1216 = vsel %vm585, %v531, 0
      %v1219 = vsel %vm585, %v530, 0
      %v1222 = vsel %vm585, %v529, 0
      %v1225 = vsel %vm585, %v528, 0
      %v1228 = vsel %vm585, %v527, 0
      %v1231 = vsel %vm585, %v526, 0
      %v1234 = vsel %vm585, %v525, 0
      %v1237 = vsel %vm585, %v524, 0
      %v1240 = vsel %vm585, %v523, 0
      %v1243 = vsel %vm585, %v522, 0
      %v1246 = vsel %vm585, %v521, 0
      %v1249 = vsel %vm585, %v520, 0
      %v1252 = vsel %vm585, %v519, 0
      %v1255 = vsel %vm585, %v518, 0
      %v1258 = vsel %vm585, %v517, 0
      %v1261 = vsel %vm585, %v516, 0
      %v1264 = vsel %vm585, %v515, 0
      %v1267 = vsel %vm585, %v514, 0
      %v1270 = vsel %vm585, %v513, 0
      %v1273 = vsel %vm585, %v512, 0
      %v1276 = vsel %vm585, %v511, 0
      %v1279 = vsel %vm585, %v510, 0
      %v1282 = vsel %vm585, %v509, 0
      %v1285 = vsel %vm585, %v508, 0
      %v1288 = vsel %vm585, %v507, 0
      %v1291 = vsel %vm585, %v506, 0
      %v1294 = vsel %vm585, %v505, 0
      %v1297 = vsel %vm585, %v504, 0
      %v1300 = vsel %vm585, %v503, 0
      %v1303 = vsel %vm585, %v502, 0
      %v1306 = vsel %vm585, %v501, 0
      %v1309 = vsel %vm585, %v500, 0
      %v1312 = vsel %vm585, %v499, 0
      %v1315 = vsel %vm585, %v498, 0
      %v1318 = vsel %vm585, %v497, 0
      %v1321 = vsel %vm585, %v496, 0
      %1323 = vmatpush.msra.mxu0 0.0
      %1324 = vmatpush.msra.mxu0 0.0
      %1325 = vmatpush.msra.mxu0 0.0
      %1326 = vmatpush.msra.mxu0 0.0
      %1327 = vmatpush.msra.mxu0 0.0
      %1328 = vmatpush.msra.mxu0 0.0
      %1329 = vmatpush.msra.mxu0 0.0
      %1330 = vmatpush.msra.mxu0 0.0
      %1331 = vmatpush.msra.mxu0 0.0
      %1332 = vmatpush.msra.mxu0 0.0
      %1333 = vmatpush.msra.mxu0 0.0
      %1334 = vmatpush.msra.mxu0 0.0
      %1335 = vmatpush.msra.mxu0 %v579
      %1336 = vmatpush.msra.mxu0 %v578
      %1337 = vmatpush.msra.mxu0 %v577
      %1338 = vmatpush.msra.mxu0 %v576
      %1339 = vmatmul.f32.gmra.mxu0 %v1084
      %v1340 = vpop.f32.mrf.mxu0
      %v1341 = vadd.f32 %v844, %v1340
      %1342 = vmatmul.f32.gmra.mxu0 %v1087
      %v1343 = vpop.f32.mrf.mxu0
      %v1344 = vadd.f32 %v847, %v1343
      %1345 = vmatmul.f32.gmra.mxu0 %v1090
      %v1346 = vpop.f32.mrf.mxu0
      %v1347 = vadd.f32 %v850, %v1346
      %1348 = vmatmul.f32.gmra.mxu0 %v1093
      %v1349 = vpop.f32.mrf.mxu0
      %v1350 = vadd.f32 %v853, %v1349
      %1351 = vmatmul.f32.gmra.mxu0 %v1096
      %v1352 = vpop.f32.mrf.mxu0
      %v1353 = vadd.f32 %v856, %v1352
      %1354 = vmatmul.f32.gmra.mxu0 %v1099
      %v1355 = vpop.f32.mrf.mxu0
      %v1356 = vadd.f32 %v859, %v1355
      %1357 = vmatmul.f32.gmra.mxu0 %v1102
      %v1358 = vpop.f32.mrf.mxu0
      %v1359 = vadd.f32 %v862, %v1358
      %1360 = vmatmul.f32.gmra.mxu0 %v1105
      %v1361 = vpop.f32.mrf.mxu0
      %v1362 = vadd.f32 %v865, %v1361
      %1363 = vmatmul.f32.gmra.mxu0 %v1108
      %v1364 = vpop.f32.mrf.mxu0
      %v1365 = vadd.f32 %v868, %v1364
      %1366 = vmatmul.f32.gmra.mxu0 %v1111
      %v1367 = vpop.f32.mrf.mxu0
      %v1368 = vadd.f32 %v871, %v1367
      %1369 = vmatmul.f32.gmra.mxu0 %v1114
      %v1370 = vpop.f32.mrf.mxu0
      %v1371 = vadd.f32 %v874, %v1370
      %1372 = vmatmul.f32.gmra.mxu0 %v1117
      %v1373 = vpop.f32.mrf.mxu0
      %v1374 = vadd.f32 %v877, %v1373
      %1375 = vmatmul.f32.gmra.mxu0 %v1120
      %v1376 = vpop.f32.mrf.mxu0
      %v1377 = vadd.f32 %v880, %v1376
      %1378 = vmatmul.f32.gmra.mxu0 %v1123
      %v1379 = vpop.f32.mrf.mxu0
      %v1380 = vadd.f32 %v883, %v1379
      %1381 = vmatmul.f32.gmra.mxu0 %v1126
      %v1382 = vpop.f32.mrf.mxu0
      %v1383 = vadd.f32 %v886, %v1382
      %1384 = vmatmul.f32.gmra.mxu0 %v1129
      %v1385 = vpop.f32.mrf.mxu0
      %v1386 = vadd.f32 %v889, %v1385
      %1387 = vmatmul.f32.gmra.mxu0 %v1132
      %v1388 = vpop.f32.mrf.mxu0
      %v1389 = vadd.f32 %v892, %v1388
      %1390 = vmatmul.f32.gmra.mxu0 %v1135
      %v1391 = vpop.f32.mrf.mxu0
      %v1392 = vadd.f32 %v895, %v1391
      %1393 = vmatmul.f32.gmra.mxu0 %v1138
      %v1394 = vpop.f32.mrf.mxu0
      %v1395 = vadd.f32 %v898, %v1394
      %1396 = vmatmul.f32.gmra.mxu0 %v1141
      %v1397 = vpop.f32.mrf.mxu0
      %v1398 = vadd.f32 %v901, %v1397
      %1399 = vmatmul.f32.gmra.mxu0 %v1144
      %v1400 = vpop.f32.mrf.mxu0
      %v1401 = vadd.f32 %v904, %v1400
      %1402 = vmatmul.f32.gmra.mxu0 %v1147
      %v1403 = vpop.f32.mrf.mxu0
      %v1404 = vadd.f32 %v907, %v1403
      %1405 = vmatmul.f32.gmra.mxu0 %v1150
      %v1406 = vpop.f32.mrf.mxu0
      %v1407 = vadd.f32 %v910, %v1406
      %1408 = vmatmul.f32.gmra.mxu0 %v1153
      %v1409 = vpop.f32.mrf.mxu0
      %v1410 = vadd.f32 %v913, %v1409
      %1411 = vmatmul.f32.gmra.mxu0 %v1156
      %v1412 = vpop.f32.mrf.mxu0
      %v1413 = vadd.f32 %v916, %v1412
      %1414 = vmatmul.f32.gmra.mxu0 %v1159
      %v1415 = vpop.f32.mrf.mxu0
      %v1416 = vadd.f32 %v919, %v1415
      %1417 = vmatmul.f32.gmra.mxu0 %v1162
      %v1418 = vpop.f32.mrf.mxu0
      %v1419 = vadd.f32 %v922, %v1418
      %1420 = vmatmul.f32.gmra.mxu0 %v1165
      %v1421 = vpop.f32.mrf.mxu0
      %v1422 = vadd.f32 %v925, %v1421
      %1423 = vmatmul.f32.gmra.mxu0 %v1168
      %v1424 = vpop.f32.mrf.mxu0
      %v1425 = vadd.f32 %v928, %v1424
      %1426 = vmatmul.f32.gmra.mxu0 %v1171
      %v1427 = vpop.f32.mrf.mxu0
      %v1428 = vadd.f32 %v931, %v1427
      %1429 = vmatmul.f32.gmra.mxu0 %v1174
      %v1430 = vpop.f32.mrf.mxu0
      %v1431 = vadd.f32 %v934, %v1430
      %1432 = vmatmul.f32.gmra.mxu0 %v1177
      %v1433 = vpop.f32.mrf.mxu0
      %v1434 = vadd.f32 %v937, %v1433
      %1435 = vmatmul.f32.gmra.mxu0 %v1180
      %v1436 = vpop.f32.mrf.mxu0
      %v1437 = vadd.f32 %v940, %v1436
      %1438 = vmatmul.f32.gmra.mxu0 %v1183
      %v1439 = vpop.f32.mrf.mxu0
      %v1440 = vadd.f32 %v943, %v1439
      %1441 = vmatmul.f32.gmra.mxu0 %v1186
      %v1442 = vpop.f32.mrf.mxu0
      %v1443 = vadd.f32 %v946, %v1442
      %1444 = vmatmul.f32.gmra.mxu0 %v1189
      %v1445 = vpop.f32.mrf.mxu0
      %v1446 = vadd.f32 %v949, %v1445
      %1447 = vmatmul.f32.gmra.mxu0 %v1192
      %v1448 = vpop.f32.mrf.mxu0
      %v1449 = vadd.f32 %v952, %v1448
      %1450 = vmatmul.f32.gmra.mxu0 %v1195
      %v1451 = vpop.f32.mrf.mxu0
      %v1452 = vadd.f32 %v955, %v1451
      %1453 = vmatmul.f32.gmra.mxu0 %v1198
      %v1454 = vpop.f32.mrf.mxu0
      %v1455 = vadd.f32 %v958, %v1454
      %1456 = vmatmul.f32.gmra.mxu0 %v1201
      %v1457 = vpop.f32.mrf.mxu0
      %v1458 = vadd.f32 %v961, %v1457
      %1459 = vmatmul.f32.gmra.mxu0 %v1204
      %v1460 = vpop.f32.mrf.mxu0
      %v1461 = vadd.f32 %v964, %v1460
      %1462 = vmatmul.f32.gmra.mxu0 %v1207
      %v1463 = vpop.f32.mrf.mxu0
      %v1464 = vadd.f32 %v967, %v1463
      %1465 = vmatmul.f32.gmra.mxu0 %v1210
      %v1466 = vpop.f32.mrf.mxu0
      %v1467 = vadd.f32 %v970, %v1466
      %1468 = vmatmul.f32.gmra.mxu0 %v1213
      %v1469 = vpop.f32.mrf.mxu0
      %v1470 = vadd.f32 %v973, %v1469
      %1471 = vmatmul.f32.gmra.mxu0 %v1216
      %v1472 = vpop.f32.mrf.mxu0
      %v1473 = vadd.f32 %v976, %v1472
      %1474 = vmatmul.f32.gmra.mxu0 %v1219
      %v1475 = vpop.f32.mrf.mxu0
      %v1476 = vadd.f32 %v979, %v1475
      %1477 = vmatmul.f32.gmra.mxu0 %v1222
      %v1478 = vpop.f32.mrf.mxu0
      %v1479 = vadd.f32 %v982, %v1478
      %1480 = vmatmul.f32.gmra.mxu0 %v1225
      %v1481 = vpop.f32.mrf.mxu0
      %v1482 = vadd.f32 %v985, %v1481
      %1483 = vmatmul.f32.gmra.mxu0 %v1228
      %v1484 = vpop.f32.mrf.mxu0
      %v1485 = vadd.f32 %v988, %v1484
      %1486 = vmatmul.f32.gmra.mxu0 %v1231
      %v1487 = vpop.f32.mrf.mxu0
      %v1488 = vadd.f32 %v991, %v1487
      %1489 = vmatmul.f32.gmra.mxu0 %v1234
      %v1490 = vpop.f32.mrf.mxu0
      %v1491 = vadd.f32 %v994, %v1490
      %1492 = vmatmul.f32.gmra.mxu0 %v1237
      %v1493 = vpop.f32.mrf.mxu0
      %v1494 = vadd.f32 %v997, %v1493
      %1495 = vmatmul.f32.gmra.mxu0 %v1240
      %v1496 = vpop.f32.mrf.mxu0
      %v1497 = vadd.f32 %v1000, %v1496
      %1498 = vmatmul.f32.gmra.mxu0 %v1243
      %v1499 = vpop.f32.mrf.mxu0
      %v1500 = vadd.f32 %v1003, %v1499
      %1501 = vmatmul.f32.gmra.mxu0 %v1246
      %v1502 = vpop.f32.mrf.mxu0
      %v1503 = vadd.f32 %v1006, %v1502
      %1504 = vmatmul.f32.gmra.mxu0 %v1249
      %v1505 = vpop.f32.mrf.mxu0
      %v1506 = vadd.f32 %v1009, %v1505
      %1507 = vmatmul.f32.gmra.mxu0 %v1252
      %v1508 = vpop.f32.mrf.mxu0
      %v1509 = vadd.f32 %v1012, %v1508
      %1510 = vmatmul.f32.gmra.mxu0 %v1255
      %v1511 = vpop.f32.mrf.mxu0
      %v1512 = vadd.f32 %v1015, %v1511
      %1513 = vmatmul.f32.gmra.mxu0 %v1258
      %v1514 = vpop.f32.mrf.mxu0
      %v1515 = vadd.f32 %v1018, %v1514
      %1516 = vmatmul.f32.gmra.mxu0 %v1261
      %v1517 = vpop.f32.mrf.mxu0
      %v1518 = vadd.f32 %v1021, %v1517
      %1519 = vmatmul.f32.gmra.mxu0 %v1264
      %v1520 = vpop.f32.mrf.mxu0
      %v1521 = vadd.f32 %v1024, %v1520
      %1522 = vmatmul.f32.gmra.mxu0 %v1267
      %v1523 = vpop.f32.mrf.mxu0
      %v1524 = vadd.f32 %v1027, %v1523
      %1525 = vmatmul.f32.gmra.mxu0 %v1270
      %v1526 = vpop.f32.mrf.mxu0
      %v1527 = vadd.f32 %v1030, %v1526
      %1528 = vmatmul.f32.gmra.mxu0 %v1273
      %v1529 = vpop.f32.mrf.mxu0
      %v1530 = vadd.f32 %v1033, %v1529
      %1531 = vmatmul.f32.gmra.mxu0 %v1276
      %v1532 = vpop.f32.mrf.mxu0
      %v1533 = vadd.f32 %v1036, %v1532
      %1534 = vmatmul.f32.gmra.mxu0 %v1279
      %v1535 = vpop.f32.mrf.mxu0
      %v1536 = vadd.f32 %v1039, %v1535
      %1537 = vmatmul.f32.gmra.mxu0 %v1282
      %v1538 = vpop.f32.mrf.mxu0
      %v1539 = vadd.f32 %v1042, %v1538
      %1540 = vmatmul.f32.gmra.mxu0 %v1285
      %v1541 = vpop.f32.mrf.mxu0
      %v1542 = vadd.f32 %v1045, %v1541
      %1543 = vmatmul.f32.gmra.mxu0 %v1288
      %v1544 = vpop.f32.mrf.mxu0
      %v1545 = vadd.f32 %v1048, %v1544
      %1546 = vmatmul.f32.gmra.mxu0 %v1291
      %v1547 = vpop.f32.mrf.mxu0
      %v1548 = vadd.f32 %v1051, %v1547
      %1549 = vmatmul.f32.gmra.mxu0 %v1294
      %v1550 = vpop.f32.mrf.mxu0
      %v1551 = vadd.f32 %v1054, %v1550
      %1552 = vmatmul.f32.gmra.mxu0 %v1297
      %v1553 = vpop.f32.mrf.mxu0
      %v1554 = vadd.f32 %v1057, %v1553
      %1555 = vmatmul.f32.gmra.mxu0 %v1300
      %v1556 = vpop.f32.mrf.mxu0
      %v1557 = vadd.f32 %v1060, %v1556
      %1558 = vmatmul.f32.gmra.mxu0 %v1303
      %v1559 = vpop.f32.mrf.mxu0
      %v1560 = vadd.f32 %v1063, %v1559
      %1561 = vmatmul.f32.gmra.mxu0 %v1306
      %v1562 = vpop.f32.mrf.mxu0
      %v1563 = vadd.f32 %v1066, %v1562
      %1564 = vmatmul.f32.gmra.mxu0 %v1309
      %v1565 = vpop.f32.mrf.mxu0
      %v1566 = vadd.f32 %v1069, %v1565
      %1567 = vmatmul.f32.gmra.mxu0 %v1312
      %v1568 = vpop.f32.mrf.mxu0
      %v1569 = vadd.f32 %v1072, %v1568
      %1570 = vmatmul.f32.gmra.mxu0 %v1315
      %v1571 = vpop.f32.mrf.mxu0
      %v1572 = vadd.f32 %v1075, %v1571
      %1573 = vmatmul.f32.gmra.mxu0 %v1318
      %v1574 = vpop.f32.mrf.mxu0
      %v1575 = vadd.f32 %v1078, %v1574
      %1576 = vmatmul.f32.gmra.mxu0 %v1321
      %v1577 = vpop.f32.mrf.mxu0
      %v1578 = vadd.f32 %v1081, %v1577
      %1579 = vdwg.mxu0
      %v1580 = vrot.slane %v333, 1
      %v1581 = vrot.slane %v334, 1
      %v1582 = vrot.slane %v335, 1
      %v1583 = vrot.slane %v336, 1
      %v1584 = vrot.slane %v337, 1
      %v1585 = vrot.slane %v338, 1
      %v1586 = vrot.slane %v339, 1
      %v1587 = vrot.slane %v340, 1
      %v1588 = vrot.slane %v341, 1
      %v1589 = vrot.slane %v342, 1
      %v1590 = vrot.slane %v343, 1
      %v1591 = vrot.slane %v344, 1
      %v1592 = vrot.slane %v345, 1
      %v1593 = vrot.slane %v346, 1
      %v1594 = vrot.slane %v347, 1
      %v1595 = vrot.slane %v348, 1
      %v1596 = vrot.slane %v349, 1
      %v1597 = vrot.slane %v350, 1
      %v1598 = vrot.slane %v351, 1
      %v1599 = vrot.slane %v352, 1
      %v1600 = vrot.slane %v353, 1
      %v1601 = vrot.slane %v354, 1
      %v1602 = vrot.slane %v355, 1
      %v1603 = vrot.slane %v356, 1
      %v1604 = vrot.slane %v357, 1
      %v1605 = vrot.slane %v358, 1
      %v1606 = vrot.slane %v359, 1
      %v1607 = vrot.slane %v360, 1
      %v1608 = vrot.slane %v361, 1
      %v1609 = vrot.slane %v362, 1
      %v1610 = vrot.slane %v363, 1
      %v1611 = vrot.slane %v364, 1
      %v1612 = vrot.slane %v365, 1
      %v1613 = vrot.slane %v366, 1
      %v1614 = vrot.slane %v367, 1
      %v1615 = vrot.slane %v368, 1
      %v1616 = vrot.slane %v369, 1
      %v1617 = vrot.slane %v370, 1
      %v1618 = vrot.slane %v371, 1
      %v1619 = vrot.slane %v372, 1
      %v1620 = vrot.slane %v373, 1
      %v1621 = vrot.slane %v374, 1
      %v1622 = vrot.slane %v375, 1
      %v1623 = vrot.slane %v376, 1
      %v1624 = vrot.slane %v377, 1
      %v1625 = vrot.slane %v378, 1
      %v1626 = vrot.slane %v379, 1
      %v1627 = vrot.slane %v380, 1
      %v1628 = vrot.slane %v381, 1
      %v1629 = vrot.slane %v382, 1
      %v1630 = vrot.slane %v383, 1
      %v1631 = vrot.slane %v384, 1
      %v1632 = vrot.slane %v385, 1
      %v1633 = vrot.slane %v386, 1
      %v1634 = vrot.slane %v387, 1
      %v1635 = vrot.slane %v388, 1
      %v1636 = vrot.slane %v389, 1
      %v1637 = vrot.slane %v390, 1
      %v1638 = vrot.slane %v391, 1
      %v1639 = vrot.slane %v392, 1
      %v1640 = vrot.slane %v393, 1
      %v1641 = vrot.slane %v394, 1
      %v1642 = vrot.slane %v395, 1
      %v1643 = vrot.slane %v396, 1
      %v1644 = vrot.slane %v397, 1
      %v1645 = vrot.slane %v398, 1
      %v1646 = vrot.slane %v399, 1
      %v1647 = vrot.slane %v400, 1
      %v1648 = vrot.slane %v401, 1
      %v1649 = vrot.slane %v402, 1
      %v1650 = vrot.slane %v403, 1
      %v1651 = vrot.slane %v404, 1
      %v1652 = vrot.slane %v405, 1
      %v1653 = vrot.slane %v406, 1
      %v1654 = vrot.slane %v407, 1
      %v1655 = vrot.slane %v408, 1
      %v1656 = vrot.slane %v409, 1
      %v1657 = vrot.slane %v410, 1
      %v1658 = vrot.slane %v411, 1
      %v1659 = vrot.slane %v412, 1
      %vm1660 = vcmp.lt.s32.totalorder %v494, 7
      %v1661 = vsel %vm1660, %v1658, %v1659
      %v1662 = vsel %vm1660, %v1657, %v1658
      %v1663 = vsel %vm1660, %v1656, %v1657
      %v1664 = vsel %vm1660, %v1655, %v1656
      %v1665 = vsel %vm1660, %v1654, %v1655
      %v1666 = vsel %vm1660, %v1653, %v1654
      %v1667 = vsel %vm1660, %v1652, %v1653
      %v1668 = vsel %vm1660, %v1651, %v1652
      %v1669 = vsel %vm1660, %v1650, %v1651
      %v1670 = vsel %vm1660, %v1649, %v1650
      %v1671 = vsel %vm1660, %v1648, %v1649
      %v1672 = vsel %vm1660, %v1647, %v1648
      %v1673 = vsel %vm1660, %v1646, %v1647
      %v1674 = vsel %vm1660, %v1645, %v1646
      %v1675 = vsel %vm1660, %v1644, %v1645
      %v1676 = vsel %vm1660, %v1643, %v1644
      %v1677 = vsel %vm1660, %v1642, %v1643
      %v1678 = vsel %vm1660, %v1641, %v1642
      %v1679 = vsel %vm1660, %v1640, %v1641
      %v1680 = vsel %vm1660, %v1639, %v1640
      %v1681 = vsel %vm1660, %v1638, %v1639
      %v1682 = vsel %vm1660, %v1637, %v1638
      %v1683 = vsel %vm1660, %v1636, %v1637
      %v1684 = vsel %vm1660, %v1635, %v1636
      %v1685 = vsel %vm1660, %v1634, %v1635
      %v1686 = vsel %vm1660, %v1633, %v1634
      %v1687 = vsel %vm1660, %v1632, %v1633
      %v1688 = vsel %vm1660, %v1631, %v1632
      %v1689 = vsel %vm1660, %v1630, %v1631
      %v1690 = vsel %vm1660, %v1629, %v1630
      %v1691 = vsel %vm1660, %v1628, %v1629
      %v1692 = vsel %vm1660, %v1627, %v1628
      %v1693 = vsel %vm1660, %v1626, %v1627
      %v1694 = vsel %vm1660, %v1625, %v1626
      %v1695 = vsel %vm1660, %v1624, %v1625
      %v1696 = vsel %vm1660, %v1623, %v1624
      %v1697 = vsel %vm1660, %v1622, %v1623
      %v1698 = vsel %vm1660, %v1621, %v1622
      %v1699 = vsel %vm1660, %v1620, %v1621
      %v1700 = vsel %vm1660, %v1619, %v1620
      %v1701 = vsel %vm1660, %v1618, %v1619
      %v1702 = vsel %vm1660, %v1617, %v1618
      %v1703 = vsel %vm1660, %v1616, %v1617
      %v1704 = vsel %vm1660, %v1615, %v1616
      %v1705 = vsel %vm1660, %v1614, %v1615
      %v1706 = vsel %vm1660, %v1613, %v1614
      %v1707 = vsel %vm1660, %v1612, %v1613
      %v1708 = vsel %vm1660, %v1611, %v1612
      %v1709 = vsel %vm1660, %v1610, %v1611
      %v1710 = vsel %vm1660, %v1609, %v1610
      %v1711 = vsel %vm1660, %v1608, %v1609
      %v1712 = vsel %vm1660, %v1607, %v1608
      %v1713 = vsel %vm1660, %v1606, %v1607
      %v1714 = vsel %vm1660, %v1605, %v1606
      %v1715 = vsel %vm1660, %v1604, %v1605
      %v1716 = vsel %vm1660, %v1603, %v1604
      %v1717 = vsel %vm1660, %v1602, %v1603
      %v1718 = vsel %vm1660, %v1601, %v1602
      %v1719 = vsel %vm1660, %v1600, %v1601
      %v1720 = vsel %vm1660, %v1599, %v1600
      %v1721 = vsel %vm1660, %v1598, %v1599
      %v1722 = vsel %vm1660, %v1597, %v1598
      %v1723 = vsel %vm1660, %v1596, %v1597
      %v1724 = vsel %vm1660, %v1595, %v1596
      %v1725 = vsel %vm1660, %v1594, %v1595
      %v1726 = vsel %vm1660, %v1593, %v1594
      %v1727 = vsel %vm1660, %v1592, %v1593
      %v1728 = vsel %vm1660, %v1591, %v1592
      %v1729 = vsel %vm1660, %v1590, %v1591
      %v1730 = vsel %vm1660, %v1589, %v1590
      %v1731 = vsel %vm1660, %v1588, %v1589
      %v1732 = vsel %vm1660, %v1587, %v1588
      %v1733 = vsel %vm1660, %v1586, %v1587
      %v1734 = vsel %vm1660, %v1585, %v1586
      %v1735 = vsel %vm1660, %v1584, %v1585
      %v1736 = vsel %vm1660, %v1583, %v1584
      %v1737 = vsel %vm1660, %v1582, %v1583
      %v1738 = vsel %vm1660, %v1581, %v1582
      %v1739 = vsel %vm1660, %v1580, %v1581
      %v1740 = vsel %vm1660, %v1659, %v1580
      %s1741 = scalar_lea.vmem %s1, 64
      %v1742 = vld [vmem:[%s1741] sm:$0xff]
      %v1743 = vld [vmem:[%s1741 + $0x8] sm:$0xff]
      %v1744 = vld [vmem:[%s1741 + $0x10] sm:$0xff]
      %v1745 = vld [vmem:[%s1741 + $0x18] sm:$0xff]
      %v1747 = vsel %vm585, %v1739, 0
      %v1750 = vsel %vm585, %v1738, 0
      %v1753 = vsel %vm585, %v1737, 0
      %v1756 = vsel %vm585, %v1736, 0
      %v1759 = vsel %vm585, %v1735, 0
      %v1762 = vsel %vm585, %v1734, 0
      %v1765 = vsel %vm585, %v1733, 0
      %v1768 = vsel %vm585, %v1732, 0
      %v1771 = vsel %vm585, %v1731, 0
      %v1774 = vsel %vm585, %v1730, 0
      %v1777 = vsel %vm585, %v1729, 0
      %v1780 = vsel %vm585, %v1728, 0
      %v1783 = vsel %vm585, %v1727, 0
      %v1786 = vsel %vm585, %v1726, 0
      %v1789 = vsel %vm585, %v1725, 0
      %v1792 = vsel %vm585, %v1724, 0
      %v1795 = vsel %vm585, %v1723, 0
      %v1798 = vsel %vm585, %v1722, 0
      %v1801 = vsel %vm585, %v1721, 0
      %v1804 = vsel %vm585, %v1720, 0
      %v1807 = vsel %vm585, %v1719, 0
      %v1810 = vsel %vm585, %v1718, 0
      %v1813 = vsel %vm585, %v1717, 0
      %v1816 = vsel %vm585, %v1716, 0
      %v1819 = vsel %vm585, %v1715, 0
      %v1822 = vsel %vm585, %v1714, 0
      %v1825 = vsel %vm585, %v1713, 0
      %v1828 = vsel %vm585, %v1712, 0
      %v1831 = vsel %vm585, %v1711, 0
      %v1834 = vsel %vm585, %v1710, 0
      %v1837 = vsel %vm585, %v1709, 0
      %v1840 = vsel %vm585, %v1708, 0
      %v1843 = vsel %vm585, %v1707, 0
      %v1846 = vsel %vm585, %v1706, 0
      %v1849 = vsel %vm585, %v1705, 0
      %v1852 = vsel %vm585, %v1704, 0
      %v1855 = vsel %vm585, %v1703, 0
      %v1858 = vsel %vm585, %v1702, 0
      %v1861 = vsel %vm585, %v1701, 0
      %v1864 = vsel %vm585, %v1700, 0
      %v1867 = vsel %vm585, %v1699, 0
      %v1870 = vsel %vm585, %v1698, 0
      %v1873 = vsel %vm585, %v1697, 0
      %v1876 = vsel %vm585, %v1696, 0
      %v1879 = vsel %vm585, %v1695, 0
      %v1882 = vsel %vm585, %v1694, 0
      %v1885 = vsel %vm585, %v1693, 0
      %v1888 = vsel %vm585, %v1692, 0
      %v1891 = vsel %vm585, %v1691, 0
      %v1894 = vsel %vm585, %v1690, 0
      %v1897 = vsel %vm585, %v1689, 0
      %v1900 = vsel %vm585, %v1688, 0
      %v1903 = vsel %vm585, %v1687, 0
      %v1906 = vsel %vm585, %v1686, 0
      %v1909 = vsel %vm585, %v1685, 0
      %v1912 = vsel %vm585, %v1684, 0
      %v1915 = vsel %vm585, %v1683, 0
      %v1918 = vsel %vm585, %v1682, 0
      %v1921 = vsel %vm585, %v1681, 0
      %v1924 = vsel %vm585, %v1680, 0
      %v1927 = vsel %vm585, %v1679, 0
      %v1930 = vsel %vm585, %v1678, 0
      %v1933 = vsel %vm585, %v1677, 0
      %v1936 = vsel %vm585, %v1676, 0
      %v1939 = vsel %vm585, %v1675, 0
      %v1942 = vsel %vm585, %v1674, 0
      %v1945 = vsel %vm585, %v1673, 0
      %v1948 = vsel %vm585, %v1672, 0
      %v1951 = vsel %vm585, %v1671, 0
      %v1954 = vsel %vm585, %v1670, 0
      %v1957 = vsel %vm585, %v1669, 0
      %v1960 = vsel %vm585, %v1668, 0
      %v1963 = vsel %vm585, %v1667, 0
      %v1966 = vsel %vm585, %v1666, 0
      %v1969 = vsel %vm585, %v1665, 0
      %v1972 = vsel %vm585, %v1664, 0
      %v1975 = vsel %vm585, %v1663, 0
      %v1978 = vsel %vm585, %v1662, 0
      %v1981 = vsel %vm585, %v1661, 0
      %v1984 = vsel %vm585, %v1740, 0
      %1986 = vmatpush.msra.mxu0 0.0
      %1987 = vmatpush.msra.mxu0 0.0
      %1988 = vmatpush.msra.mxu0 0.0
      %1989 = vmatpush.msra.mxu0 0.0
      %1990 = vmatpush.msra.mxu0 0.0
      %1991 = vmatpush.msra.mxu0 0.0
      %1992 = vmatpush.msra.mxu0 0.0
      %1993 = vmatpush.msra.mxu0 0.0
      %1994 = vmatpush.msra.mxu0 0.0
      %1995 = vmatpush.msra.mxu0 0.0
      %1996 = vmatpush.msra.mxu0 0.0
      %1997 = vmatpush.msra.mxu0 0.0
      %1998 = vmatpush.msra.mxu0 %v1745
      %1999 = vmatpush.msra.mxu0 %v1744
      %2000 = vmatpush.msra.mxu0 %v1743
      %2001 = vmatpush.msra.mxu0 %v1742
      %2002 = vmatmul.f32.gmra.mxu0 %v1747
      %v2003 = vpop.f32.mrf.mxu0
      %v2004 = vadd.f32 0.0, %v2003
      %2005 = vmatmul.f32.gmra.mxu0 %v1750
      %v2006 = vpop.f32.mrf.mxu0
      %v2007 = vadd.f32 0.0, %v2006
      %2008 = vmatmul.f32.gmra.mxu0 %v1753
      %v2009 = vpop.f32.mrf.mxu0
      %v2010 = vadd.f32 0.0, %v2009
      %2011 = vmatmul.f32.gmra.mxu0 %v1756
      %v2012 = vpop.f32.mrf.mxu0
      %v2013 = vadd.f32 0.0, %v2012
      %2014 = vmatmul.f32.gmra.mxu0 %v1759
      %v2015 = vpop.f32.mrf.mxu0
      %v2016 = vadd.f32 0.0, %v2015
      %2017 = vmatmul.f32.gmra.mxu0 %v1762
      %v2018 = vpop.f32.mrf.mxu0
      %v2019 = vadd.f32 0.0, %v2018
      %2020 = vmatmul.f32.gmra.mxu0 %v1765
      %v2021 = vpop.f32.mrf.mxu0
      %v2022 = vadd.f32 0.0, %v2021
      %2023 = vmatmul.f32.gmra.mxu0 %v1768
      %v2024 = vpop.f32.mrf.mxu0
      %v2025 = vadd.f32 0.0, %v2024
      %2026 = vmatmul.f32.gmra.mxu0 %v1771
      %v2027 = vpop.f32.mrf.mxu0
      %v2028 = vadd.f32 0.0, %v2027
      %2029 = vmatmul.f32.gmra.mxu0 %v1774
      %v2030 = vpop.f32.mrf.mxu0
      %v2031 = vadd.f32 0.0, %v2030
      %2032 = vmatmul.f32.gmra.mxu0 %v1777
      %v2033 = vpop.f32.mrf.mxu0
      %v2034 = vadd.f32 0.0, %v2033
      %2035 = vmatmul.f32.gmra.mxu0 %v1780
      %v2036 = vpop.f32.mrf.mxu0
      %v2037 = vadd.f32 0.0, %v2036
      %2038 = vmatmul.f32.gmra.mxu0 %v1783
      %v2039 = vpop.f32.mrf.mxu0
      %v2040 = vadd.f32 0.0, %v2039
      %2041 = vmatmul.f32.gmra.mxu0 %v1786
      %v2042 = vpop.f32.mrf.mxu0
      %v2043 = vadd.f32 0.0, %v2042
      %2044 = vmatmul.f32.gmra.mxu0 %v1789
      %v2045 = vpop.f32.mrf.mxu0
      %v2046 = vadd.f32 0.0, %v2045
      %2047 = vmatmul.f32.gmra.mxu0 %v1792
      %v2048 = vpop.f32.mrf.mxu0
      %v2049 = vadd.f32 0.0, %v2048
      %2050 = vmatmul.f32.gmra.mxu0 %v1795
      %v2051 = vpop.f32.mrf.mxu0
      %v2052 = vadd.f32 0.0, %v2051
      %2053 = vmatmul.f32.gmra.mxu0 %v1798
      %v2054 = vpop.f32.mrf.mxu0
      %v2055 = vadd.f32 0.0, %v2054
      %2056 = vmatmul.f32.gmra.mxu0 %v1801
      %v2057 = vpop.f32.mrf.mxu0
      %v2058 = vadd.f32 0.0, %v2057
      %2059 = vmatmul.f32.gmra.mxu0 %v1804
      %v2060 = vpop.f32.mrf.mxu0
      %v2061 = vadd.f32 0.0, %v2060
      %2062 = vmatmul.f32.gmra.mxu0 %v1807
      %v2063 = vpop.f32.mrf.mxu0
      %v2064 = vadd.f32 0.0, %v2063
      %2065 = vmatmul.f32.gmra.mxu0 %v1810
      %v2066 = vpop.f32.mrf.mxu0
      %v2067 = vadd.f32 0.0, %v2066
      %2068 = vmatmul.f32.gmra.mxu0 %v1813
      %v2069 = vpop.f32.mrf.mxu0
      %v2070 = vadd.f32 0.0, %v2069
      %2071 = vmatmul.f32.gmra.mxu0 %v1816
      %v2072 = vpop.f32.mrf.mxu0
      %v2073 = vadd.f32 0.0, %v2072
      %2074 = vmatmul.f32.gmra.mxu0 %v1819
      %v2075 = vpop.f32.mrf.mxu0
      %v2076 = vadd.f32 0.0, %v2075
      %2077 = vmatmul.f32.gmra.mxu0 %v1822
      %v2078 = vpop.f32.mrf.mxu0
      %v2079 = vadd.f32 0.0, %v2078
      %2080 = vmatmul.f32.gmra.mxu0 %v1825
      %v2081 = vpop.f32.mrf.mxu0
      %v2082 = vadd.f32 0.0, %v2081
      %2083 = vmatmul.f32.gmra.mxu0 %v1828
      %v2084 = vpop.f32.mrf.mxu0
      %v2085 = vadd.f32 0.0, %v2084
      %2086 = vmatmul.f32.gmra.mxu0 %v1831
      %v2087 = vpop.f32.mrf.mxu0
      %v2088 = vadd.f32 0.0, %v2087
      %2089 = vmatmul.f32.gmra.mxu0 %v1834
      %v2090 = vpop.f32.mrf.mxu0
      %v2091 = vadd.f32 0.0, %v2090
      %2092 = vmatmul.f32.gmra.mxu0 %v1837
      %v2093 = vpop.f32.mrf.mxu0
      %v2094 = vadd.f32 0.0, %v2093
      %2095 = vmatmul.f32.gmra.mxu0 %v1840
      %v2096 = vpop.f32.mrf.mxu0
      %v2097 = vadd.f32 0.0, %v2096
      %2098 = vmatmul.f32.gmra.mxu0 %v1843
      %v2099 = vpop.f32.mrf.mxu0
      %v2100 = vadd.f32 0.0, %v2099
      %2101 = vmatmul.f32.gmra.mxu0 %v1846
      %v2102 = vpop.f32.mrf.mxu0
      %v2103 = vadd.f32 0.0, %v2102
      %2104 = vmatmul.f32.gmra.mxu0 %v1849
      %v2105 = vpop.f32.mrf.mxu0
      %v2106 = vadd.f32 0.0, %v2105
      %2107 = vmatmul.f32.gmra.mxu0 %v1852
      %v2108 = vpop.f32.mrf.mxu0
      %v2109 = vadd.f32 0.0, %v2108
      %2110 = vmatmul.f32.gmra.mxu0 %v1855
      %v2111 = vpop.f32.mrf.mxu0
      %v2112 = vadd.f32 0.0, %v2111
      %2113 = vmatmul.f32.gmra.mxu0 %v1858
      %v2114 = vpop.f32.mrf.mxu0
      %v2115 = vadd.f32 0.0, %v2114
      %2116 = vmatmul.f32.gmra.mxu0 %v1861
      %v2117 = vpop.f32.mrf.mxu0
      %v2118 = vadd.f32 0.0, %v2117
      %2119 = vmatmul.f32.gmra.mxu0 %v1864
      %v2120 = vpop.f32.mrf.mxu0
      %v2121 = vadd.f32 0.0, %v2120
      %2122 = vmatmul.f32.gmra.mxu0 %v1867
      %v2123 = vpop.f32.mrf.mxu0
      %v2124 = vadd.f32 0.0, %v2123
      %2125 = vmatmul.f32.gmra.mxu0 %v1870
      %v2126 = vpop.f32.mrf.mxu0
      %v2127 = vadd.f32 0.0, %v2126
      %2128 = vmatmul.f32.gmra.mxu0 %v1873
      %v2129 = vpop.f32.mrf.mxu0
      %v2130 = vadd.f32 0.0, %v2129
      %2131 = vmatmul.f32.gmra.mxu0 %v1876
      %v2132 = vpop.f32.mrf.mxu0
      %v2133 = vadd.f32 0.0, %v2132
      %2134 = vmatmul.f32.gmra.mxu0 %v1879
      %v2135 = vpop.f32.mrf.mxu0
      %v2136 = vadd.f32 0.0, %v2135
      %2137 = vmatmul.f32.gmra.mxu0 %v1882
      %v2138 = vpop.f32.mrf.mxu0
      %v2139 = vadd.f32 0.0, %v2138
      %2140 = vmatmul.f32.gmra.mxu0 %v1885
      %v2141 = vpop.f32.mrf.mxu0
      %v2142 = vadd.f32 0.0, %v2141
      %2143 = vmatmul.f32.gmra.mxu0 %v1888
      %v2144 = vpop.f32.mrf.mxu0
      %v2145 = vadd.f32 0.0, %v2144
      %2146 = vmatmul.f32.gmra.mxu0 %v1891
      %v2147 = vpop.f32.mrf.mxu0
      %v2148 = vadd.f32 0.0, %v2147
      %2149 = vmatmul.f32.gmra.mxu0 %v1894
      %v2150 = vpop.f32.mrf.mxu0
      %v2151 = vadd.f32 0.0, %v2150
      %2152 = vmatmul.f32.gmra.mxu0 %v1897
      %v2153 = vpop.f32.mrf.mxu0
      %v2154 = vadd.f32 0.0, %v2153
      %2155 = vmatmul.f32.gmra.mxu0 %v1900
      %v2156 = vpop.f32.mrf.mxu0
      %v2157 = vadd.f32 0.0, %v2156
      %2158 = vmatmul.f32.gmra.mxu0 %v1903
      %v2159 = vpop.f32.mrf.mxu0
      %v2160 = vadd.f32 0.0, %v2159
      %2161 = vmatmul.f32.gmra.mxu0 %v1906
      %v2162 = vpop.f32.mrf.mxu0
      %v2163 = vadd.f32 0.0, %v2162
      %2164 = vmatmul.f32.gmra.mxu0 %v1909
      %v2165 = vpop.f32.mrf.mxu0
      %v2166 = vadd.f32 0.0, %v2165
      %2167 = vmatmul.f32.gmra.mxu0 %v1912
      %v2168 = vpop.f32.mrf.mxu0
      %v2169 = vadd.f32 0.0, %v2168
      %2170 = vmatmul.f32.gmra.mxu0 %v1915
      %v2171 = vpop.f32.mrf.mxu0
      %v2172 = vadd.f32 0.0, %v2171
      %2173 = vmatmul.f32.gmra.mxu0 %v1918
      %v2174 = vpop.f32.mrf.mxu0
      %v2175 = vadd.f32 0.0, %v2174
      %2176 = vmatmul.f32.gmra.mxu0 %v1921
      %v2177 = vpop.f32.mrf.mxu0
      %v2178 = vadd.f32 0.0, %v2177
      %2179 = vmatmul.f32.gmra.mxu0 %v1924
      %v2180 = vpop.f32.mrf.mxu0
      %v2181 = vadd.f32 0.0, %v2180
      %2182 = vmatmul.f32.gmra.mxu0 %v1927
      %v2183 = vpop.f32.mrf.mxu0
      %v2184 = vadd.f32 0.0, %v2183
      %2185 = vmatmul.f32.gmra.mxu0 %v1930
      %v2186 = vpop.f32.mrf.mxu0
      %v2187 = vadd.f32 0.0, %v2186
      %2188 = vmatmul.f32.gmra.mxu0 %v1933
      %v2189 = vpop.f32.mrf.mxu0
      %v2190 = vadd.f32 0.0, %v2189
      %2191 = vmatmul.f32.gmra.mxu0 %v1936
      %v2192 = vpop.f32.mrf.mxu0
      %v2193 = vadd.f32 0.0, %v2192
      %2194 = vmatmul.f32.gmra.mxu0 %v1939
      %v2195 = vpop.f32.mrf.mxu0
      %v2196 = vadd.f32 0.0, %v2195
      %2197 = vmatmul.f32.gmra.mxu0 %v1942
      %v2198 = vpop.f32.mrf.mxu0
      %v2199 = vadd.f32 0.0, %v2198
      %2200 = vmatmul.f32.gmra.mxu0 %v1945
      %v2201 = vpop.f32.mrf.mxu0
      %v2202 = vadd.f32 0.0, %v2201
      %2203 = vmatmul.f32.gmra.mxu0 %v1948
      %v2204 = vpop.f32.mrf.mxu0
      %v2205 = vadd.f32 0.0, %v2204
      %2206 = vmatmul.f32.gmra.mxu0 %v1951
      %v2207 = vpop.f32.mrf.mxu0
      %v2208 = vadd.f32 0.0, %v2207
      %2209 = vmatmul.f32.gmra.mxu0 %v1954
      %v2210 = vpop.f32.mrf.mxu0
      %v2211 = vadd.f32 0.0, %v2210
      %2212 = vmatmul.f32.gmra.mxu0 %v1957
      %v2213 = vpop.f32.mrf.mxu0
      %v2214 = vadd.f32 0.0, %v2213
      %2215 = vmatmul.f32.gmra.mxu0 %v1960
      %v2216 = vpop.f32.mrf.mxu0
      %v2217 = vadd.f32 0.0, %v2216
      %2218 = vmatmul.f32.gmra.mxu0 %v1963
      %v2219 = vpop.f32.mrf.mxu0
      %v2220 = vadd.f32 0.0, %v2219
      %2221 = vmatmul.f32.gmra.mxu0 %v1966
      %v2222 = vpop.f32.mrf.mxu0
      %v2223 = vadd.f32 0.0, %v2222
      %2224 = vmatmul.f32.gmra.mxu0 %v1969
      %v2225 = vpop.f32.mrf.mxu0
      %v2226 = vadd.f32 0.0, %v2225
      %2227 = vmatmul.f32.gmra.mxu0 %v1972
      %v2228 = vpop.f32.mrf.mxu0
      %v2229 = vadd.f32 0.0, %v2228
      %2230 = vmatmul.f32.gmra.mxu0 %v1975
      %v2231 = vpop.f32.mrf.mxu0
      %v2232 = vadd.f32 0.0, %v2231
      %2233 = vmatmul.f32.gmra.mxu0 %v1978
      %v2234 = vpop.f32.mrf.mxu0
      %v2235 = vadd.f32 0.0, %v2234
      %2236 = vmatmul.f32.gmra.mxu0 %v1981
      %v2237 = vpop.f32.mrf.mxu0
      %v2238 = vadd.f32 0.0, %v2237
      %2239 = vmatmul.f32.gmra.mxu0 %v1984
      %v2240 = vpop.f32.mrf.mxu0
      %v2241 = vadd.f32 0.0, %v2240
      %2242 = vdwg.mxu0
      %v2243 = vadd.f32 %v1341, %v2004
      %v2244 = vadd.f32 %v1344, %v2007
      %v2245 = vadd.f32 %v1347, %v2010
      %v2246 = vadd.f32 %v1350, %v2013
      %v2247 = vadd.f32 %v1353, %v2016
      %v2248 = vadd.f32 %v1356, %v2019
      %v2249 = vadd.f32 %v1359, %v2022
      %v2250 = vadd.f32 %v1362, %v2025
      %v2251 = vadd.f32 %v1365, %v2028
      %v2252 = vadd.f32 %v1368, %v2031
      %v2253 = vadd.f32 %v1371, %v2034
      %v2254 = vadd.f32 %v1374, %v2037
      %v2255 = vadd.f32 %v1377, %v2040
      %v2256 = vadd.f32 %v1380, %v2043
      %v2257 = vadd.f32 %v1383, %v2046
      %v2258 = vadd.f32 %v1386, %v2049
      %v2259 = vadd.f32 %v1389, %v2052
      %v2260 = vadd.f32 %v1392, %v2055
      %v2261 = vadd.f32 %v1395, %v2058
      %v2262 = vadd.f32 %v1398, %v2061
      %v2263 = vadd.f32 %v1401, %v2064
      %v2264 = vadd.f32 %v1404, %v2067
      %v2265 = vadd.f32 %v1407, %v2070
      %v2266 = vadd.f32 %v1410, %v2073
      %v2267 = vadd.f32 %v1413, %v2076
      %v2268 = vadd.f32 %v1416, %v2079
      %v2269 = vadd.f32 %v1419, %v2082
      %v2270 = vadd.f32 %v1422, %v2085
      %v2271 = vadd.f32 %v1425, %v2088
      %v2272 = vadd.f32 %v1428, %v2091
      %v2273 = vadd.f32 %v1431, %v2094
      %v2274 = vadd.f32 %v1434, %v2097
      %v2275 = vadd.f32 %v1437, %v2100
      %v2276 = vadd.f32 %v1440, %v2103
      %v2277 = vadd.f32 %v1443, %v2106
      %v2278 = vadd.f32 %v1446, %v2109
      %v2279 = vadd.f32 %v1449, %v2112
      %v2280 = vadd.f32 %v1452, %v2115
      %v2281 = vadd.f32 %v1455, %v2118
      %v2282 = vadd.f32 %v1458, %v2121
      %v2283 = vadd.f32 %v1461, %v2124
      %v2284 = vadd.f32 %v1464, %v2127
      %v2285 = vadd.f32 %v1467, %v2130
      %v2286 = vadd.f32 %v1470, %v2133
      %v2287 = vadd.f32 %v1473, %v2136
      %v2288 = vadd.f32 %v1476, %v2139
      %v2289 = vadd.f32 %v1479, %v2142
      %v2290 = vadd.f32 %v1482, %v2145
      %v2291 = vadd.f32 %v1485, %v2148
      %v2292 = vadd.f32 %v1488, %v2151
      %v2293 = vadd.f32 %v1491, %v2154
      %v2294 = vadd.f32 %v1494, %v2157
      %v2295 = vadd.f32 %v1497, %v2160
      %v2296 = vadd.f32 %v1500, %v2163
      %v2297 = vadd.f32 %v1503, %v2166
      %v2298 = vadd.f32 %v1506, %v2169
      %v2299 = vadd.f32 %v1509, %v2172
      %v2300 = vadd.f32 %v1512, %v2175
      %v2301 = vadd.f32 %v1515, %v2178
      %v2302 = vadd.f32 %v1518, %v2181
      %v2303 = vadd.f32 %v1521, %v2184
      %v2304 = vadd.f32 %v1524, %v2187
      %v2305 = vadd.f32 %v1527, %v2190
      %v2306 = vadd.f32 %v1530, %v2193
      %v2307 = vadd.f32 %v1533, %v2196
      %v2308 = vadd.f32 %v1536, %v2199
      %v2309 = vadd.f32 %v1539, %v2202
      %v2310 = vadd.f32 %v1542, %v2205
      %v2311 = vadd.f32 %v1545, %v2208
      %v2312 = vadd.f32 %v1548, %v2211
      %v2313 = vadd.f32 %v1551, %v2214
      %v2314 = vadd.f32 %v1554, %v2217
      %v2315 = vadd.f32 %v1557, %v2220
      %v2316 = vadd.f32 %v1560, %v2223
      %v2317 = vadd.f32 %v1563, %v2226
      %v2318 = vadd.f32 %v1566, %v2229
      %v2319 = vadd.f32 %v1569, %v2232
      %v2320 = vadd.f32 %v1572, %v2235
      %v2321 = vadd.f32 %v1575, %v2238
      %v2322 = vadd.f32 %v1578, %v2241
      %v2323 = vld [vmem:[%s2] sm:$0x1]
      %v2325 = vperm.slane %v2323, 0
      %v2327 = vmul.f32 %v2243, %v2325
      %v2328 = vmul.f32 %v2244, %v2325
      %v2329 = vmul.f32 %v2245, %v2325
      %v2330 = vmul.f32 %v2246, %v2325
      %v2331 = vmul.f32 %v2247, %v2325
      %v2332 = vmul.f32 %v2248, %v2325
      %v2333 = vmul.f32 %v2249, %v2325
      %v2334 = vmul.f32 %v2250, %v2325
      %v2335 = vmul.f32 %v2251, %v2325
      %v2336 = vmul.f32 %v2252, %v2325
      %v2337 = vmul.f32 %v2253, %v2325
      %v2338 = vmul.f32 %v2254, %v2325
      %v2339 = vmul.f32 %v2255, %v2325
      %v2340 = vmul.f32 %v2256, %v2325
      %v2341 = vmul.f32 %v2257, %v2325
      %v2342 = vmul.f32 %v2258, %v2325
      %v2343 = vmul.f32 %v2259, %v2325
      %v2344 = vmul.f32 %v2260, %v2325
      %v2345 = vmul.f32 %v2261, %v2325
      %v2346 = vmul.f32 %v2262, %v2325
      %v2347 = vmul.f32 %v2263, %v2325
      %v2348 = vmul.f32 %v2264, %v2325
      %v2349 = vmul.f32 %v2265, %v2325
      %v2350 = vmul.f32 %v2266, %v2325
      %v2351 = vmul.f32 %v2267, %v2325
      %v2352 = vmul.f32 %v2268, %v2325
      %v2353 = vmul.f32 %v2269, %v2325
      %v2354 = vmul.f32 %v2270, %v2325
      %v2355 = vmul.f32 %v2271, %v2325
      %v2356 = vmul.f32 %v2272, %v2325
      %v2357 = vmul.f32 %v2273, %v2325
      %v2358 = vmul.f32 %v2274, %v2325
      %v2359 = vmul.f32 %v2275, %v2325
      %v2360 = vmul.f32 %v2276, %v2325
      %v2361 = vmul.f32 %v2277, %v2325
      %v2362 = vmul.f32 %v2278, %v2325
      %v2363 = vmul.f32 %v2279, %v2325
      %v2364 = vmul.f32 %v2280, %v2325
      %v2365 = vmul.f32 %v2281, %v2325
      %v2366 = vmul.f32 %v2282, %v2325
      %v2367 = vmul.f32 %v2283, %v2325
      %v2368 = vmul.f32 %v2284, %v2325
      %v2369 = vmul.f32 %v2285, %v2325
      %v2370 = vmul.f32 %v2286, %v2325
      %v2371 = vmul.f32 %v2287, %v2325
      %v2372 = vmul.f32 %v2288, %v2325
      %v2373 = vmul.f32 %v2289, %v2325
      %v2374 = vmul.f32 %v2290, %v2325
      %v2375 = vmul.f32 %v2291, %v2325
      %v2376 = vmul.f32 %v2292, %v2325
      %v2377 = vmul.f32 %v2293, %v2325
      %v2378 = vmul.f32 %v2294, %v2325
      %v2379 = vmul.f32 %v2295, %v2325
      %v2380 = vmul.f32 %v2296, %v2325
      %v2381 = vmul.f32 %v2297, %v2325
      %v2382 = vmul.f32 %v2298, %v2325
      %v2383 = vmul.f32 %v2299, %v2325
      %v2384 = vmul.f32 %v2300, %v2325
      %v2385 = vmul.f32 %v2301, %v2325
      %v2386 = vmul.f32 %v2302, %v2325
      %v2387 = vmul.f32 %v2303, %v2325
      %v2388 = vmul.f32 %v2304, %v2325
      %v2389 = vmul.f32 %v2305, %v2325
      %v2390 = vmul.f32 %v2306, %v2325
      %v2391 = vmul.f32 %v2307, %v2325
      %v2392 = vmul.f32 %v2308, %v2325
      %v2393 = vmul.f32 %v2309, %v2325
      %v2394 = vmul.f32 %v2310, %v2325
      %v2395 = vmul.f32 %v2311, %v2325
      %v2396 = vmul.f32 %v2312, %v2325
      %v2397 = vmul.f32 %v2313, %v2325
      %v2398 = vmul.f32 %v2314, %v2325
      %v2399 = vmul.f32 %v2315, %v2325
      %v2400 = vmul.f32 %v2316, %v2325
      %v2401 = vmul.f32 %v2317, %v2325
      %v2402 = vmul.f32 %v2318, %v2325
      %v2403 = vmul.f32 %v2319, %v2325
      %v2404 = vmul.f32 %v2320, %v2325
      %v2405 = vmul.f32 %v2321, %v2325
      %v2406 = vmul.f32 %v2322, %v2325
      %v2407 = vld [vmem:[%s3] sm:$0x1]
      %v2409 = vperm.slane %v2407, 0
      %v2411 = vadd.f32 %v2327, %v2409
      %v2412 = vadd.f32 %v2328, %v2409
      %v2413 = vadd.f32 %v2329, %v2409
      %v2414 = vadd.f32 %v2330, %v2409
      %v2415 = vadd.f32 %v2331, %v2409
      %v2416 = vadd.f32 %v2332, %v2409
      %v2417 = vadd.f32 %v2333, %v2409
      %v2418 = vadd.f32 %v2334, %v2409
      %v2419 = vadd.f32 %v2335, %v2409
      %v2420 = vadd.f32 %v2336, %v2409
      %v2421 = vadd.f32 %v2337, %v2409
      %v2422 = vadd.f32 %v2338, %v2409
      %v2423 = vadd.f32 %v2339, %v2409
      %v2424 = vadd.f32 %v2340, %v2409
      %v2425 = vadd.f32 %v2341, %v2409
      %v2426 = vadd.f32 %v2342, %v2409
      %v2427 = vadd.f32 %v2343, %v2409
      %v2428 = vadd.f32 %v2344, %v2409
      %v2429 = vadd.f32 %v2345, %v2409
      %v2430 = vadd.f32 %v2346, %v2409
      %v2431 = vadd.f32 %v2347, %v2409
      %v2432 = vadd.f32 %v2348, %v2409
      %v2433 = vadd.f32 %v2349, %v2409
      %v2434 = vadd.f32 %v2350, %v2409
      %v2435 = vadd.f32 %v2351, %v2409
      %v2436 = vadd.f32 %v2352, %v2409
      %v2437 = vadd.f32 %v2353, %v2409
      %v2438 = vadd.f32 %v2354, %v2409
      %v2439 = vadd.f32 %v2355, %v2409
      %v2440 = vadd.f32 %v2356, %v2409
      %v2441 = vadd.f32 %v2357, %v2409
      %v2442 = vadd.f32 %v2358, %v2409
      %v2443 = vadd.f32 %v2359, %v2409
      %v2444 = vadd.f32 %v2360, %v2409
      %v2445 = vadd.f32 %v2361, %v2409
      %v2446 = vadd.f32 %v2362, %v2409
      %v2447 = vadd.f32 %v2363, %v2409
      %v2448 = vadd.f32 %v2364, %v2409
      %v2449 = vadd.f32 %v2365, %v2409
      %v2450 = vadd.f32 %v2366, %v2409
      %v2451 = vadd.f32 %v2367, %v2409
      %v2452 = vadd.f32 %v2368, %v2409
      %v2453 = vadd.f32 %v2369, %v2409
      %v2454 = vadd.f32 %v2370, %v2409
      %v2455 = vadd.f32 %v2371, %v2409
      %v2456 = vadd.f32 %v2372, %v2409
      %v2457 = vadd.f32 %v2373, %v2409
      %v2458 = vadd.f32 %v2374, %v2409
      %v2459 = vadd.f32 %v2375, %v2409
      %v2460 = vadd.f32 %v2376, %v2409
      %v2461 = vadd.f32 %v2377, %v2409
      %v2462 = vadd.f32 %v2378, %v2409
      %v2463 = vadd.f32 %v2379, %v2409
      %v2464 = vadd.f32 %v2380, %v2409
      %v2465 = vadd.f32 %v2381, %v2409
      %v2466 = vadd.f32 %v2382, %v2409
      %v2467 = vadd.f32 %v2383, %v2409
      %v2468 = vadd.f32 %v2384, %v2409
      %v2469 = vadd.f32 %v2385, %v2409
      %v2470 = vadd.f32 %v2386, %v2409
      %v2471 = vadd.f32 %v2387, %v2409
      %v2472 = vadd.f32 %v2388, %v2409
      %v2473 = vadd.f32 %v2389, %v2409
      %v2474 = vadd.f32 %v2390, %v2409
      %v2475 = vadd.f32 %v2391, %v2409
      %v2476 = vadd.f32 %v2392, %v2409
      %v2477 = vadd.f32 %v2393, %v2409
      %v2478 = vadd.f32 %v2394, %v2409
      %v2479 = vadd.f32 %v2395, %v2409
      %v2480 = vadd.f32 %v2396, %v2409
      %v2481 = vadd.f32 %v2397, %v2409
      %v2482 = vadd.f32 %v2398, %v2409
      %v2483 = vadd.f32 %v2399, %v2409
      %v2484 = vadd.f32 %v2400, %v2409
      %v2485 = vadd.f32 %v2401, %v2409
      %v2486 = vadd.f32 %v2402, %v2409
      %v2487 = vadd.f32 %v2403, %v2409
      %v2488 = vadd.f32 %v2404, %v2409
      %v2489 = vadd.f32 %v2405, %v2409
      %v2490 = vadd.f32 %v2406, %v2409
      %v2491 = vmax.f32 %v2411, 0.0
      %v2492 = vmax.f32 %v2412, 0.0
      %v2493 = vmax.f32 %v2413, 0.0
      %v2494 = vmax.f32 %v2414, 0.0
      %v2495 = vmax.f32 %v2415, 0.0
      %v2496 = vmax.f32 %v2416, 0.0
      %v2497 = vmax.f32 %v2417, 0.0
      %v2498 = vmax.f32 %v2418, 0.0
      %v2499 = vmax.f32 %v2419, 0.0
      %v2500 = vmax.f32 %v2420, 0.0
      %v2501 = vmax.f32 %v2421, 0.0
      %v2502 = vmax.f32 %v2422, 0.0
      %v2503 = vmax.f32 %v2423, 0.0
      %v2504 = vmax.f32 %v2424, 0.0
      %v2505 = vmax.f32 %v2425, 0.0
      %v2506 = vmax.f32 %v2426, 0.0
      %v2507 = vmax.f32 %v2427, 0.0
      %v2508 = vmax.f32 %v2428, 0.0
      %v2509 = vmax.f32 %v2429, 0.0
      %v2510 = vmax.f32 %v2430, 0.0
      %v2511 = vmax.f32 %v2431, 0.0
      %v2512 = vmax.f32 %v2432, 0.0
      %v2513 = vmax.f32 %v2433, 0.0
      %v2514 = vmax.f32 %v2434, 0.0
      %v2515 = vmax.f32 %v2435, 0.0
      %v2516 = vmax.f32 %v2436, 0.0
      %v2517 = vmax.f32 %v2437, 0.0
      %v2518 = vmax.f32 %v2438, 0.0
      %v2519 = vmax.f32 %v2439, 0.0
      %v2520 = vmax.f32 %v2440, 0.0
      %v2521 = vmax.f32 %v2441, 0.0
      %v2522 = vmax.f32 %v2442, 0.0
      %v2523 = vmax.f32 %v2443, 0.0
      %v2524 = vmax.f32 %v2444, 0.0
      %v2525 = vmax.f32 %v2445, 0.0
      %v2526 = vmax.f32 %v2446, 0.0
      %v2527 = vmax.f32 %v2447, 0.0
      %v2528 = vmax.f32 %v2448, 0.0
      %v2529 = vmax.f32 %v2449, 0.0
      %v2530 = vmax.f32 %v2450, 0.0
      %v2531 = vmax.f32 %v2451, 0.0
      %v2532 = vmax.f32 %v2452, 0.0
      %v2533 = vmax.f32 %v2453, 0.0
      %v2534 = vmax.f32 %v2454, 0.0
      %v2535 = vmax.f32 %v2455, 0.0
      %v2536 = vmax.f32 %v2456, 0.0
      %v2537 = vmax.f32 %v2457, 0.0
      %v2538 = vmax.f32 %v2458, 0.0
      %v2539 = vmax.f32 %v2459, 0.0
      %v2540 = vmax.f32 %v2460, 0.0
      %v2541 = vmax.f32 %v2461, 0.0
      %v2542 = vmax.f32 %v2462, 0.0
      %v2543 = vmax.f32 %v2463, 0.0
      %v2544 = vmax.f32 %v2464, 0.0
      %v2545 = vmax.f32 %v2465, 0.0
      %v2546 = vmax.f32 %v2466, 0.0
      %v2547 = vmax.f32 %v2467, 0.0
      %v2548 = vmax.f32 %v2468, 0.0
      %v2549 = vmax.f32 %v2469, 0.0
      %v2550 = vmax.f32 %v2470, 0.0
      %v2551 = vmax.f32 %v2471, 0.0
      %v2552 = vmax.f32 %v2472, 0.0
      %v2553 = vmax.f32 %v2473, 0.0
      %v2554 = vmax.f32 %v2474, 0.0
      %v2555 = vmax.f32 %v2475, 0.0
      %v2556 = vmax.f32 %v2476, 0.0
      %v2557 = vmax.f32 %v2477, 0.0
      %v2558 = vmax.f32 %v2478, 0.0
      %v2559 = vmax.f32 %v2479, 0.0
      %v2560 = vmax.f32 %v2480, 0.0
      %v2561 = vmax.f32 %v2481, 0.0
      %v2562 = vmax.f32 %v2482, 0.0
      %v2563 = vmax.f32 %v2483, 0.0
      %v2564 = vmax.f32 %v2484, 0.0
      %v2565 = vmax.f32 %v2485, 0.0
      %v2566 = vmax.f32 %v2486, 0.0
      %v2567 = vmax.f32 %v2487, 0.0
      %v2568 = vmax.f32 %v2488, 0.0
      %v2569 = vmax.f32 %v2489, 0.0
      %v2570 = vmax.f32 %v2490, 0.0
      %vm2571 = vcmask 523264
      %2572 = vst.msk [vmem:[#allocation2] sm:$0xff] %vm2571, %v2491
      %2573 = vst.msk [vmem:[#allocation2 + $0x8] sm:$0xff] %vm2571, %v2492
      %2574 = vst.msk [vmem:[#allocation2 + $0x10] sm:$0xff] %vm2571, %v2493
      %2575 = vst.msk [vmem:[#allocation2 + $0x18] sm:$0xff] %vm2571, %v2494
      %2576 = vst.msk [vmem:[#allocation2 + $0x20] sm:$0xff] %vm2571, %v2495
      %2577 = vst.msk [vmem:[#allocation2 + $0x28] sm:$0xff] %vm2571, %v2496
      %2578 = vst.msk [vmem:[#allocation2 + $0x30] sm:$0xff] %vm2571, %v2497
      %2579 = vst.msk [vmem:[#allocation2 + $0x38] sm:$0xff] %vm2571, %v2498
      %2580 = vst.msk [vmem:[#allocation2 + $0x40] sm:$0xff] %vm2571, %v2499
      %2581 = vst.msk [vmem:[#allocation2 + $0x48] sm:$0xff] %vm2571, %v2500
      %2582 = vst.msk [vmem:[#allocation2 + $0x50] sm:$0xff] %vm2571, %v2501
      %2583 = vst.msk [vmem:[#allocation2 + $0x58] sm:$0xff] %vm2571, %v2502
      %2584 = vst.msk [vmem:[#allocation2 + $0x60] sm:$0xff] %vm2571, %v2503
      %2585 = vst.msk [vmem:[#allocation2 + $0x68] sm:$0xff] %vm2571, %v2504
      %2586 = vst.msk [vmem:[#allocation2 + $0x70] sm:$0xff] %vm2571, %v2505
      %2587 = vst.msk [vmem:[#allocation2 + $0x78] sm:$0xff] %vm2571, %v2506
      %2588 = vst.msk [vmem:[#allocation2 + $0x80] sm:$0xff] %vm2571, %v2507
      %2589 = vst.msk [vmem:[#allocation2 + $0x88] sm:$0xff] %vm2571, %v2508
      %2590 = vst.msk [vmem:[#allocation2 + $0x90] sm:$0xff] %vm2571, %v2509
      %2591 = vst.msk [vmem:[#allocation2 + $0x98] sm:$0xff] %vm2571, %v2510
      %2592 = vst.msk [vmem:[#allocation2 + $0xa0] sm:$0xff] %vm2571, %v2511
      %2593 = vst.msk [vmem:[#allocation2 + $0xa8] sm:$0xff] %vm2571, %v2512
      %2594 = vst.msk [vmem:[#allocation2 + $0xb0] sm:$0xff] %vm2571, %v2513
      %2595 = vst.msk [vmem:[#allocation2 + $0xb8] sm:$0xff] %vm2571, %v2514
      %2596 = vst.msk [vmem:[#allocation2 + $0xc0] sm:$0xff] %vm2571, %v2515
      %2597 = vst.msk [vmem:[#allocation2 + $0xc8] sm:$0xff] %vm2571, %v2516
      %2598 = vst.msk [vmem:[#allocation2 + $0xd0] sm:$0xff] %vm2571, %v2517
      %2599 = vst.msk [vmem:[#allocation2 + $0xd8] sm:$0xff] %vm2571, %v2518
      %2600 = vst.msk [vmem:[#allocation2 + $0xe0] sm:$0xff] %vm2571, %v2519
      %2601 = vst.msk [vmem:[#allocation2 + $0xe8] sm:$0xff] %vm2571, %v2520
      %2602 = vst.msk [vmem:[#allocation2 + $0xf0] sm:$0xff] %vm2571, %v2521
      %2603 = vst.msk [vmem:[#allocation2 + $0xf8] sm:$0xff] %vm2571, %v2522
      %2604 = vst.msk [vmem:[#allocation2 + $0x100] sm:$0xff] %vm2571, %v2523
      %2605 = vst.msk [vmem:[#allocation2 + $0x108] sm:$0xff] %vm2571, %v2524
      %2606 = vst.msk [vmem:[#allocation2 + $0x110] sm:$0xff] %vm2571, %v2525
      %2607 = vst.msk [vmem:[#allocation2 + $0x118] sm:$0xff] %vm2571, %v2526
      %2608 = vst.msk [vmem:[#allocation2 + $0x120] sm:$0xff] %vm2571, %v2527
      %2609 = vst.msk [vmem:[#allocation2 + $0x128] sm:$0xff] %vm2571, %v2528
      %2610 = vst.msk [vmem:[#allocation2 + $0x130] sm:$0xff] %vm2571, %v2529
      %2611 = vst.msk [vmem:[#allocation2 + $0x138] sm:$0xff] %vm2571, %v2530
      %2612 = vst.msk [vmem:[#allocation2 + $0x140] sm:$0xff] %vm2571, %v2531
      %2613 = vst.msk [vmem:[#allocation2 + $0x148] sm:$0xff] %vm2571, %v2532
      %2614 = vst.msk [vmem:[#allocation2 + $0x150] sm:$0xff] %vm2571, %v2533
      %2615 = vst.msk [vmem:[#allocation2 + $0x158] sm:$0xff] %vm2571, %v2534
      %2616 = vst.msk [vmem:[#allocation2 + $0x160] sm:$0xff] %vm2571, %v2535
      %2617 = vst.msk [vmem:[#allocation2 + $0x168] sm:$0xff] %vm2571, %v2536
      %2618 = vst.msk [vmem:[#allocation2 + $0x170] sm:$0xff] %vm2571, %v2537
      %2619 = vst.msk [vmem:[#allocation2 + $0x178] sm:$0xff] %vm2571, %v2538
      %2620 = vst.msk [vmem:[#allocation2 + $0x180] sm:$0xff] %vm2571, %v2539
      %2621 = vst.msk [vmem:[#allocation2 + $0x188] sm:$0xff] %vm2571, %v2540
      %2622 = vst.msk [vmem:[#allocation2 + $0x190] sm:$0xff] %vm2571, %v2541
      %2623 = vst.msk [vmem:[#allocation2 + $0x198] sm:$0xff] %vm2571, %v2542
      %2624 = vst.msk [vmem:[#allocation2 + $0x1a0] sm:$0xff] %vm2571, %v2543
      %2625 = vst.msk [vmem:[#allocation2 + $0x1a8] sm:$0xff] %vm2571, %v2544
      %2626 = vst.msk [vmem:[#allocation2 + $0x1b0] sm:$0xff] %vm2571, %v2545
      %2627 = vst.msk [vmem:[#allocation2 + $0x1b8] sm:$0xff] %vm2571, %v2546
      %2628 = vst.msk [vmem:[#allocation2 + $0x1c0] sm:$0xff] %vm2571, %v2547
      %2629 = vst.msk [vmem:[#allocation2 + $0x1c8] sm:$0xff] %vm2571, %v2548
      %2630 = vst.msk [vmem:[#allocation2 + $0x1d0] sm:$0xff] %vm2571, %v2549
      %2631 = vst.msk [vmem:[#allocation2 + $0x1d8] sm:$0xff] %vm2571, %v2550
      %2632 = vst.msk [vmem:[#allocation2 + $0x1e0] sm:$0xff] %vm2571, %v2551
      %2633 = vst.msk [vmem:[#allocation2 + $0x1e8] sm:$0xff] %vm2571, %v2552
      %2634 = vst.msk [vmem:[#allocation2 + $0x1f0] sm:$0xff] %vm2571, %v2553
      %2635 = vst.msk [vmem:[#allocation2 + $0x1f8] sm:$0xff] %vm2571, %v2554
      %2636 = vst.msk [vmem:[#allocation2 + $0x200] sm:$0xff] %vm2571, %v2555
      %2637 = vst.msk [vmem:[#allocation2 + $0x208] sm:$0xff] %vm2571, %v2556
      %2638 = vst.msk [vmem:[#allocation2 + $0x210] sm:$0xff] %vm2571, %v2557
      %2639 = vst.msk [vmem:[#allocation2 + $0x218] sm:$0xff] %vm2571, %v2558
      %2640 = vst.msk [vmem:[#allocation2 + $0x220] sm:$0xff] %vm2571, %v2559
      %2641 = vst.msk [vmem:[#allocation2 + $0x228] sm:$0xff] %vm2571, %v2560
      %2642 = vst.msk [vmem:[#allocation2 + $0x230] sm:$0xff] %vm2571, %v2561
      %2643 = vst.msk [vmem:[#allocation2 + $0x238] sm:$0xff] %vm2571, %v2562
      %2644 = vst.msk [vmem:[#allocation2 + $0x240] sm:$0xff] %vm2571, %v2563
      %2645 = vst.msk [vmem:[#allocation2 + $0x248] sm:$0xff] %vm2571, %v2564
      %2646 = vst.msk [vmem:[#allocation2 + $0x250] sm:$0xff] %vm2571, %v2565
      %2647 = vst.msk [vmem:[#allocation2 + $0x258] sm:$0xff] %vm2571, %v2566
      %2648 = vst.msk [vmem:[#allocation2 + $0x260] sm:$0xff] %vm2571, %v2567
      %2649 = vst.msk [vmem:[#allocation2 + $0x268] sm:$0xff] %vm2571, %v2568
      %2650 = vst.msk [vmem:[#allocation2 + $0x270] sm:$0xff] %vm2571, %v2569
      %2651 = vst.msk [vmem:[#allocation2 + $0x278] sm:$0xff] %vm2571, %v2570
      %v2652 = vld [vmem:[#allocation2] ss:$2 sm:$0xff]
      %s2653 = scalar_lea.vmem [#allocation2], 16
      %v2654 = vld [vmem:[%s2653] ss:$2 sm:$0xff]
      %s2655 = scalar_lea.vmem [#allocation2], 32
      %v2656 = vld [vmem:[%s2655] ss:$2 sm:$0xff]
      %s2657 = scalar_lea.vmem [#allocation2], 48
      %v2658 = vld [vmem:[%s2657] ss:$2 sm:$0xff]
      %s2659 = scalar_lea.vmem [#allocation2], 64
      %v2660 = vld [vmem:[%s2659] ss:$2 sm:$0xff]
      %s2661 = scalar_lea.vmem [#allocation2], 80
      %v2662 = vld [vmem:[%s2661] ss:$2 sm:$0xff]
      %s2663 = scalar_lea.vmem [#allocation2], 96
      %v2664 = vld [vmem:[%s2663] ss:$2 sm:$0xff]
      %s2665 = scalar_lea.vmem [#allocation2], 112
      %v2666 = vld [vmem:[%s2665] ss:$2 sm:$0xff]
      %s2667 = scalar_lea.vmem [#allocation2], 128
      %v2668 = vld [vmem:[%s2667] ss:$2 sm:$0xff]
      %s2669 = scalar_lea.vmem [#allocation2], 144
      %v2670 = vld [vmem:[%s2669] ss:$2 sm:$0xff]
      %s2671 = scalar_lea.vmem [#allocation2], 160
      %v2672 = vld [vmem:[%s2671] ss:$2 sm:$0xff]
      %s2673 = scalar_lea.vmem [#allocation2], 176
      %v2674 = vld [vmem:[%s2673] ss:$2 sm:$0xff]
      %s2675 = scalar_lea.vmem [#allocation2], 192
      %v2676 = vld [vmem:[%s2675] ss:$2 sm:$0xff]
      %s2677 = scalar_lea.vmem [#allocation2], 208
      %v2678 = vld [vmem:[%s2677] ss:$2 sm:$0xff]
      %s2679 = scalar_lea.vmem [#allocation2], 224
      %v2680 = vld [vmem:[%s2679] ss:$2 sm:$0xff]
      %s2681 = scalar_lea.vmem [#allocation2], 240
      %v2682 = vld [vmem:[%s2681] ss:$2 sm:$0xff]
      %s2683 = scalar_lea.vmem [#allocation2], 256
      %v2684 = vld [vmem:[%s2683] ss:$2 sm:$0xff]
      %s2685 = scalar_lea.vmem [#allocation2], 272
      %v2686 = vld [vmem:[%s2685] ss:$2 sm:$0xff]
      %s2687 = scalar_lea.vmem [#allocation2], 288
      %v2688 = vld [vmem:[%s2687] ss:$2 sm:$0xff]
      %s2689 = scalar_lea.vmem [#allocation2], 304
      %v2690 = vld [vmem:[%s2689] ss:$2 sm:$0xff]
      %s2691 = scalar_lea.vmem [#allocation2], 320
      %v2692 = vld [vmem:[%s2691] ss:$2 sm:$0xff]
      %s2693 = scalar_lea.vmem [#allocation2], 336
      %v2694 = vld [vmem:[%s2693] ss:$2 sm:$0xff]
      %s2695 = scalar_lea.vmem [#allocation2], 352
      %v2696 = vld [vmem:[%s2695] ss:$2 sm:$0xff]
      %s2697 = scalar_lea.vmem [#allocation2], 368
      %v2698 = vld [vmem:[%s2697] ss:$2 sm:$0xff]
      %s2699 = scalar_lea.vmem [#allocation2], 384
      %v2700 = vld [vmem:[%s2699] ss:$2 sm:$0xff]
      %s2701 = scalar_lea.vmem [#allocation2], 400
      %v2702 = vld [vmem:[%s2701] ss:$2 sm:$0xff]
      %s2703 = scalar_lea.vmem [#allocation2], 416
      %v2704 = vld [vmem:[%s2703] ss:$2 sm:$0xff]
      %s2705 = scalar_lea.vmem [#allocation2], 432
      %v2706 = vld [vmem:[%s2705] ss:$2 sm:$0xff]
      %s2707 = scalar_lea.vmem [#allocation2], 448
      %v2708 = vld [vmem:[%s2707] ss:$2 sm:$0xff]
      %s2709 = scalar_lea.vmem [#allocation2], 464
      %v2710 = vld [vmem:[%s2709] ss:$2 sm:$0xff]
      %s2711 = scalar_lea.vmem [#allocation2], 480
      %v2712 = vld [vmem:[%s2711] ss:$2 sm:$0xff]
      %s2713 = scalar_lea.vmem [#allocation2], 496
      %v2714 = vld [vmem:[%s2713] ss:$2 sm:$0xff]
      %s2715 = scalar_lea.vmem [#allocation2], 512
      %v2716 = vld [vmem:[%s2715] ss:$2 sm:$0xff]
      %s2717 = scalar_lea.vmem [#allocation2], 528
      %v2718 = vld [vmem:[%s2717] ss:$2 sm:$0xff]
      %s2719 = scalar_lea.vmem [#allocation2], 544
      %v2720 = vld [vmem:[%s2719] ss:$2 sm:$0xff]
      %s2721 = scalar_lea.vmem [#allocation2], 560
      %v2722 = vld [vmem:[%s2721] ss:$2 sm:$0xff]
      %s2723 = scalar_lea.vmem [#allocation2], 576
      %v2724 = vld [vmem:[%s2723] ss:$2 sm:$0xff]
      %s2725 = scalar_lea.vmem [#allocation2], 592
      %v2726 = vld [vmem:[%s2725] ss:$2 sm:$0xff]
      %s2727 = scalar_lea.vmem [#allocation2], 608
      %v2728 = vld [vmem:[%s2727] ss:$2 sm:$0xff]
      %s2729 = scalar_lea.vmem [#allocation2], 624
      %v2730 = vld [vmem:[%s2729] ss:$2 sm:$0xff]
      %s2731 = scalar_lea.vmem [#allocation2], 1
      %v2732 = vld [vmem:[%s2731] ss:$2 sm:$0xff]
      %s2733 = scalar_lea.vmem [#allocation2], 17
      %v2734 = vld [vmem:[%s2733] ss:$2 sm:$0xff]
      %s2735 = scalar_lea.vmem [#allocation2], 33
      %v2736 = vld [vmem:[%s2735] ss:$2 sm:$0xff]
      %s2737 = scalar_lea.vmem [#allocation2], 49
      %v2738 = vld [vmem:[%s2737] ss:$2 sm:$0xff]
      %s2739 = scalar_lea.vmem [#allocation2], 65
      %v2740 = vld [vmem:[%s2739] ss:$2 sm:$0xff]
      %s2741 = scalar_lea.vmem [#allocation2], 81
      %v2742 = vld [vmem:[%s2741] ss:$2 sm:$0xff]
      %s2743 = scalar_lea.vmem [#allocation2], 97
      %v2744 = vld [vmem:[%s2743] ss:$2 sm:$0xff]
      %s2745 = scalar_lea.vmem [#allocation2], 113
      %v2746 = vld [vmem:[%s2745] ss:$2 sm:$0xff]
      %s2747 = scalar_lea.vmem [#allocation2], 129
      %v2748 = vld [vmem:[%s2747] ss:$2 sm:$0xff]
      %s2749 = scalar_lea.vmem [#allocation2], 145
      %v2750 = vld [vmem:[%s2749] ss:$2 sm:$0xff]
      %s2751 = scalar_lea.vmem [#allocation2], 161
      %v2752 = vld [vmem:[%s2751] ss:$2 sm:$0xff]
      %s2753 = scalar_lea.vmem [#allocation2], 177
      %v2754 = vld [vmem:[%s2753] ss:$2 sm:$0xff]
      %s2755 = scalar_lea.vmem [#allocation2], 193
      %v2756 = vld [vmem:[%s2755] ss:$2 sm:$0xff]
      %s2757 = scalar_lea.vmem [#allocation2], 209
      %v2758 = vld [vmem:[%s2757] ss:$2 sm:$0xff]
      %s2759 = scalar_lea.vmem [#allocation2], 225
      %v2760 = vld [vmem:[%s2759] ss:$2 sm:$0xff]
      %s2761 = scalar_lea.vmem [#allocation2], 241
      %v2762 = vld [vmem:[%s2761] ss:$2 sm:$0xff]
      %s2763 = scalar_lea.vmem [#allocation2], 257
      %v2764 = vld [vmem:[%s2763] ss:$2 sm:$0xff]
      %s2765 = scalar_lea.vmem [#allocation2], 273
      %v2766 = vld [vmem:[%s2765] ss:$2 sm:$0xff]
      %s2767 = scalar_lea.vmem [#allocation2], 289
      %v2768 = vld [vmem:[%s2767] ss:$2 sm:$0xff]
      %s2769 = scalar_lea.vmem [#allocation2], 305
      %v2770 = vld [vmem:[%s2769] ss:$2 sm:$0xff]
      %s2771 = scalar_lea.vmem [#allocation2], 321
      %v2772 = vld [vmem:[%s2771] ss:$2 sm:$0xff]
      %s2773 = scalar_lea.vmem [#allocation2], 337
      %v2774 = vld [vmem:[%s2773] ss:$2 sm:$0xff]
      %s2775 = scalar_lea.vmem [#allocation2], 353
      %v2776 = vld [vmem:[%s2775] ss:$2 sm:$0xff]
      %s2777 = scalar_lea.vmem [#allocation2], 369
      %v2778 = vld [vmem:[%s2777] ss:$2 sm:$0xff]
      %s2779 = scalar_lea.vmem [#allocation2], 385
      %v2780 = vld [vmem:[%s2779] ss:$2 sm:$0xff]
      %s2781 = scalar_lea.vmem [#allocation2], 401
      %v2782 = vld [vmem:[%s2781] ss:$2 sm:$0xff]
      %s2783 = scalar_lea.vmem [#allocation2], 417
      %v2784 = vld [vmem:[%s2783] ss:$2 sm:$0xff]
      %s2785 = scalar_lea.vmem [#allocation2], 433
      %v2786 = vld [vmem:[%s2785] ss:$2 sm:$0xff]
      %s2787 = scalar_lea.vmem [#allocation2], 449
      %v2788 = vld [vmem:[%s2787] ss:$2 sm:$0xff]
      %s2789 = scalar_lea.vmem [#allocation2], 465
      %v2790 = vld [vmem:[%s2789] ss:$2 sm:$0xff]
      %s2791 = scalar_lea.vmem [#allocation2], 481
      %v2792 = vld [vmem:[%s2791] ss:$2 sm:$0xff]
      %s2793 = scalar_lea.vmem [#allocation2], 497
      %v2794 = vld [vmem:[%s2793] ss:$2 sm:$0xff]
      %s2795 = scalar_lea.vmem [#allocation2], 513
      %v2796 = vld [vmem:[%s2795] ss:$2 sm:$0xff]
      %s2797 = scalar_lea.vmem [#allocation2], 529
      %v2798 = vld [vmem:[%s2797] ss:$2 sm:$0xff]
      %s2799 = scalar_lea.vmem [#allocation2], 545
      %v2800 = vld [vmem:[%s2799] ss:$2 sm:$0xff]
      %s2801 = scalar_lea.vmem [#allocation2], 561
      %v2802 = vld [vmem:[%s2801] ss:$2 sm:$0xff]
      %s2803 = scalar_lea.vmem [#allocation2], 577
      %v2804 = vld [vmem:[%s2803] ss:$2 sm:$0xff]
      %s2805 = scalar_lea.vmem [#allocation2], 593
      %v2806 = vld [vmem:[%s2805] ss:$2 sm:$0xff]
      %s2807 = scalar_lea.vmem [#allocation2], 609
      %v2808 = vld [vmem:[%s2807] ss:$2 sm:$0xff]
      %s2809 = scalar_lea.vmem [#allocation2], 625
      %v2810 = vld [vmem:[%s2809] ss:$2 sm:$0xff]
      %v2811 = vmax.f32 %v2652, %v2732
      %v2812 = vmax.f32 %v2654, %v2734
      %v2813 = vmax.f32 %v2656, %v2736
      %v2814 = vmax.f32 %v2658, %v2738
      %v2815 = vmax.f32 %v2660, %v2740
      %v2816 = vmax.f32 %v2662, %v2742
      %v2817 = vmax.f32 %v2664, %v2744
      %v2818 = vmax.f32 %v2666, %v2746
      %v2819 = vmax.f32 %v2668, %v2748
      %v2820 = vmax.f32 %v2670, %v2750
      %v2821 = vmax.f32 %v2672, %v2752
      %v2822 = vmax.f32 %v2674, %v2754
      %v2823 = vmax.f32 %v2676, %v2756
      %v2824 = vmax.f32 %v2678, %v2758
      %v2825 = vmax.f32 %v2680, %v2760
      %v2826 = vmax.f32 %v2682, %v2762
      %v2827 = vmax.f32 %v2684, %v2764
      %v2828 = vmax.f32 %v2686, %v2766
      %v2829 = vmax.f32 %v2688, %v2768
      %v2830 = vmax.f32 %v2690, %v2770
      %v2831 = vmax.f32 %v2692, %v2772
      %v2832 = vmax.f32 %v2694, %v2774
      %v2833 = vmax.f32 %v2696, %v2776
      %v2834 = vmax.f32 %v2698, %v2778
      %v2835 = vmax.f32 %v2700, %v2780
      %v2836 = vmax.f32 %v2702, %v2782
      %v2837 = vmax.f32 %v2704, %v2784
      %v2838 = vmax.f32 %v2706, %v2786
      %v2839 = vmax.f32 %v2708, %v2788
      %v2840 = vmax.f32 %v2710, %v2790
      %v2841 = vmax.f32 %v2712, %v2792
      %v2842 = vmax.f32 %v2714, %v2794
      %v2843 = vmax.f32 %v2716, %v2796
      %v2844 = vmax.f32 %v2718, %v2798
      %v2845 = vmax.f32 %v2720, %v2800
      %v2846 = vmax.f32 %v2722, %v2802
      %v2847 = vmax.f32 %v2724, %v2804
      %v2848 = vmax.f32 %v2726, %v2806
      %v2849 = vmax.f32 %v2728, %v2808
      %v2850 = vmax.f32 %v2730, %v2810
      %v2851 = vadd.s32 %v494, 8
      %v2852 = vadd.s32 %v494, 16
      %v2853 = vadd.s32 %v494, 24
      %v2854 = vadd.s32 %v494, 32
      %v2855 = vadd.s32 %v494, 40
      %v2856 = vadd.s32 %v494, 48
      %v2857 = vadd.s32 %v494, 56
      %v2858 = vadd.s32 %v494, 64
      %v2859 = vadd.s32 %v494, 72
      %vm2860 = vcmp.lt.s32.totalorder %v494, 78
      %vm2861 = vcmp.lt.s32.totalorder %v2851, 78
      %vm2862 = vcmp.lt.s32.totalorder %v2852, 78
      %vm2863 = vcmp.lt.s32.totalorder %v2853, 78
      %vm2864 = vcmp.lt.s32.totalorder %v2854, 78
      %vm2865 = vcmp.lt.s32.totalorder %v2855, 78
      %vm2866 = vcmp.lt.s32.totalorder %v2856, 78
      %vm2867 = vcmp.lt.s32.totalorder %v2857, 78
      %vm2868 = vcmp.lt.s32.totalorder %v2858, 78
      %vm2869 = vcmp.lt.s32.totalorder %v2859, 78
      %v2870 = vsel %vm2860, 1, 0
      %v2871 = vsel %vm2861, 1, 0
      %v2872 = vsel %vm2862, 1, 0
      %v2873 = vsel %vm2863, 1, 0
      %v2874 = vsel %vm2864, 1, 0
      %v2875 = vsel %vm2865, 1, 0
      %v2876 = vsel %vm2866, 1, 0
      %v2877 = vsel %vm2867, 1, 0
      %v2878 = vsel %vm2868, 1, 0
      %v2879 = vsel %vm2869, 1, 0
      %vm2880 = vcmp.eq.s32.totalorder %v2870, 1
      %vm2881 = vcmp.eq.s32.totalorder %v2871, 1
      %vm2882 = vcmp.eq.s32.totalorder %v2872, 1
      %vm2883 = vcmp.eq.s32.totalorder %v2873, 1
      %vm2884 = vcmp.eq.s32.totalorder %v2874, 1
      %vm2885 = vcmp.eq.s32.totalorder %v2875, 1
      %vm2886 = vcmp.eq.s32.totalorder %v2876, 1
      %vm2887 = vcmp.eq.s32.totalorder %v2877, 1
      %vm2888 = vcmp.eq.s32.totalorder %v2878, 1
      %vm2889 = vcmp.eq.s32.totalorder %v2879, 1
      %v2890 = vsel %vm2880, %v2811, 0.0
      %v2891 = vsel %vm2881, %v2812, 0.0
      %v2892 = vsel %vm2882, %v2813, 0.0
      %v2893 = vsel %vm2883, %v2814, 0.0
      %v2894 = vsel %vm2884, %v2815, 0.0
      %v2895 = vsel %vm2885, %v2816, 0.0
      %v2896 = vsel %vm2886, %v2817, 0.0
      %v2897 = vsel %vm2887, %v2818, 0.0
      %v2898 = vsel %vm2888, %v2819, 0.0
      %v2899 = vsel %vm2889, %v2820, 0.0
      %v2900 = vsel %vm2880, %v2821, 0.0
      %v2901 = vsel %vm2881, %v2822, 0.0
      %v2902 = vsel %vm2882, %v2823, 0.0
      %v2903 = vsel %vm2883, %v2824, 0.0
      %v2904 = vsel %vm2884, %v2825, 0.0
      %v2905 = vsel %vm2885, %v2826, 0.0
      %v2906 = vsel %vm2886, %v2827, 0.0
      %v2907 = vsel %vm2887, %v2828, 0.0
      %v2908 = vsel %vm2888, %v2829, 0.0
      %v2909 = vsel %vm2889, %v2830, 0.0
      %v2910 = vsel %vm2880, %v2831, 0.0
      %v2911 = vsel %vm2881, %v2832, 0.0
      %v2912 = vsel %vm2882, %v2833, 0.0
      %v2913 = vsel %vm2883, %v2834, 0.0
      %v2914 = vsel %vm2884, %v2835, 0.0
      %v2915 = vsel %vm2885, %v2836, 0.0
      %v2916 = vsel %vm2886, %v2837, 0.0
      %v2917 = vsel %vm2887, %v2838, 0.0
      %v2918 = vsel %vm2888, %v2839, 0.0
      %v2919 = vsel %vm2889, %v2840, 0.0
      %v2920 = vsel %vm2880, %v2841, 0.0
      %v2921 = vsel %vm2881, %v2842, 0.0
      %v2922 = vsel %vm2882, %v2843, 0.0
      %v2923 = vsel %vm2883, %v2844, 0.0
      %v2924 = vsel %vm2884, %v2845, 0.0
      %v2925 = vsel %vm2885, %v2846, 0.0
      %v2926 = vsel %vm2886, %v2847, 0.0
      %v2927 = vsel %vm2887, %v2848, 0.0
      %v2928 = vsel %vm2888, %v2849, 0.0
      %v2929 = vsel %vm2889, %v2850, 0.0
      %v2930 = vrot.slane %v2890, 7
      %v2931 = vrot.slane %v2891, 7
      %v2932 = vrot.slane %v2892, 7
      %v2933 = vrot.slane %v2893, 7
      %v2934 = vrot.slane %v2894, 7
      %v2935 = vrot.slane %v2895, 7
      %v2936 = vrot.slane %v2896, 7
      %v2937 = vrot.slane %v2897, 7
      %v2938 = vrot.slane %v2898, 7
      %v2939 = vrot.slane %v2899, 7
      %v2940 = vrot.slane %v2900, 7
      %v2941 = vrot.slane %v2901, 7
      %v2942 = vrot.slane %v2902, 7
      %v2943 = vrot.slane %v2903, 7
      %v2944 = vrot.slane %v2904, 7
      %v2945 = vrot.slane %v2905, 7
      %v2946 = vrot.slane %v2906, 7
      %v2947 = vrot.slane %v2907, 7
      %v2948 = vrot.slane %v2908, 7
      %v2949 = vrot.slane %v2909, 7
      %v2950 = vrot.slane %v2910, 7
      %v2951 = vrot.slane %v2911, 7
      %v2952 = vrot.slane %v2912, 7
      %v2953 = vrot.slane %v2913, 7
      %v2954 = vrot.slane %v2914, 7
      %v2955 = vrot.slane %v2915, 7
      %v2956 = vrot.slane %v2916, 7
      %v2957 = vrot.slane %v2917, 7
      %v2958 = vrot.slane %v2918, 7
      %v2959 = vrot.slane %v2919, 7
      %v2960 = vrot.slane %v2920, 7
      %v2961 = vrot.slane %v2921, 7
      %v2962 = vrot.slane %v2922, 7
      %v2963 = vrot.slane %v2923, 7
      %v2964 = vrot.slane %v2924, 7
      %v2965 = vrot.slane %v2925, 7
      %v2966 = vrot.slane %v2926, 7
      %v2967 = vrot.slane %v2927, 7
      %v2968 = vrot.slane %v2928, 7
      %v2969 = vrot.slane %v2929, 7
      %v2970 = vsel %vm495, %v2968, %v2969
      %v2971 = vsel %vm495, %v2967, %v2968
      %v2972 = vsel %vm495, %v2966, %v2967
      %v2973 = vsel %vm495, %v2965, %v2966
      %v2974 = vsel %vm495, %v2964, %v2965
      %v2975 = vsel %vm495, %v2963, %v2964
      %v2976 = vsel %vm495, %v2962, %v2963
      %v2977 = vsel %vm495, %v2961, %v2962
      %v2978 = vsel %vm495, %v2960, %v2961
      %v2979 = vsel %vm495, %v2959, %v2960
      %v2980 = vsel %vm495, %v2958, %v2959
      %v2981 = vsel %vm495, %v2957, %v2958
      %v2982 = vsel %vm495, %v2956, %v2957
      %v2983 = vsel %vm495, %v2955, %v2956
      %v2984 = vsel %vm495, %v2954, %v2955
      %v2985 = vsel %vm495, %v2953, %v2954
      %v2986 = vsel %vm495, %v2952, %v2953
      %v2987 = vsel %vm495, %v2951, %v2952
      %v2988 = vsel %vm495, %v2950, %v2951
      %v2989 = vsel %vm495, %v2949, %v2950
      %v2990 = vsel %vm495, %v2948, %v2949
      %v2991 = vsel %vm495, %v2947, %v2948
      %v2992 = vsel %vm495, %v2946, %v2947
      %v2993 = vsel %vm495, %v2945, %v2946
      %v2994 = vsel %vm495, %v2944, %v2945
      %v2995 = vsel %vm495, %v2943, %v2944
      %v2996 = vsel %vm495, %v2942, %v2943
      %v2997 = vsel %vm495, %v2941, %v2942
      %v2998 = vsel %vm495, %v2940, %v2941
      %v2999 = vsel %vm495, %v2939, %v2940
      %v3000 = vsel %vm495, %v2938, %v2939
      %v3001 = vsel %vm495, %v2937, %v2938
      %v3002 = vsel %vm495, %v2936, %v2937
      %v3003 = vsel %vm495, %v2935, %v2936
      %v3004 = vsel %vm495, %v2934, %v2935
      %v3005 = vsel %vm495, %v2933, %v2934
      %v3006 = vsel %vm495, %v2932, %v2933
      %v3007 = vsel %vm495, %v2931, %v2932
      %v3008 = vsel %vm495, %v2930, %v2931
      %v3009 = vsel %vm495, %v2969, %v2930
      %v3010 = vld [vmem:[%s4] sm:$0xff]
      %v3011 = vld [vmem:[%s4 + $0x8] sm:$0xff]
      %v3012 = vld [vmem:[%s4 + $0x10] sm:$0xff]
      %v3013 = vld [vmem:[%s4 + $0x18] sm:$0xff]
      %v3014 = vld [vmem:[%s4 + $0x20] sm:$0xff]
      %v3015 = vld [vmem:[%s4 + $0x28] sm:$0xff]
      %v3016 = vld [vmem:[%s4 + $0x30] sm:$0xff]
      %v3017 = vld [vmem:[%s4 + $0x38] sm:$0xff]
      %s3018 = scalar_lea.vmem %s4, 64
      %v3019 = vld [vmem:[%s3018] sm:$0xff]
      %v3020 = vld [vmem:[%s3018 + $0x8] sm:$0xff]
      %v3021 = vld [vmem:[%s3018 + $0x10] sm:$0xff]
      %v3022 = vld [vmem:[%s3018 + $0x18] sm:$0xff]
      %v3023 = vld [vmem:[%s3018 + $0x20] sm:$0xff]
      %v3024 = vld [vmem:[%s3018 + $0x28] sm:$0xff]
      %v3025 = vld [vmem:[%s3018 + $0x30] sm:$0xff]
      %v3026 = vld [vmem:[%s3018 + $0x38] sm:$0xff]
      %v3028 = vsel %vm2571, %v2890, 0
      %v3031 = vsel %vm2571, %v2891, 0
      %v3034 = vsel %vm2571, %v2892, 0
      %v3037 = vsel %vm2571, %v2893, 0
      %v3040 = vsel %vm2571, %v2894, 0
      %v3043 = vsel %vm2571, %v2895, 0
      %v3046 = vsel %vm2571, %v2896, 0
      %v3049 = vsel %vm2571, %v2897, 0
      %v3052 = vsel %vm2571, %v2898, 0
      %v3055 = vsel %vm2571, %v2899, 0
      %v3058 = vsel %vm2571, %v2900, 0
      %v3061 = vsel %vm2571, %v2901, 0
      %v3064 = vsel %vm2571, %v2902, 0
      %v3067 = vsel %vm2571, %v2903, 0
      %v3070 = vsel %vm2571, %v2904, 0
      %v3073 = vsel %vm2571, %v2905, 0
      %v3076 = vsel %vm2571, %v2906, 0
      %v3079 = vsel %vm2571, %v2907, 0
      %v3082 = vsel %vm2571, %v2908, 0
      %v3085 = vsel %vm2571, %v2909, 0
      %v3088 = vsel %vm2571, %v2910, 0
      %v3091 = vsel %vm2571, %v2911, 0
      %v3094 = vsel %vm2571, %v2912, 0
      %v3097 = vsel %vm2571, %v2913, 0
      %v3100 = vsel %vm2571, %v2914, 0
      %v3103 = vsel %vm2571, %v2915, 0
      %v3106 = vsel %vm2571, %v2916, 0
      %v3109 = vsel %vm2571, %v2917, 0
      %v3112 = vsel %vm2571, %v2918, 0
      %v3115 = vsel %vm2571, %v2919, 0
      %v3118 = vsel %vm2571, %v2920, 0
      %v3121 = vsel %vm2571, %v2921, 0
      %v3124 = vsel %vm2571, %v2922, 0
      %v3127 = vsel %vm2571, %v2923, 0
      %v3130 = vsel %vm2571, %v2924, 0
      %v3133 = vsel %vm2571, %v2925, 0
      %v3136 = vsel %vm2571, %v2926, 0
      %v3139 = vsel %vm2571, %v2927, 0
      %v3142 = vsel %vm2571, %v2928, 0
      %v3145 = vsel %vm2571, %v2929, 0
      %3147 = vmatpush.msra.mxu0 0.0
      %3148 = vmatpush.msra.mxu0 0.0
      %3149 = vmatpush.msra.mxu0 0.0
      %3150 = vmatpush.msra.mxu0 0.0
      %3151 = vmatpush.msra.mxu0 0.0
      %3152 = vmatpush.msra.mxu0 0.0
      %3153 = vmatpush.msra.mxu0 0.0
      %3154 = vmatpush.msra.mxu0 0.0
      %3155 = vmatpush.msra.mxu0 %v3026
      %3156 = vmatpush.msra.mxu0 %v3025
      %3157 = vmatpush.msra.mxu0 %v3024
      %3158 = vmatpush.msra.mxu0 %v3023
      %3159 = vmatpush.msra.mxu0 %v3022
      %3160 = vmatpush.msra.mxu0 %v3021
      %3161 = vmatpush.msra.mxu0 %v3020
      %3162 = vmatpush.msra.mxu0 %v3019
      %3163 = vmatmul.f32.gmra.mxu0 %v3028
      %v3164 = vpop.f32.mrf.mxu0
      %v3165 = vadd.f32 0.0, %v3164
      %3166 = vmatmul.f32.gmra.mxu0 %v3031
      %v3167 = vpop.f32.mrf.mxu0
      %v3168 = vadd.f32 0.0, %v3167
      %3169 = vmatmul.f32.gmra.mxu0 %v3034
      %v3170 = vpop.f32.mrf.mxu0
      %v3171 = vadd.f32 0.0, %v3170
      %3172 = vmatmul.f32.gmra.mxu0 %v3037
      %v3173 = vpop.f32.mrf.mxu0
      %v3174 = vadd.f32 0.0, %v3173
      %3175 = vmatmul.f32.gmra.mxu0 %v3040
      %v3176 = vpop.f32.mrf.mxu0
      %v3177 = vadd.f32 0.0, %v3176
      %3178 = vmatmul.f32.gmra.mxu0 %v3043
      %v3179 = vpop.f32.mrf.mxu0
      %v3180 = vadd.f32 0.0, %v3179
      %3181 = vmatmul.f32.gmra.mxu0 %v3046
      %v3182 = vpop.f32.mrf.mxu0
      %v3183 = vadd.f32 0.0, %v3182
      %3184 = vmatmul.f32.gmra.mxu0 %v3049
      %v3185 = vpop.f32.mrf.mxu0
      %v3186 = vadd.f32 0.0, %v3185
      %3187 = vmatmul.f32.gmra.mxu0 %v3052
      %v3188 = vpop.f32.mrf.mxu0
      %v3189 = vadd.f32 0.0, %v3188
      %3190 = vmatmul.f32.gmra.mxu0 %v3055
      %v3191 = vpop.f32.mrf.mxu0
      %v3192 = vadd.f32 0.0, %v3191
      %3193 = vmatmul.f32.gmra.mxu0 %v3058
      %v3194 = vpop.f32.mrf.mxu0
      %v3195 = vadd.f32 0.0, %v3194
      %3196 = vmatmul.f32.gmra.mxu0 %v3061
      %v3197 = vpop.f32.mrf.mxu0
      %v3198 = vadd.f32 0.0, %v3197
      %3199 = vmatmul.f32.gmra.mxu0 %v3064
      %v3200 = vpop.f32.mrf.mxu0
      %v3201 = vadd.f32 0.0, %v3200
      %3202 = vmatmul.f32.gmra.mxu0 %v3067
      %v3203 = vpop.f32.mrf.mxu0
      %v3204 = vadd.f32 0.0, %v3203
      %3205 = vmatmul.f32.gmra.mxu0 %v3070
      %v3206 = vpop.f32.mrf.mxu0
      %v3207 = vadd.f32 0.0, %v3206
      %3208 = vmatmul.f32.gmra.mxu0 %v3073
      %v3209 = vpop.f32.mrf.mxu0
      %v3210 = vadd.f32 0.0, %v3209
      %3211 = vmatmul.f32.gmra.mxu0 %v3076
      %v3212 = vpop.f32.mrf.mxu0
      %v3213 = vadd.f32 0.0, %v3212
      %3214 = vmatmul.f32.gmra.mxu0 %v3079
      %v3215 = vpop.f32.mrf.mxu0
      %v3216 = vadd.f32 0.0, %v3215
      %3217 = vmatmul.f32.gmra.mxu0 %v3082
      %v3218 = vpop.f32.mrf.mxu0
      %v3219 = vadd.f32 0.0, %v3218
      %3220 = vmatmul.f32.gmra.mxu0 %v3085
      %v3221 = vpop.f32.mrf.mxu0
      %v3222 = vadd.f32 0.0, %v3221
      %3223 = vmatmul.f32.gmra.mxu0 %v3088
      %v3224 = vpop.f32.mrf.mxu0
      %v3225 = vadd.f32 0.0, %v3224
      %3226 = vmatmul.f32.gmra.mxu0 %v3091
      %v3227 = vpop.f32.mrf.mxu0
      %v3228 = vadd.f32 0.0, %v3227
      %3229 = vmatmul.f32.gmra.mxu0 %v3094
      %v3230 = vpop.f32.mrf.mxu0
      %v3231 = vadd.f32 0.0, %v3230
      %3232 = vmatmul.f32.gmra.mxu0 %v3097
      %v3233 = vpop.f32.mrf.mxu0
      %v3234 = vadd.f32 0.0, %v3233
      %3235 = vmatmul.f32.gmra.mxu0 %v3100
      %v3236 = vpop.f32.mrf.mxu0
      %v3237 = vadd.f32 0.0, %v3236
      %3238 = vmatmul.f32.gmra.mxu0 %v3103
      %v3239 = vpop.f32.mrf.mxu0
      %v3240 = vadd.f32 0.0, %v3239
      %3241 = vmatmul.f32.gmra.mxu0 %v3106
      %v3242 = vpop.f32.mrf.mxu0
      %v3243 = vadd.f32 0.0, %v3242
      %3244 = vmatmul.f32.gmra.mxu0 %v3109
      %v3245 = vpop.f32.mrf.mxu0
      %v3246 = vadd.f32 0.0, %v3245
      %3247 = vmatmul.f32.gmra.mxu0 %v3112
      %v3248 = vpop.f32.mrf.mxu0
      %v3249 = vadd.f32 0.0, %v3248
      %3250 = vmatmul.f32.gmra.mxu0 %v3115
      %v3251 = vpop.f32.mrf.mxu0
      %v3252 = vadd.f32 0.0, %v3251
      %3253 = vmatmul.f32.gmra.mxu0 %v3118
      %v3254 = vpop.f32.mrf.mxu0
      %v3255 = vadd.f32 0.0, %v3254
      %3256 = vmatmul.f32.gmra.mxu0 %v3121
      %v3257 = vpop.f32.mrf.mxu0
      %v3258 = vadd.f32 0.0, %v3257
      %3259 = vmatmul.f32.gmra.mxu0 %v3124
      %v3260 = vpop.f32.mrf.mxu0
      %v3261 = vadd.f32 0.0, %v3260
      %3262 = vmatmul.f32.gmra.mxu0 %v3127
      %v3263 = vpop.f32.mrf.mxu0
      %v3264 = vadd.f32 0.0, %v3263
      %3265 = vmatmul.f32.gmra.mxu0 %v3130
      %v3266 = vpop.f32.mrf.mxu0
      %v3267 = vadd.f32 0.0, %v3266
      %3268 = vmatmul.f32.gmra.mxu0 %v3133
      %v3269 = vpop.f32.mrf.mxu0
      %v3270 = vadd.f32 0.0, %v3269
      %3271 = vmatmul.f32.gmra.mxu0 %v3136
      %v3272 = vpop.f32.mrf.mxu0
      %v3273 = vadd.f32 0.0, %v3272
      %3274 = vmatmul.f32.gmra.mxu0 %v3139
      %v3275 = vpop.f32.mrf.mxu0
      %v3276 = vadd.f32 0.0, %v3275
      %3277 = vmatmul.f32.gmra.mxu0 %v3142
      %v3278 = vpop.f32.mrf.mxu0
      %v3279 = vadd.f32 0.0, %v3278
      %3280 = vmatmul.f32.gmra.mxu0 %v3145
      %v3281 = vpop.f32.mrf.mxu0
      %v3282 = vadd.f32 0.0, %v3281
      %3283 = vdwg.mxu0
      %v3285 = vsel %vm2571, %v3009, 0
      %v3288 = vsel %vm2571, %v3008, 0
      %v3291 = vsel %vm2571, %v3007, 0
      %v3294 = vsel %vm2571, %v3006, 0
      %v3297 = vsel %vm2571, %v3005, 0
      %v3300 = vsel %vm2571, %v3004, 0
      %v3303 = vsel %vm2571, %v3003, 0
      %v3306 = vsel %vm2571, %v3002, 0
      %v3309 = vsel %vm2571, %v3001, 0
      %v3312 = vsel %vm2571, %v3000, 0
      %v3315 = vsel %vm2571, %v2999, 0
      %v3318 = vsel %vm2571, %v2998, 0
      %v3321 = vsel %vm2571, %v2997, 0
      %v3324 = vsel %vm2571, %v2996, 0
      %v3327 = vsel %vm2571, %v2995, 0
      %v3330 = vsel %vm2571, %v2994, 0
      %v3333 = vsel %vm2571, %v2993, 0
      %v3336 = vsel %vm2571, %v2992, 0
      %v3339 = vsel %vm2571, %v2991, 0
      %v3342 = vsel %vm2571, %v2990, 0
      %v3345 = vsel %vm2571, %v2989, 0
      %v3348 = vsel %vm2571, %v2988, 0
      %v3351 = vsel %vm2571, %v2987, 0
      %v3354 = vsel %vm2571, %v2986, 0
      %v3357 = vsel %vm2571, %v2985, 0
      %v3360 = vsel %vm2571, %v2984, 0
      %v3363 = vsel %vm2571, %v2983, 0
      %v3366 = vsel %vm2571, %v2982, 0
      %v3369 = vsel %vm2571, %v2981, 0
      %v3372 = vsel %vm2571, %v2980, 0
      %v3375 = vsel %vm2571, %v2979, 0
      %v3378 = vsel %vm2571, %v2978, 0
      %v3381 = vsel %vm2571, %v2977, 0
      %v3384 = vsel %vm2571, %v2976, 0
      %v3387 = vsel %vm2571, %v2975, 0
      %v3390 = vsel %vm2571, %v2974, 0
      %v3393 = vsel %vm2571, %v2973, 0
      %v3396 = vsel %vm2571, %v2972, 0
      %v3399 = vsel %vm2571, %v2971, 0
      %v3402 = vsel %vm2571, %v2970, 0
      %3404 = vmatpush.msra.mxu0 0.0
      %3405 = vmatpush.msra.mxu0 0.0
      %3406 = vmatpush.msra.mxu0 0.0
      %3407 = vmatpush.msra.mxu0 0.0
      %3408 = vmatpush.msra.mxu0 0.0
      %3409 = vmatpush.msra.mxu0 0.0
      %3410 = vmatpush.msra.mxu0 0.0
      %3411 = vmatpush.msra.mxu0 0.0
      %3412 = vmatpush.msra.mxu0 %v3017
      %3413 = vmatpush.msra.mxu0 %v3016
      %3414 = vmatpush.msra.mxu0 %v3015
      %3415 = vmatpush.msra.mxu0 %v3014
      %3416 = vmatpush.msra.mxu0 %v3013
      %3417 = vmatpush.msra.mxu0 %v3012
      %3418 = vmatpush.msra.mxu0 %v3011
      %3419 = vmatpush.msra.mxu0 %v3010
      %3420 = vmatmul.f32.gmra.mxu0 %v3285
      %v3421 = vpop.f32.mrf.mxu0
      %v3422 = vadd.f32 %v3165, %v3421
      %3423 = vmatmul.f32.gmra.mxu0 %v3288
      %v3424 = vpop.f32.mrf.mxu0
      %v3425 = vadd.f32 %v3168, %v3424
      %3426 = vmatmul.f32.gmra.mxu0 %v3291
      %v3427 = vpop.f32.mrf.mxu0
      %v3428 = vadd.f32 %v3171, %v3427
      %3429 = vmatmul.f32.gmra.mxu0 %v3294
      %v3430 = vpop.f32.mrf.mxu0
      %v3431 = vadd.f32 %v3174, %v3430
      %3432 = vmatmul.f32.gmra.mxu0 %v3297
      %v3433 = vpop.f32.mrf.mxu0
      %v3434 = vadd.f32 %v3177, %v3433
      %3435 = vmatmul.f32.gmra.mxu0 %v3300
      %v3436 = vpop.f32.mrf.mxu0
      %v3437 = vadd.f32 %v3180, %v3436
      %3438 = vmatmul.f32.gmra.mxu0 %v3303
      %v3439 = vpop.f32.mrf.mxu0
      %v3440 = vadd.f32 %v3183, %v3439
      %3441 = vmatmul.f32.gmra.mxu0 %v3306
      %v3442 = vpop.f32.mrf.mxu0
      %v3443 = vadd.f32 %v3186, %v3442
      %3444 = vmatmul.f32.gmra.mxu0 %v3309
      %v3445 = vpop.f32.mrf.mxu0
      %v3446 = vadd.f32 %v3189, %v3445
      %3447 = vmatmul.f32.gmra.mxu0 %v3312
      %v3448 = vpop.f32.mrf.mxu0
      %v3449 = vadd.f32 %v3192, %v3448
      %3450 = vmatmul.f32.gmra.mxu0 %v3315
      %v3451 = vpop.f32.mrf.mxu0
      %v3452 = vadd.f32 %v3195, %v3451
      %3453 = vmatmul.f32.gmra.mxu0 %v3318
      %v3454 = vpop.f32.mrf.mxu0
      %v3455 = vadd.f32 %v3198, %v3454
      %3456 = vmatmul.f32.gmra.mxu0 %v3321
      %v3457 = vpop.f32.mrf.mxu0
      %v3458 = vadd.f32 %v3201, %v3457
      %3459 = vmatmul.f32.gmra.mxu0 %v3324
      %v3460 = vpop.f32.mrf.mxu0
      %v3461 = vadd.f32 %v3204, %v3460
      %3462 = vmatmul.f32.gmra.mxu0 %v3327
      %v3463 = vpop.f32.mrf.mxu0
      %v3464 = vadd.f32 %v3207, %v3463
      %3465 = vmatmul.f32.gmra.mxu0 %v3330
      %v3466 = vpop.f32.mrf.mxu0
      %v3467 = vadd.f32 %v3210, %v3466
      %3468 = vmatmul.f32.gmra.mxu0 %v3333
      %v3469 = vpop.f32.mrf.mxu0
      %v3470 = vadd.f32 %v3213, %v3469
      %3471 = vmatmul.f32.gmra.mxu0 %v3336
      %v3472 = vpop.f32.mrf.mxu0
      %v3473 = vadd.f32 %v3216, %v3472
      %3474 = vmatmul.f32.gmra.mxu0 %v3339
      %v3475 = vpop.f32.mrf.mxu0
      %v3476 = vadd.f32 %v3219, %v3475
      %3477 = vmatmul.f32.gmra.mxu0 %v3342
      %v3478 = vpop.f32.mrf.mxu0
      %v3479 = vadd.f32 %v3222, %v3478
      %3480 = vmatmul.f32.gmra.mxu0 %v3345
      %v3481 = vpop.f32.mrf.mxu0
      %v3482 = vadd.f32 %v3225, %v3481
      %3483 = vmatmul.f32.gmra.mxu0 %v3348
      %v3484 = vpop.f32.mrf.mxu0
      %v3485 = vadd.f32 %v3228, %v3484
      %3486 = vmatmul.f32.gmra.mxu0 %v3351
      %v3487 = vpop.f32.mrf.mxu0
      %v3488 = vadd.f32 %v3231, %v3487
      %3489 = vmatmul.f32.gmra.mxu0 %v3354
      %v3490 = vpop.f32.mrf.mxu0
      %v3491 = vadd.f32 %v3234, %v3490
      %3492 = vmatmul.f32.gmra.mxu0 %v3357
      %v3493 = vpop.f32.mrf.mxu0
      %v3494 = vadd.f32 %v3237, %v3493
      %3495 = vmatmul.f32.gmra.mxu0 %v3360
      %v3496 = vpop.f32.mrf.mxu0
      %v3497 = vadd.f32 %v3240, %v3496
      %3498 = vmatmul.f32.gmra.mxu0 %v3363
      %v3499 = vpop.f32.mrf.mxu0
      %v3500 = vadd.f32 %v3243, %v3499
      %3501 = vmatmul.f32.gmra.mxu0 %v3366
      %v3502 = vpop.f32.mrf.mxu0
      %v3503 = vadd.f32 %v3246, %v3502
      %3504 = vmatmul.f32.gmra.mxu0 %v3369
      %v3505 = vpop.f32.mrf.mxu0
      %v3506 = vadd.f32 %v3249, %v3505
      %3507 = vmatmul.f32.gmra.mxu0 %v3372
      %v3508 = vpop.f32.mrf.mxu0
      %v3509 = vadd.f32 %v3252, %v3508
      %3510 = vmatmul.f32.gmra.mxu0 %v3375
      %v3511 = vpop.f32.mrf.mxu0
      %v3512 = vadd.f32 %v3255, %v3511
      %3513 = vmatmul.f32.gmra.mxu0 %v3378
      %v3514 = vpop.f32.mrf.mxu0
      %v3515 = vadd.f32 %v3258, %v3514
      %3516 = vmatmul.f32.gmra.mxu0 %v3381
      %v3517 = vpop.f32.mrf.mxu0
      %v3518 = vadd.f32 %v3261, %v3517
      %3519 = vmatmul.f32.gmra.mxu0 %v3384
      %v3520 = vpop.f32.mrf.mxu0
      %v3521 = vadd.f32 %v3264, %v3520
      %3522 = vmatmul.f32.gmra.mxu0 %v3387
      %v3523 = vpop.f32.mrf.mxu0
      %v3524 = vadd.f32 %v3267, %v3523
      %3525 = vmatmul.f32.gmra.mxu0 %v3390
      %v3526 = vpop.f32.mrf.mxu0
      %v3527 = vadd.f32 %v3270, %v3526
      %3528 = vmatmul.f32.gmra.mxu0 %v3393
      %v3529 = vpop.f32.mrf.mxu0
      %v3530 = vadd.f32 %v3273, %v3529
      %3531 = vmatmul.f32.gmra.mxu0 %v3396
      %v3532 = vpop.f32.mrf.mxu0
      %v3533 = vadd.f32 %v3276, %v3532
      %3534 = vmatmul.f32.gmra.mxu0 %v3399
      %v3535 = vpop.f32.mrf.mxu0
      %v3536 = vadd.f32 %v3279, %v3535
      %3537 = vmatmul.f32.gmra.mxu0 %v3402
      %v3538 = vpop.f32.mrf.mxu0
      %v3539 = vadd.f32 %v3282, %v3538
      %3540 = vdwg.mxu0
      %v3541 = vrot.slane %v2890, 1
      %v3542 = vrot.slane %v2891, 1
      %v3543 = vrot.slane %v2892, 1
      %v3544 = vrot.slane %v2893, 1
      %v3545 = vrot.slane %v2894, 1
      %v3546 = vrot.slane %v2895, 1
      %v3547 = vrot.slane %v2896, 1
      %v3548 = vrot.slane %v2897, 1
      %v3549 = vrot.slane %v2898, 1
      %v3550 = vrot.slane %v2899, 1
      %v3551 = vrot.slane %v2900, 1
      %v3552 = vrot.slane %v2901, 1
      %v3553 = vrot.slane %v2902, 1
      %v3554 = vrot.slane %v2903, 1
      %v3555 = vrot.slane %v2904, 1
      %v3556 = vrot.slane %v2905, 1
      %v3557 = vrot.slane %v2906, 1
      %v3558 = vrot.slane %v2907, 1
      %v3559 = vrot.slane %v2908, 1
      %v3560 = vrot.slane %v2909, 1
      %v3561 = vrot.slane %v2910, 1
      %v3562 = vrot.slane %v2911, 1
      %v3563 = vrot.slane %v2912, 1
      %v3564 = vrot.slane %v2913, 1
      %v3565 = vrot.slane %v2914, 1
      %v3566 = vrot.slane %v2915, 1
      %v3567 = vrot.slane %v2916, 1
      %v3568 = vrot.slane %v2917, 1
      %v3569 = vrot.slane %v2918, 1
      %v3570 = vrot.slane %v2919, 1
      %v3571 = vrot.slane %v2920, 1
      %v3572 = vrot.slane %v2921, 1
      %v3573 = vrot.slane %v2922, 1
      %v3574 = vrot.slane %v2923, 1
      %v3575 = vrot.slane %v2924, 1
      %v3576 = vrot.slane %v2925, 1
      %v3577 = vrot.slane %v2926, 1
      %v3578 = vrot.slane %v2927, 1
      %v3579 = vrot.slane %v2928, 1
      %v3580 = vrot.slane %v2929, 1
      %v3581 = vsel %vm1660, %v3579, %v3580
      %v3582 = vsel %vm1660, %v3578, %v3579
      %v3583 = vsel %vm1660, %v3577, %v3578
      %v3584 = vsel %vm1660, %v3576, %v3577
      %v3585 = vsel %vm1660, %v3575, %v3576
      %v3586 = vsel %vm1660, %v3574, %v3575
      %v3587 = vsel %vm1660, %v3573, %v3574
      %v3588 = vsel %vm1660, %v3572, %v3573
      %v3589 = vsel %vm1660, %v3571, %v3572
      %v3590 = vsel %vm1660, %v3570, %v3571
      %v3591 = vsel %vm1660, %v3569, %v3570
      %v3592 = vsel %vm1660, %v3568, %v3569
      %v3593 = vsel %vm1660, %v3567, %v3568
      %v3594 = vsel %vm1660, %v3566, %v3567
      %v3595 = vsel %vm1660, %v3565, %v3566
      %v3596 = vsel %vm1660, %v3564, %v3565
      %v3597 = vsel %vm1660, %v3563, %v3564
      %v3598 = vsel %vm1660, %v3562, %v3563
      %v3599 = vsel %vm1660, %v3561, %v3562
      %v3600 = vsel %vm1660, %v3560, %v3561
      %v3601 = vsel %vm1660, %v3559, %v3560
      %v3602 = vsel %vm1660, %v3558, %v3559
      %v3603 = vsel %vm1660, %v3557, %v3558
      %v3604 = vsel %vm1660, %v3556, %v3557
      %v3605 = vsel %vm1660, %v3555, %v3556
      %v3606 = vsel %vm1660, %v3554, %v3555
      %v3607 = vsel %vm1660, %v3553, %v3554
      %v3608 = vsel %vm1660, %v3552, %v3553
      %v3609 = vsel %vm1660, %v3551, %v3552
      %v3610 = vsel %vm1660, %v3550, %v3551
      %v3611 = vsel %vm1660, %v3549, %v3550
      %v3612 = vsel %vm1660, %v3548, %v3549
      %v3613 = vsel %vm1660, %v3547, %v3548
      %v3614 = vsel %vm1660, %v3546, %v3547
      %v3615 = vsel %vm1660, %v3545, %v3546
      %v3616 = vsel %vm1660, %v3544, %v3545
      %v3617 = vsel %vm1660, %v3543, %v3544
      %v3618 = vsel %vm1660, %v3542, %v3543
      %v3619 = vsel %vm1660, %v3541, %v3542
      %v3620 = vsel %vm1660, %v3580, %v3541
      %s3621 = scalar_lea.vmem %s4, 128
      %v3622 = vld [vmem:[%s3621] sm:$0xff]
      %v3623 = vld [vmem:[%s3621 + $0x8] sm:$0xff]
      %v3624 = vld [vmem:[%s3621 + $0x10] sm:$0xff]
      %v3625 = vld [vmem:[%s3621 + $0x18] sm:$0xff]
      %v3626 = vld [vmem:[%s3621 + $0x20] sm:$0xff]
      %v3627 = vld [vmem:[%s3621 + $0x28] sm:$0xff]
      %v3628 = vld [vmem:[%s3621 + $0x30] sm:$0xff]
      %v3629 = vld [vmem:[%s3621 + $0x38] sm:$0xff]
      %v3631 = vsel %vm2571, %v3619, 0
      %v3634 = vsel %vm2571, %v3618, 0
      %v3637 = vsel %vm2571, %v3617, 0
      %v3640 = vsel %vm2571, %v3616, 0
      %v3643 = vsel %vm2571, %v3615, 0
      %v3646 = vsel %vm2571, %v3614, 0
      %v3649 = vsel %vm2571, %v3613, 0
      %v3652 = vsel %vm2571, %v3612, 0
      %v3655 = vsel %vm2571, %v3611, 0
      %v3658 = vsel %vm2571, %v3610, 0
      %v3661 = vsel %vm2571, %v3609, 0
      %v3664 = vsel %vm2571, %v3608, 0
      %v3667 = vsel %vm2571, %v3607, 0
      %v3670 = vsel %vm2571, %v3606, 0
      %v3673 = vsel %vm2571, %v3605, 0
      %v3676 = vsel %vm2571, %v3604, 0
      %v3679 = vsel %vm2571, %v3603, 0
      %v3682 = vsel %vm2571, %v3602, 0
      %v3685 = vsel %vm2571, %v3601, 0
      %v3688 = vsel %vm2571, %v3600, 0
      %v3691 = vsel %vm2571, %v3599, 0
      %v3694 = vsel %vm2571, %v3598, 0
      %v3697 = vsel %vm2571, %v3597, 0
      %v3700 = vsel %vm2571, %v3596, 0
      %v3703 = vsel %vm2571, %v3595, 0
      %v3706 = vsel %vm2571, %v3594, 0
      %v3709 = vsel %vm2571, %v3593, 0
      %v3712 = vsel %vm2571, %v3592, 0
      %v3715 = vsel %vm2571, %v3591, 0
      %v3718 = vsel %vm2571, %v3590, 0
      %v3721 = vsel %vm2571, %v3589, 0
      %v3724 = vsel %vm2571, %v3588, 0
      %v3727 = vsel %vm2571, %v3587, 0
      %v3730 = vsel %vm2571, %v3586, 0
      %v3733 = vsel %vm2571, %v3585, 0
      %v3736 = vsel %vm2571, %v3584, 0
      %v3739 = vsel %vm2571, %v3583, 0
      %v3742 = vsel %vm2571, %v3582, 0
      %v3745 = vsel %vm2571, %v3581, 0
      %v3748 = vsel %vm2571, %v3620, 0
      %3750 = vmatpush.msra.mxu0 0.0
      %3751 = vmatpush.msra.mxu0 0.0
      %3752 = vmatpush.msra.mxu0 0.0
      %3753 = vmatpush.msra.mxu0 0.0
      %3754 = vmatpush.msra.mxu0 0.0
      %3755 = vmatpush.msra.mxu0 0.0
      %3756 = vmatpush.msra.mxu0 0.0
      %3757 = vmatpush.msra.mxu0 0.0
      %3758 = vmatpush.msra.mxu0 %v3629
      %3759 = vmatpush.msra.mxu0 %v3628
      %3760 = vmatpush.msra.mxu0 %v3627
      %3761 = vmatpush.msra.mxu0 %v3626
      %3762 = vmatpush.msra.mxu0 %v3625
      %3763 = vmatpush.msra.mxu0 %v3624
      %3764 = vmatpush.msra.mxu0 %v3623
      %3765 = vmatpush.msra.mxu0 %v3622
      %3766 = vmatmul.f32.gmra.mxu0 %v3631
      %v3767 = vpop.f32.mrf.mxu0
      %v3768 = vadd.f32 0.0, %v3767
      %3769 = vmatmul.f32.gmra.mxu0 %v3634
      %v3770 = vpop.f32.mrf.mxu0
      %v3771 = vadd.f32 0.0, %v3770
      %3772 = vmatmul.f32.gmra.mxu0 %v3637
      %v3773 = vpop.f32.mrf.mxu0
      %v3774 = vadd.f32 0.0, %v3773
      %3775 = vmatmul.f32.gmra.mxu0 %v3640
      %v3776 = vpop.f32.mrf.mxu0
      %v3777 = vadd.f32 0.0, %v3776
      %3778 = vmatmul.f32.gmra.mxu0 %v3643
      %v3779 = vpop.f32.mrf.mxu0
      %v3780 = vadd.f32 0.0, %v3779
      %3781 = vmatmul.f32.gmra.mxu0 %v3646
      %v3782 = vpop.f32.mrf.mxu0
      %v3783 = vadd.f32 0.0, %v3782
      %3784 = vmatmul.f32.gmra.mxu0 %v3649
      %v3785 = vpop.f32.mrf.mxu0
      %v3786 = vadd.f32 0.0, %v3785
      %3787 = vmatmul.f32.gmra.mxu0 %v3652
      %v3788 = vpop.f32.mrf.mxu0
      %v3789 = vadd.f32 0.0, %v3788
      %3790 = vmatmul.f32.gmra.mxu0 %v3655
      %v3791 = vpop.f32.mrf.mxu0
      %v3792 = vadd.f32 0.0, %v3791
      %3793 = vmatmul.f32.gmra.mxu0 %v3658
      %v3794 = vpop.f32.mrf.mxu0
      %v3795 = vadd.f32 0.0, %v3794
      %3796 = vmatmul.f32.gmra.mxu0 %v3661
      %v3797 = vpop.f32.mrf.mxu0
      %v3798 = vadd.f32 0.0, %v3797
      %3799 = vmatmul.f32.gmra.mxu0 %v3664
      %v3800 = vpop.f32.mrf.mxu0
      %v3801 = vadd.f32 0.0, %v3800
      %3802 = vmatmul.f32.gmra.mxu0 %v3667
      %v3803 = vpop.f32.mrf.mxu0
      %v3804 = vadd.f32 0.0, %v3803
      %3805 = vmatmul.f32.gmra.mxu0 %v3670
      %v3806 = vpop.f32.mrf.mxu0
      %v3807 = vadd.f32 0.0, %v3806
      %3808 = vmatmul.f32.gmra.mxu0 %v3673
      %v3809 = vpop.f32.mrf.mxu0
      %v3810 = vadd.f32 0.0, %v3809
      %3811 = vmatmul.f32.gmra.mxu0 %v3676
      %v3812 = vpop.f32.mrf.mxu0
      %v3813 = vadd.f32 0.0, %v3812
      %3814 = vmatmul.f32.gmra.mxu0 %v3679
      %v3815 = vpop.f32.mrf.mxu0
      %v3816 = vadd.f32 0.0, %v3815
      %3817 = vmatmul.f32.gmra.mxu0 %v3682
      %v3818 = vpop.f32.mrf.mxu0
      %v3819 = vadd.f32 0.0, %v3818
      %3820 = vmatmul.f32.gmra.mxu0 %v3685
      %v3821 = vpop.f32.mrf.mxu0
      %v3822 = vadd.f32 0.0, %v3821
      %3823 = vmatmul.f32.gmra.mxu0 %v3688
      %v3824 = vpop.f32.mrf.mxu0
      %v3825 = vadd.f32 0.0, %v3824
      %3826 = vmatmul.f32.gmra.mxu0 %v3691
      %v3827 = vpop.f32.mrf.mxu0
      %v3828 = vadd.f32 0.0, %v3827
      %3829 = vmatmul.f32.gmra.mxu0 %v3694
      %v3830 = vpop.f32.mrf.mxu0
      %v3831 = vadd.f32 0.0, %v3830
      %3832 = vmatmul.f32.gmra.mxu0 %v3697
      %v3833 = vpop.f32.mrf.mxu0
      %v3834 = vadd.f32 0.0, %v3833
      %3835 = vmatmul.f32.gmra.mxu0 %v3700
      %v3836 = vpop.f32.mrf.mxu0
      %v3837 = vadd.f32 0.0, %v3836
      %3838 = vmatmul.f32.gmra.mxu0 %v3703
      %v3839 = vpop.f32.mrf.mxu0
      %v3840 = vadd.f32 0.0, %v3839
      %3841 = vmatmul.f32.gmra.mxu0 %v3706
      %v3842 = vpop.f32.mrf.mxu0
      %v3843 = vadd.f32 0.0, %v3842
      %3844 = vmatmul.f32.gmra.mxu0 %v3709
      %v3845 = vpop.f32.mrf.mxu0
      %v3846 = vadd.f32 0.0, %v3845
      %3847 = vmatmul.f32.gmra.mxu0 %v3712
      %v3848 = vpop.f32.mrf.mxu0
      %v3849 = vadd.f32 0.0, %v3848
      %3850 = vmatmul.f32.gmra.mxu0 %v3715
      %v3851 = vpop.f32.mrf.mxu0
      %v3852 = vadd.f32 0.0, %v3851
      %3853 = vmatmul.f32.gmra.mxu0 %v3718
      %v3854 = vpop.f32.mrf.mxu0
      %v3855 = vadd.f32 0.0, %v3854
      %3856 = vmatmul.f32.gmra.mxu0 %v3721
      %v3857 = vpop.f32.mrf.mxu0
      %v3858 = vadd.f32 0.0, %v3857
      %3859 = vmatmul.f32.gmra.mxu0 %v3724
      %v3860 = vpop.f32.mrf.mxu0
      %v3861 = vadd.f32 0.0, %v3860
      %3862 = vmatmul.f32.gmra.mxu0 %v3727
      %v3863 = vpop.f32.mrf.mxu0
      %v3864 = vadd.f32 0.0, %v3863
      %3865 = vmatmul.f32.gmra.mxu0 %v3730
      %v3866 = vpop.f32.mrf.mxu0
      %v3867 = vadd.f32 0.0, %v3866
      %3868 = vmatmul.f32.gmra.mxu0 %v3733
      %v3869 = vpop.f32.mrf.mxu0
      %v3870 = vadd.f32 0.0, %v3869
      %3871 = vmatmul.f32.gmra.mxu0 %v3736
      %v3872 = vpop.f32.mrf.mxu0
      %v3873 = vadd.f32 0.0, %v3872
      %3874 = vmatmul.f32.gmra.mxu0 %v3739
      %v3875 = vpop.f32.mrf.mxu0
      %v3876 = vadd.f32 0.0, %v3875
      %3877 = vmatmul.f32.gmra.mxu0 %v3742
      %v3878 = vpop.f32.mrf.mxu0
      %v3879 = vadd.f32 0.0, %v3878
      %3880 = vmatmul.f32.gmra.mxu0 %v3745
      %v3881 = vpop.f32.mrf.mxu0
      %v3882 = vadd.f32 0.0, %v3881
      %3883 = vmatmul.f32.gmra.mxu0 %v3748
      %v3884 = vpop.f32.mrf.mxu0
      %v3885 = vadd.f32 0.0, %v3884
      %3886 = vdwg.mxu0
      %v3887 = vadd.f32 %v3422, %v3768
      %v3888 = vadd.f32 %v3425, %v3771
      %v3889 = vadd.f32 %v3428, %v3774
      %v3890 = vadd.f32 %v3431, %v3777
      %v3891 = vadd.f32 %v3434, %v3780
      %v3892 = vadd.f32 %v3437, %v3783
      %v3893 = vadd.f32 %v3440, %v3786
      %v3894 = vadd.f32 %v3443, %v3789
      %v3895 = vadd.f32 %v3446, %v3792
      %v3896 = vadd.f32 %v3449, %v3795
      %v3897 = vadd.f32 %v3452, %v3798
      %v3898 = vadd.f32 %v3455, %v3801
      %v3899 = vadd.f32 %v3458, %v3804
      %v3900 = vadd.f32 %v3461, %v3807
      %v3901 = vadd.f32 %v3464, %v3810
      %v3902 = vadd.f32 %v3467, %v3813
      %v3903 = vadd.f32 %v3470, %v3816
      %v3904 = vadd.f32 %v3473, %v3819
      %v3905 = vadd.f32 %v3476, %v3822
      %v3906 = vadd.f32 %v3479, %v3825
      %v3907 = vadd.f32 %v3482, %v3828
      %v3908 = vadd.f32 %v3485, %v3831
      %v3909 = vadd.f32 %v3488, %v3834
      %v3910 = vadd.f32 %v3491, %v3837
      %v3911 = vadd.f32 %v3494, %v3840
      %v3912 = vadd.f32 %v3497, %v3843
      %v3913 = vadd.f32 %v3500, %v3846
      %v3914 = vadd.f32 %v3503, %v3849
      %v3915 = vadd.f32 %v3506, %v3852
      %v3916 = vadd.f32 %v3509, %v3855
      %v3917 = vadd.f32 %v3512, %v3858
      %v3918 = vadd.f32 %v3515, %v3861
      %v3919 = vadd.f32 %v3518, %v3864
      %v3920 = vadd.f32 %v3521, %v3867
      %v3921 = vadd.f32 %v3524, %v3870
      %v3922 = vadd.f32 %v3527, %v3873
      %v3923 = vadd.f32 %v3530, %v3876
      %v3924 = vadd.f32 %v3533, %v3879
      %v3925 = vadd.f32 %v3536, %v3882
      %v3926 = vadd.f32 %v3539, %v3885
      %v3927 = vld [vmem:[%s5] sm:$0x1]
      %v3929 = vperm.slane %v3927, 0
      %v3931 = vmul.f32 %v3887, %v3929
      %v3932 = vmul.f32 %v3888, %v3929
      %v3933 = vmul.f32 %v3889, %v3929
      %v3934 = vmul.f32 %v3890, %v3929
      %v3935 = vmul.f32 %v3891, %v3929
      %v3936 = vmul.f32 %v3892, %v3929
      %v3937 = vmul.f32 %v3893, %v3929
      %v3938 = vmul.f32 %v3894, %v3929
      %v3939 = vmul.f32 %v3895, %v3929
      %v3940 = vmul.f32 %v3896, %v3929
      %v3941 = vmul.f32 %v3897, %v3929
      %v3942 = vmul.f32 %v3898, %v3929
      %v3943 = vmul.f32 %v3899, %v3929
      %v3944 = vmul.f32 %v3900, %v3929
      %v3945 = vmul.f32 %v3901, %v3929
      %v3946 = vmul.f32 %v3902, %v3929
      %v3947 = vmul.f32 %v3903, %v3929
      %v3948 = vmul.f32 %v3904, %v3929
      %v3949 = vmul.f32 %v3905, %v3929
      %v3950 = vmul.f32 %v3906, %v3929
      %v3951 = vmul.f32 %v3907, %v3929
      %v3952 = vmul.f32 %v3908, %v3929
      %v3953 = vmul.f32 %v3909, %v3929
      %v3954 = vmul.f32 %v3910, %v3929
      %v3955 = vmul.f32 %v3911, %v3929
      %v3956 = vmul.f32 %v3912, %v3929
      %v3957 = vmul.f32 %v3913, %v3929
      %v3958 = vmul.f32 %v3914, %v3929
      %v3959 = vmul.f32 %v3915, %v3929
      %v3960 = vmul.f32 %v3916, %v3929
      %v3961 = vmul.f32 %v3917, %v3929
      %v3962 = vmul.f32 %v3918, %v3929
      %v3963 = vmul.f32 %v3919, %v3929
      %v3964 = vmul.f32 %v3920, %v3929
      %v3965 = vmul.f32 %v3921, %v3929
      %v3966 = vmul.f32 %v3922, %v3929
      %v3967 = vmul.f32 %v3923, %v3929
      %v3968 = vmul.f32 %v3924, %v3929
      %v3969 = vmul.f32 %v3925, %v3929
      %v3970 = vmul.f32 %v3926, %v3929
      %v3971 = vld [vmem:[%s6] sm:$0x1]
      %v3973 = vperm.slane %v3971, 0
      %v3975 = vadd.f32 %v3931, %v3973
      %v3976 = vadd.f32 %v3932, %v3973
      %v3977 = vadd.f32 %v3933, %v3973
      %v3978 = vadd.f32 %v3934, %v3973
      %v3979 = vadd.f32 %v3935, %v3973
      %v3980 = vadd.f32 %v3936, %v3973
      %v3981 = vadd.f32 %v3937, %v3973
      %v3982 = vadd.f32 %v3938, %v3973
      %v3983 = vadd.f32 %v3939, %v3973
      %v3984 = vadd.f32 %v3940, %v3973
      %v3985 = vadd.f32 %v3941, %v3973
      %v3986 = vadd.f32 %v3942, %v3973
      %v3987 = vadd.f32 %v3943, %v3973
      %v3988 = vadd.f32 %v3944, %v3973
      %v3989 = vadd.f32 %v3945, %v3973
      %v3990 = vadd.f32 %v3946, %v3973
      %v3991 = vadd.f32 %v3947, %v3973
      %v3992 = vadd.f32 %v3948, %v3973
      %v3993 = vadd.f32 %v3949, %v3973
      %v3994 = vadd.f32 %v3950, %v3973
      %v3995 = vadd.f32 %v3951, %v3973
      %v3996 = vadd.f32 %v3952, %v3973
      %v3997 = vadd.f32 %v3953, %v3973
      %v3998 = vadd.f32 %v3954, %v3973
      %v3999 = vadd.f32 %v3955, %v3973
      %v4000 = vadd.f32 %v3956, %v3973
      %v4001 = vadd.f32 %v3957, %v3973
      %v4002 = vadd.f32 %v3958, %v3973
      %v4003 = vadd.f32 %v3959, %v3973
      %v4004 = vadd.f32 %v3960, %v3973
      %v4005 = vadd.f32 %v3961, %v3973
      %v4006 = vadd.f32 %v3962, %v3973
      %v4007 = vadd.f32 %v3963, %v3973
      %v4008 = vadd.f32 %v3964, %v3973
      %v4009 = vadd.f32 %v3965, %v3973
      %v4010 = vadd.f32 %v3966, %v3973
      %v4011 = vadd.f32 %v3967, %v3973
      %v4012 = vadd.f32 %v3968, %v3973
      %v4013 = vadd.f32 %v3969, %v3973
      %v4014 = vadd.f32 %v3970, %v3973
      %v4015 = vmax.f32 %v3975, 0.0
      %v4016 = vmax.f32 %v3976, 0.0
      %v4017 = vmax.f32 %v3977, 0.0
      %v4018 = vmax.f32 %v3978, 0.0
      %v4019 = vmax.f32 %v3979, 0.0
      %v4020 = vmax.f32 %v3980, 0.0
      %v4021 = vmax.f32 %v3981, 0.0
      %v4022 = vmax.f32 %v3982, 0.0
      %v4023 = vmax.f32 %v3983, 0.0
      %v4024 = vmax.f32 %v3984, 0.0
      %v4025 = vmax.f32 %v3985, 0.0
      %v4026 = vmax.f32 %v3986, 0.0
      %v4027 = vmax.f32 %v3987, 0.0
      %v4028 = vmax.f32 %v3988, 0.0
      %v4029 = vmax.f32 %v3989, 0.0
      %v4030 = vmax.f32 %v3990, 0.0
      %v4031 = vmax.f32 %v3991, 0.0
      %v4032 = vmax.f32 %v3992, 0.0
      %v4033 = vmax.f32 %v3993, 0.0
      %v4034 = vmax.f32 %v3994, 0.0
      %v4035 = vmax.f32 %v3995, 0.0
      %v4036 = vmax.f32 %v3996, 0.0
      %v4037 = vmax.f32 %v3997, 0.0
      %v4038 = vmax.f32 %v3998, 0.0
      %v4039 = vmax.f32 %v3999, 0.0
      %v4040 = vmax.f32 %v4000, 0.0
      %v4041 = vmax.f32 %v4001, 0.0
      %v4042 = vmax.f32 %v4002, 0.0
      %v4043 = vmax.f32 %v4003, 0.0
      %v4044 = vmax.f32 %v4004, 0.0
      %v4045 = vmax.f32 %v4005, 0.0
      %v4046 = vmax.f32 %v4006, 0.0
      %v4047 = vmax.f32 %v4007, 0.0
      %v4048 = vmax.f32 %v4008, 0.0
      %v4049 = vmax.f32 %v4009, 0.0
      %v4050 = vmax.f32 %v4010, 0.0
      %v4051 = vmax.f32 %v4011, 0.0
      %v4052 = vmax.f32 %v4012, 0.0
      %v4053 = vmax.f32 %v4013, 0.0
      %v4054 = vmax.f32 %v4014, 0.0
      %4055 = vst [vmem:[#allocation3] sm:$0xff] %v4015
      %4056 = vst [vmem:[#allocation3 + $0x8] sm:$0xff] %v4016
      %4057 = vst [vmem:[#allocation3 + $0x10] sm:$0xff] %v4017
      %4058 = vst [vmem:[#allocation3 + $0x18] sm:$0xff] %v4018
      %4059 = vst [vmem:[#allocation3 + $0x20] sm:$0xff] %v4019
      %4060 = vst [vmem:[#allocation3 + $0x28] sm:$0xff] %v4020
      %4061 = vst [vmem:[#allocation3 + $0x30] sm:$0xff] %v4021
      %4062 = vst [vmem:[#allocation3 + $0x38] sm:$0xff] %v4022
      %4063 = vst [vmem:[#allocation3 + $0x40] sm:$0xff] %v4023
      %4064 = vst [vmem:[#allocation3 + $0x48] sm:$0xff] %v4024
      %4065 = vst [vmem:[#allocation3 + $0x50] sm:$0xff] %v4025
      %4066 = vst [vmem:[#allocation3 + $0x58] sm:$0xff] %v4026
      %4067 = vst [vmem:[#allocation3 + $0x60] sm:$0xff] %v4027
      %4068 = vst [vmem:[#allocation3 + $0x68] sm:$0xff] %v4028
      %4069 = vst [vmem:[#allocation3 + $0x70] sm:$0xff] %v4029
      %4070 = vst [vmem:[#allocation3 + $0x78] sm:$0xff] %v4030
      %4071 = vst [vmem:[#allocation3 + $0x80] sm:$0xff] %v4031
      %4072 = vst [vmem:[#allocation3 + $0x88] sm:$0xff] %v4032
      %4073 = vst [vmem:[#allocation3 + $0x90] sm:$0xff] %v4033
      %4074 = vst [vmem:[#allocation3 + $0x98] sm:$0xff] %v4034
      %4075 = vst [vmem:[#allocation3 + $0xa0] sm:$0xff] %v4035
      %4076 = vst [vmem:[#allocation3 + $0xa8] sm:$0xff] %v4036
      %4077 = vst [vmem:[#allocation3 + $0xb0] sm:$0xff] %v4037
      %4078 = vst [vmem:[#allocation3 + $0xb8] sm:$0xff] %v4038
      %4079 = vst [vmem:[#allocation3 + $0xc0] sm:$0xff] %v4039
      %4080 = vst [vmem:[#allocation3 + $0xc8] sm:$0xff] %v4040
      %4081 = vst [vmem:[#allocation3 + $0xd0] sm:$0xff] %v4041
      %4082 = vst [vmem:[#allocation3 + $0xd8] sm:$0xff] %v4042
      %4083 = vst [vmem:[#allocation3 + $0xe0] sm:$0xff] %v4043
      %4084 = vst [vmem:[#allocation3 + $0xe8] sm:$0xff] %v4044
      %4085 = vst [vmem:[#allocation3 + $0xf0] sm:$0xff] %v4045
      %4086 = vst [vmem:[#allocation3 + $0xf8] sm:$0xff] %v4046
      %4087 = vst [vmem:[#allocation3 + $0x100] sm:$0xff] %v4047
      %4088 = vst [vmem:[#allocation3 + $0x108] sm:$0xff] %v4048
      %4089 = vst [vmem:[#allocation3 + $0x110] sm:$0xff] %v4049
      %4090 = vst [vmem:[#allocation3 + $0x118] sm:$0xff] %v4050
      %4091 = vst [vmem:[#allocation3 + $0x120] sm:$0xff] %v4051
      %4092 = vst [vmem:[#allocation3 + $0x128] sm:$0xff] %v4052
      %4093 = vst [vmem:[#allocation3 + $0x130] sm:$0xff] %v4053
      %4094 = vst [vmem:[#allocation3 + $0x138] sm:$0xff] %v4054
      %v4095 = vld [vmem:[#allocation3] ss:$2 sm:$0xff]
      %s4096 = scalar_lea.vmem [#allocation3], 16
      %v4097 = vld [vmem:[%s4096] ss:$2 sm:$0xff]
      %s4098 = scalar_lea.vmem [#allocation3], 32
      %v4099 = vld [vmem:[%s4098] ss:$2 sm:$0xff]
      %s4100 = scalar_lea.vmem [#allocation3], 48
      %v4101 = vld [vmem:[%s4100] ss:$2 sm:$0xff]
      %s4102 = scalar_lea.vmem [#allocation3], 64
      %v4103 = vld [vmem:[%s4102] ss:$2 sm:$0xff]
      %s4104 = scalar_lea.vmem [#allocation3], 80
      %v4105 = vld [vmem:[%s4104] ss:$2 sm:$0xff]
      %s4106 = scalar_lea.vmem [#allocation3], 96
      %v4107 = vld [vmem:[%s4106] ss:$2 sm:$0xff]
      %s4108 = scalar_lea.vmem [#allocation3], 112
      %v4109 = vld [vmem:[%s4108] ss:$2 sm:$0xff]
      %s4110 = scalar_lea.vmem [#allocation3], 128
      %v4111 = vld [vmem:[%s4110] ss:$2 sm:$0xff]
      %s4112 = scalar_lea.vmem [#allocation3], 144
      %v4113 = vld [vmem:[%s4112] ss:$2 sm:$0xff]
      %s4114 = scalar_lea.vmem [#allocation3], 160
      %v4115 = vld [vmem:[%s4114] ss:$2 sm:$0xff]
      %s4116 = scalar_lea.vmem [#allocation3], 176
      %v4117 = vld [vmem:[%s4116] ss:$2 sm:$0xff]
      %s4118 = scalar_lea.vmem [#allocation3], 192
      %v4119 = vld [vmem:[%s4118] ss:$2 sm:$0xff]
      %s4120 = scalar_lea.vmem [#allocation3], 208
      %v4121 = vld [vmem:[%s4120] ss:$2 sm:$0xff]
      %s4122 = scalar_lea.vmem [#allocation3], 224
      %v4123 = vld [vmem:[%s4122] ss:$2 sm:$0xff]
      %s4124 = scalar_lea.vmem [#allocation3], 240
      %v4125 = vld [vmem:[%s4124] ss:$2 sm:$0xff]
      %s4126 = scalar_lea.vmem [#allocation3], 256
      %v4127 = vld [vmem:[%s4126] ss:$2 sm:$0xff]
      %s4128 = scalar_lea.vmem [#allocation3], 272
      %v4129 = vld [vmem:[%s4128] ss:$2 sm:$0xff]
      %s4130 = scalar_lea.vmem [#allocation3], 288
      %v4131 = vld [vmem:[%s4130] ss:$2 sm:$0xff]
      %s4132 = scalar_lea.vmem [#allocation3], 304
      %v4133 = vld [vmem:[%s4132] ss:$2 sm:$0xff]
      %s4134 = scalar_lea.vmem [#allocation3], 1
      %v4135 = vld [vmem:[%s4134] ss:$2 sm:$0xff]
      %s4136 = scalar_lea.vmem [#allocation3], 17
      %v4137 = vld [vmem:[%s4136] ss:$2 sm:$0xff]
      %s4138 = scalar_lea.vmem [#allocation3], 33
      %v4139 = vld [vmem:[%s4138] ss:$2 sm:$0xff]
      %s4140 = scalar_lea.vmem [#allocation3], 49
      %v4141 = vld [vmem:[%s4140] ss:$2 sm:$0xff]
      %s4142 = scalar_lea.vmem [#allocation3], 65
      %v4143 = vld [vmem:[%s4142] ss:$2 sm:$0xff]
      %s4144 = scalar_lea.vmem [#allocation3], 81
      %v4145 = vld [vmem:[%s4144] ss:$2 sm:$0xff]
      %s4146 = scalar_lea.vmem [#allocation3], 97
      %v4147 = vld [vmem:[%s4146] ss:$2 sm:$0xff]
      %s4148 = scalar_lea.vmem [#allocation3], 113
      %v4149 = vld [vmem:[%s4148] ss:$2 sm:$0xff]
      %s4150 = scalar_lea.vmem [#allocation3], 129
      %v4151 = vld [vmem:[%s4150] ss:$2 sm:$0xff]
      %s4152 = scalar_lea.vmem [#allocation3], 145
      %v4153 = vld [vmem:[%s4152] ss:$2 sm:$0xff]
      %s4154 = scalar_lea.vmem [#allocation3], 161
      %v4155 = vld [vmem:[%s4154] ss:$2 sm:$0xff]
      %s4156 = scalar_lea.vmem [#allocation3], 177
      %v4157 = vld [vmem:[%s4156] ss:$2 sm:$0xff]
      %s4158 = scalar_lea.vmem [#allocation3], 193
      %v4159 = vld [vmem:[%s4158] ss:$2 sm:$0xff]
      %s4160 = scalar_lea.vmem [#allocation3], 209
      %v4161 = vld [vmem:[%s4160] ss:$2 sm:$0xff]
      %s4162 = scalar_lea.vmem [#allocation3], 225
      %v4163 = vld [vmem:[%s4162] ss:$2 sm:$0xff]
      %s4164 = scalar_lea.vmem [#allocation3], 241
      %v4165 = vld [vmem:[%s4164] ss:$2 sm:$0xff]
      %s4166 = scalar_lea.vmem [#allocation3], 257
      %v4167 = vld [vmem:[%s4166] ss:$2 sm:$0xff]
      %s4168 = scalar_lea.vmem [#allocation3], 273
      %v4169 = vld [vmem:[%s4168] ss:$2 sm:$0xff]
      %s4170 = scalar_lea.vmem [#allocation3], 289
      %v4171 = vld [vmem:[%s4170] ss:$2 sm:$0xff]
      %s4172 = scalar_lea.vmem [#allocation3], 305
      %v4173 = vld [vmem:[%s4172] ss:$2 sm:$0xff]
      %v4174 = vmax.f32 %v4095, %v4135
      %v4175 = vmax.f32 %v4097, %v4137
      %v4176 = vmax.f32 %v4099, %v4139
      %v4177 = vmax.f32 %v4101, %v4141
      %v4178 = vmax.f32 %v4103, %v4143
      %v4179 = vmax.f32 %v4105, %v4145
      %v4180 = vmax.f32 %v4107, %v4147
      %v4181 = vmax.f32 %v4109, %v4149
      %v4182 = vmax.f32 %v4111, %v4151
      %v4183 = vmax.f32 %v4113, %v4153
      %v4184 = vmax.f32 %v4115, %v4155
      %v4185 = vmax.f32 %v4117, %v4157
      %v4186 = vmax.f32 %v4119, %v4159
      %v4187 = vmax.f32 %v4121, %v4161
      %v4188 = vmax.f32 %v4123, %v4163
      %v4189 = vmax.f32 %v4125, %v4165
      %v4190 = vmax.f32 %v4127, %v4167
      %v4191 = vmax.f32 %v4129, %v4169
      %v4192 = vmax.f32 %v4131, %v4171
      %v4193 = vmax.f32 %v4133, %v4173
      %v4194 = vld [vmem:[%s7] sm:$0xff]
      %v4195 = vld [vmem:[%s7 + $0x8] sm:$0xff]
      %v4196 = vld [vmem:[%s7 + $0x10] sm:$0xff]
      %v4197 = vld [vmem:[%s7 + $0x18] sm:$0xff]
      %v4198 = vld [vmem:[%s7 + $0x20] sm:$0xff]
      %v4199 = vmul.f32 %v4174, %v4194
      %v4200 = vmul.f32 %v4175, %v4195
      %v4201 = vmul.f32 %v4176, %v4196
      %v4202 = vmul.f32 %v4177, %v4197
      %v4203 = vmul.f32 %v4178, %v4198
      %v4204 = vmul.f32 %v4179, %v4194
      %v4205 = vmul.f32 %v4180, %v4195
      %v4206 = vmul.f32 %v4181, %v4196
      %v4207 = vmul.f32 %v4182, %v4197
      %v4208 = vmul.f32 %v4183, %v4198
      %v4209 = vmul.f32 %v4184, %v4194
      %v4210 = vmul.f32 %v4185, %v4195
      %v4211 = vmul.f32 %v4186, %v4196
      %v4212 = vmul.f32 %v4187, %v4197
      %v4213 = vmul.f32 %v4188, %v4198
      %v4214 = vmul.f32 %v4189, %v4194
      %v4215 = vmul.f32 %v4190, %v4195
      %v4216 = vmul.f32 %v4191, %v4196
      %v4217 = vmul.f32 %v4192, %v4197
      %v4218 = vmul.f32 %v4193, %v4198
      %v4219 = vadd.f32 %v4199, %v4200
      %v4220 = vadd.f32 %v4219, %v4201
      %v4221 = vadd.f32 %v4220, %v4202
      %v4222 = vadd.f32 %v4221, %v4203
      %v4223 = vrot.slane %v4222, 4
      %v4224 = vadd.f32 %v4222, %v4223
      %v4225 = vrot.slane %v4224, 2
      %v4226 = vadd.f32 %v4224, %v4225
      %v4227 = vrot.slane %v4226, 1
      %v4228 = vadd.f32 %v4226, %v4227
      %v4229 = vadd.f32 %v4204, %v4205
      %v4230 = vadd.f32 %v4229, %v4206
      %v4231 = vadd.f32 %v4230, %v4207
      %v4232 = vadd.f32 %v4231, %v4208
      %v4233 = vrot.slane %v4232, 4
      %v4234 = vadd.f32 %v4232, %v4233
      %v4235 = vrot.slane %v4234, 2
      %v4236 = vadd.f32 %v4234, %v4235
      %v4237 = vrot.slane %v4236, 1
      %v4238 = vadd.f32 %v4236, %v4237
      %v4239 = vadd.f32 %v4209, %v4210
      %v4240 = vadd.f32 %v4239, %v4211
      %v4241 = vadd.f32 %v4240, %v4212
      %v4242 = vadd.f32 %v4241, %v4213
      %v4243 = vrot.slane %v4242, 4
      %v4244 = vadd.f32 %v4242, %v4243
      %v4245 = vrot.slane %v4244, 2
      %v4246 = vadd.f32 %v4244, %v4245
      %v4247 = vrot.slane %v4246, 1
      %v4248 = vadd.f32 %v4246, %v4247
      %v4249 = vadd.f32 %v4214, %v4215
      %v4250 = vadd.f32 %v4249, %v4216
      %v4251 = vadd.f32 %v4250, %v4217
      %v4252 = vadd.f32 %v4251, %v4218
      %v4253 = vrot.slane %v4252, 4
      %v4254 = vadd.f32 %v4252, %v4253
      %v4255 = vrot.slane %v4254, 2
      %v4256 = vadd.f32 %v4254, %v4255
      %v4257 = vrot.slane %v4256, 1
      %v4258 = vadd.f32 %v4256, %v4257
      %vm4263 = vcmask 1041409
      %v4264 = vsel %vm4263, %v4238, %v4228
      %vm4265 = vcmask 1042434
      %v4266 = vsel %vm4265, %v4248, %v4264
      %vm4267 = vcmask 1043459
      %v4268 = vsel %vm4267, %v4258, %v4266
      %vm4270 = vcmask 1043456
      %v4271 = vsel %vm4270, %v4268, 0.0
      %4272 = vadd.xlane.f32.xlu0 %v4271
      %v4273 = vpop.xlane.xlu0 %4272
      %v4274 = vld [vmem:[#allocation4] sm:$0x1]
      %v4276 = vperm.slane %v4274, 0
      %v4278 = vadd.f32 %v4273, %v4276
      %v4279 = vsub.f32 0.0, %v4278
      %v4280 = vmul.f32 %v4279, 1.442695
      %v4281 = vpow.pop %v4280
      %v4282 = vadd.f32 %v4281, 1.0
      %v4283 = vrcp.pop %v4282
      %v4284 = vmul.f32 %v4282, %v4283
      %v4285 = vsub.f32 1.0, %v4284
      %v4286 = vmul.f32 %v4283, %v4285
      %v4287 = vadd.f32 %v4283, %v4286
      %vm4288 = vweird.f32 %v4282
      %vm4289 = vweird.f32 %v4283
      %vm4290 = vmor %vm4288, %vm4289
      %v4291 = vsel %vm4290, %v4283, %v4287
      %v4292 = vand.u32 2147483647, %v4282
      %vm4293 = vcmp.eq.f32.partialorder %v4292, 8.507059e+37
      %v4294 = vand.u32 %v4282, 2147483648
      %v4295 = vor.u32 1.1754944e-38, %v4294
      %v4296 = vsel %vm4293, %v4295, %v4291
      %v4297 = vmul.f32 1.0, %v4296
      %vm4298 = vcmask 3072
      %4299 = vst.msk [vmem:[%s332] sm:$0xf] %vm4298, %v4297
      %p4300 = scmp.lt.s32.totalorder %s22, 1
      %s4301 = scalar_select %p4300, %s22, 1
      %s4302 = smul.addr %s4301, 4
      %s4303 = scalar_lea.vmem %s9, %s4302
      // Predicated region
      $region57: #{cnn_forward.1} parent=55 // pred_check
        %p4304 = pneg %p234
      $region58: #{cnn_forward.1} parent=55 // pred_check_branch
        %4306 = sbr.rel (%p4304) target = $region60
      $region59: #{cnn_forward.1} parent=55 // pred_region
        _
      $region60: #{cnn_forward.1} parent=55 // pred_fallthru
        _
    $region56: #{cnn_forward.1} parent=5 // pred_fallthru
      _
    %p4307 = scmp.le.s32.totalorder 2, %s17
    // Predicated region
    $region61: #{cnn_forward.1} parent=5 // pred_check
      %p4308 = pneg %p4307
    $region62: #{cnn_forward.1} parent=5 // pred_check_branch
      %4310 = sbr.rel (%p4308) target = $region64
    $region63: #{cnn_forward.1} parent=5 // pred_region
      %s4311 = ssub.s32 %s17, 2
      // Predicated region
      $region65: #{cnn_forward.1} parent=63 // pred_check
        %p4312 = pneg %p240
      $region66: #{cnn_forward.1} parent=63 // pred_check_branch
        %4314 = sbr.rel (%p4312) target = $region68
      $region67: #{cnn_forward.1} parent=63 // pred_region
        %p4315 = scmp.lt.s32.totalorder %s23, 1
        %s4316 = scalar_select %p4315, %s23, 1
        %s4317 = smul.addr %s4316, 4
        %s4318 = scalar_lea.vmem %s9, %s4317
      $region68: #{cnn_forward.1} parent=63 // pred_fallthru
        _
    $region64: #{cnn_forward.1} parent=5 // pred_fallthru
      _
  $region6: #{cnn_forward.1} parent=0 // loop_footer
    %s21 = sadd.s32 1, %s17
  $region7: #{cnn_forward.1} parent=0 // loop_footer_branch
    %16 = sbr.rel target = $region3
  $region8: #{cnn_forward.1} parent=0 // loop_exit
    _

</llo_original>
